<compile_context>
chip_gen: v6e
topology: v6e:2x2x1
jax: 0.10.0
libtpu: 0.0.40
codegen_flags: <defaults>
</compile_context>

<pallas_src>
import functools

import jax
import jax.numpy as jnp
from jax.experimental import pallas as pl
from jax.experimental.pallas import tpu as pltpu

F_DIM = 512              # f_dim (forced to 512 by uMLP's hard-coded Linear(512, 256))
N_HEADS = 4
D_Q = F_DIM // N_HEADS   # 128
D_V = F_DIM // N_HEADS   # 128
HID = 256                # uMLP hidden width
LN_EPS = 1e-6

PARAM_ORDER = ("gamma", "beta",
               "wq", "bq", "wk", "bk", "wv", "bv",
               "wfc", "bfc",
               "w1", "b1", "w2", "b2", "w3", "b3")


def _gelu(x):
    # exact (erf-based) GELU, matching torch.nn.GELU() default
    return 0.5 * x * (1.0 + jax.lax.erf(x * jnp.float32(0.7071067811865476)))


def self_attn_kernel(x_ref, gamma_ref, beta_ref,
                     wq_ref, bq_ref, wk_ref, bk_ref, wv_ref, bv_ref,
                     wfc_ref, bfc_ref,
                     w1_ref, b1_ref, w2_ref, b2_ref, w3_ref, b3_ref,
                     o_ref, *, block_bs, seq_len, attn_bf16):
    """One block of `block_bs` batch elements per grid step.

    x_ref / o_ref are (block_bs * seq_len, F): batch and sequence merged into a
    single M dimension.  `attn_bf16` selects the dtype of the per-head
    attention operands (bf16 when V % 16 == 0, else f32 to avoid sub-tile
    bf16 relayouts).
    """
    bt, v_len = block_bs, seq_len
    m = bt * v_len
    attn_dtype = jnp.bfloat16 if attn_bf16 else jnp.float32

    x = x_ref[...]                                          # (m, F) f32

    # ---- LayerNorm(f_dim, eps=1e-6) over features ----
    mean = jnp.mean(x, axis=-1, keepdims=True)
    xc = x - mean
    var = jnp.mean(xc * xc, axis=-1, keepdims=True)
    ln = xc * jax.lax.rsqrt(var + jnp.float32(LN_EPS))
    ln = ln * gamma_ref[0] + beta_ref[0]                    # (m, F) f32

    ln_b = ln.astype(jnp.bfloat16)                          # bf16 LHS, f32 accumulate

    # ---- Q, K, V projections (merged M = Bt*V) ----
    # NOTE: 1/sqrt(d_q) is pre-folded into wq/bq at init time.
    # Single cast right after the bias adds (no per-head casts below).
    q = (jnp.dot(ln_b, wq_ref[...], preferred_element_type=jnp.float32)
         + bq_ref[0]).astype(attn_dtype)
    k = (jnp.dot(ln_b, wk_ref[...], preferred_element_type=jnp.float32)
         + bk_ref[0]).astype(attn_dtype)
    v = (jnp.dot(ln_b, wv_ref[...], preferred_element_type=jnp.float32)
         + bv_ref[0]).astype(attn_dtype)

    # ---- per-head attention ----
    heads = []
    for h in range(N_HEADS):
        lo, hi = h * D_Q, (h + 1) * D_Q
        qh = q[:, lo:hi].reshape(bt, v_len, D_Q)            # (Bt, V, D)
        kh = k[:, lo:hi].reshape(bt, v_len, D_Q)            # (Bt, V, D)
        vh = v[:, h * D_V:(h + 1) * D_V].reshape(bt, v_len, D_V)

        # batched q @ k^T via contraction on the last dims — no transpose of k
        s = jnp.einsum("bqd,bkd->bqk", qh, kh,
                       preferred_element_type=jnp.float32)  # (Bt, V, V) f32
        s = s - jnp.max(s, axis=-1, keepdims=True)
        p = jnp.exp(s)
        p = p * pl.reciprocal(jnp.sum(p, axis=-1, keepdims=True), approx=True)

        oh = jnp.einsum("bqk,bkd->bqd", p.astype(attn_dtype), vh,
                        preferred_element_type=jnp.float32)  # (Bt, V, D) f32
        heads.append(oh.reshape(m, D_V).astype(jnp.bfloat16))

    # ---- output projection: one lane-dense (m, 512) staging tensor,
    #      single K=512 matmul with wfc (head concat folded in) ----
    attn_cat = jnp.concatenate(heads, axis=-1)              # (m, F) bf16
    attn = jnp.dot(attn_cat, wfc_ref[...],
                   preferred_element_type=jnp.float32)      # (m, F) f32

    # ---- output projection bias + residual ----
    x1 = x + attn + bfc_ref[0]                              # (m, F)

    # ---- uMLP: 512 -> 256 -> (+res) 256 -> 512, GELU after each linear ----
    h1 = _gelu(jnp.dot(x1.astype(jnp.bfloat16), w1_ref[...],
                       preferred_element_type=jnp.float32) + b1_ref[0])
    h2 = _gelu(jnp.dot(h1.astype(jnp.bfloat16), w2_ref[...],
                       preferred_element_type=jnp.float32) + b2_ref[0]) + h1
    h3 = _gelu(jnp.dot(h2.astype(jnp.bfloat16), w3_ref[...],
                       preferred_element_type=jnp.float32) + b3_ref[0])

    o_ref[...] = h3


def _choose_block_bs(bs, v, max_rows=1024):
    """Pick block_bs: largest divisor of bs with block_bs*v <= max_rows row
    budget (generation-safe: ~1024 rows keeps live intermediates ~<40 MiB, well
    under v7x's 64 MiB), preferring choices that leave the grid with >= 2
    steps so the "parallel" axis can shard across v7x's 2 TensorCores."""
    candidates = [bt for bt in range(1, bs + 1)
                  if bs % bt == 0 and bt * v <= max(max_rows, v)]
    multi = [bt for bt in candidates if bs // bt >= 2]
    pool = multi if multi else candidates
    return max(pool)


def _vmem_limit_bytes(block_bs, v):
    """Explicit scoped-VMEM limit: rough per-block estimate with headroom,
    clamped to [32 MiB, 96 MiB] (actual usage under the 1024-row budget stays
    well below v7x's 64 MiB physical VMEM)."""
    rows = block_bs * v
    weights = 2 * 2 * (3 * F_DIM * F_DIM + F_DIM * F_DIM
                       + F_DIM * HID + HID * HID + HID * F_DIM)   # bf16, 2-buf
    io = 2 * 2 * rows * F_DIM * 4                                 # in+out tiles, 2-buf
    inter = rows * 24 * 1024 + 2 * block_bs * v * v * 4           # live intermediates
    est = 2 * (weights + io + inter)
    return int(min(max(est, 32 * 1024 * 1024), 96 * 1024 * 1024))


@functools.partial(jax.jit, static_argnames=("block_bs",))
def self_attn_forward(x, params, block_bs=None):
    BS, V, f = x.shape
    assert f == F_DIM
    assert V % 8 == 0, "sequence length must be a multiple of 8 (sublane tile)"
    if block_bs is None:
        block_bs = _choose_block_bs(BS, V)
    assert BS % block_bs == 0
    m_blk = block_bs * V
    grid = (BS // block_bs,)
    attn_bf16 = (V % 16 == 0)      # bf16 attention operands only for 16-aligned V

    x2 = x.reshape(BS * V, F_DIM)                    # free reshape outside the kernel

    arrs = [x2]
    in_specs = [pl.BlockSpec((m_blk, F_DIM), lambda b: (b, 0))]
    for name in PARAM_ORDER:
        a = params[name]
        arrs.append(a)
        in_specs.append(pl.BlockSpec(a.shape, lambda b: (0, 0)))   # constant across grid

    kern = functools.partial(self_attn_kernel, block_bs=block_bs, seq_len=V,
                             attn_bf16=attn_bf16)

    out = pl.pallas_call(
        kern,
        out_shape=jax.ShapeDtypeStruct((BS * V, F_DIM), jnp.float32),
        grid_spec=pltpu.PrefetchScalarGridSpec(
            num_scalar_prefetch=0,
            grid=grid,
            in_specs=in_specs,
            out_specs=pl.BlockSpec((m_blk, F_DIM), lambda b: (b, 0)),
        ),
        compiler_params=pltpu.CompilerParams(
            dimension_semantics=("parallel",),       # batch-block axis: megacore-shardable
            vmem_limit_bytes=_vmem_limit_bytes(block_bs, V),
        ),
    )(*arrs)
    return out.reshape(BS, V, F_DIM)


# ---------------- pure-JAX reference (silent correctness check) --------------
def reference_forward(x, p, attn_bf16):
    """Emulates the kernel numerics: bf16 matmul operands, f32 accumulation.
    The 1/sqrt(d_q) scale is already folded into p['wq'] / p['bq']."""
    BS, V, _ = x.shape
    r = lambda a: a.astype(jnp.bfloat16).astype(jnp.float32)  # bf16 operand rounding
    ra = r if attn_bf16 else (lambda a: a)                    # attention-path rounding
    w = lambda n: p[n].astype(jnp.float32)
    b = lambda n: p[n][0].astype(jnp.float32)

    mean = x.mean(-1, keepdims=True)
    var = ((x - mean) ** 2).mean(-1, keepdims=True)
    ln = (x - mean) * jax.lax.rsqrt(var + jnp.float32(LN_EPS)) * p["gamma"][0] + p["beta"][0]

    q = r(ln) @ w("wq") + b("bq")     # scale pre-folded into wq/bq
    k = r(ln) @ w("wk") + b("bk")
    v = r(ln) @ w("wv") + b("bv")

    qh = q.reshape(BS, V, N_HEADS, D_Q).transpose(0, 2, 1, 3)
    kh = k.reshape(BS, V, N_HEADS, D_Q).transpose(0, 2, 1, 3)
    vh = v.reshape(BS, V, N_HEADS, D_V).transpose(0, 2, 1, 3)
    s = jnp.einsum("bhqd,bhkd->bhqk", ra(qh), ra(kh))
    a = jax.nn.softmax(s, axis=-1)
    o = jnp.einsum("bhqk,bhkd->bhqd", ra(a), ra(vh))
    o = o.transpose(0, 2, 1, 3).reshape(BS, V, N_HEADS * D_V)
    o = r(o) @ w("wfc") + b("bfc")
    x1 = x + o

    g = lambda t: jax.nn.gelu(t, approximate=False)
    h1 = g(r(x1) @ w("w1") + b("b1"))
    h2 = g(r(h1) @ w("w2") + b("b2")) + h1
    h3 = g(r(h2) @ w("w3") + b("b3"))
    return h3


def init_params(key):
    ks = jax.random.split(key, 14)

    def lin(kw, kb, n_in, n_out, scale=1.0):
        bound = 1.0 / (n_in ** 0.5)
        w = jax.random.uniform(kw, (n_in, n_out), jnp.float32, -bound, bound) * scale
        b = jax.random.uniform(kb, (1, n_out), jnp.float32, -bound, bound) * scale
        return w.astype(jnp.bfloat16), b          # bf16 weights, f32 biases

    p = {}
    p["gamma"] = jnp.ones((1, F_DIM), jnp.float32)   # LayerNorm default init
    p["beta"] = jnp.zeros((1, F_DIM), jnp.float32)
    # fold the attention 1/sqrt(d_q) scale into wq/bq once at init time
    p["wq"], p["bq"] = lin(ks[0], ks[1], F_DIM, N_HEADS * D_Q,
                           scale=1.0 / (D_Q ** 0.5))
    p["wk"], p["bk"] = lin(ks[2], ks[3], F_DIM, N_HEADS * D_Q)
    p["wv"], p["bv"] = lin(ks[4], ks[5], F_DIM, N_HEADS * D_V)
    p["wfc"], p["bfc"] = lin(ks[6], ks[7], N_HEADS * D_V, F_DIM)
    p["w1"], p["b1"] = lin(ks[8], ks[9], F_DIM, HID)     # 512 -> 256
    p["w2"], p["b2"] = lin(ks[10], ks[11], HID, HID)     # 256 -> 256
    p["w3"], p["b3"] = lin(ks[12], ks[13], HID, F_DIM)   # 256 -> 512
    return p


if __name__ == "__main__":
    key = jax.random.PRNGKey(0)
    k_x, k_x2, k_p = jax.random.split(key, 3)
    params = init_params(k_p)

    # --- test 1: small shapes (batch=2, seq=8, f_dim=512); grid has 2 steps,
    #             f32 attention path (V not a multiple of 16) ---
    BS, V = 2, 8
    x = jax.random.normal(k_x, (BS, V, F_DIM), jnp.float32)
    out = jax.block_until_ready(self_attn_forward(x, params))
    ref = reference_forward(x, params, attn_bf16=(V % 16 == 0))
    assert out.shape == (BS, V, F_DIM)
    assert jnp.allclose(out, ref, atol=2e-2, rtol=2e-2), \
        float(jnp.max(jnp.abs(out - ref)))

    # --- test 2: exercises the multi-block index_map path with block_bs > 1
    #             and the bf16 attention path (V % 16 == 0) ---
    BS2, V2 = 4, 16
    x2 = jax.random.normal(k_x2, (BS2, V2, F_DIM), jnp.float32)
    out2 = jax.block_until_ready(self_attn_forward(x2, params))
    ref2 = reference_forward(x2, params, attn_bf16=(V2 % 16 == 0))
    assert out2.shape == (BS2, V2, F_DIM)
    assert jnp.allclose(out2, ref2, atol=2e-2, rtol=2e-2), \
        float(jnp.max(jnp.abs(out2 - ref2)))

    print("KERNEL_OK")
</pallas_src>

<mosaic_0001>
module attributes {stable_mosaic.version = 11 : i64} {
  func.func @self_attn_kernel(%arg0: i32, %arg1: memref<8x512xf32, #tpu.memory_space<vmem>>, %arg2: memref<1x512xf32, #tpu.memory_space<vmem>>, %arg3: memref<1x512xf32, #tpu.memory_space<vmem>>, %arg4: memref<512x512xbf16, #tpu.memory_space<vmem>>, %arg5: memref<1x512xf32, #tpu.memory_space<vmem>>, %arg6: memref<512x512xbf16, #tpu.memory_space<vmem>>, %arg7: memref<1x512xf32, #tpu.memory_space<vmem>>, %arg8: memref<512x512xbf16, #tpu.memory_space<vmem>>, %arg9: memref<1x512xf32, #tpu.memory_space<vmem>>, %arg10: memref<512x512xbf16, #tpu.memory_space<vmem>>, %arg11: memref<1x512xf32, #tpu.memory_space<vmem>>, %arg12: memref<512x256xbf16, #tpu.memory_space<vmem>>, %arg13: memref<1x256xf32, #tpu.memory_space<vmem>>, %arg14: memref<256x256xbf16, #tpu.memory_space<vmem>>, %arg15: memref<1x256xf32, #tpu.memory_space<vmem>>, %arg16: memref<256x512xbf16, #tpu.memory_space<vmem>>, %arg17: memref<1x512xf32, #tpu.memory_space<vmem>>, %arg18: memref<8x512xf32, #tpu.memory_space<vmem>>) attributes {dimension_semantics = [#tpu.dimension_semantics<parallel>], iteration_bounds = array<i64: 2>, scalar_prefetch = 0 : i64, scratch_operands = 0 : i64, tpu.core_type = #tpu.core_type<tc>, window_params = [{transform_indices = @transform_0, window_bounds = array<i64: 8, 512>}, {pipeline_mode = #tpu.pipeline_mode<synchronous>, transform_indices = @transform_1, window_bounds = array<i64: 1, 512>}, {pipeline_mode = #tpu.pipeline_mode<synchronous>, transform_indices = @transform_2, window_bounds = array<i64: 1, 512>}, {pipeline_mode = #tpu.pipeline_mode<synchronous>, transform_indices = @transform_3, window_bounds = array<i64: 512, 512>}, {pipeline_mode = #tpu.pipeline_mode<synchronous>, transform_indices = @transform_4, window_bounds = array<i64: 1, 512>}, {pipeline_mode = #tpu.pipeline_mode<synchronous>, transform_indices = @transform_5, window_bounds = array<i64: 512, 512>}, {pipeline_mode = #tpu.pipeline_mode<synchronous>, transform_indices = @transform_6, window_bounds = array<i64: 1, 512>}, {pipeline_mode = #tpu.pipeline_mode<synchronous>, transform_indices = @transform_7, window_bounds = array<i64: 512, 512>}, {pipeline_mode = #tpu.pipeline_mode<synchronous>, transform_indices = @transform_8, window_bounds = array<i64: 1, 512>}, {pipeline_mode = #tpu.pipeline_mode<synchronous>, transform_indices = @transform_9, window_bounds = array<i64: 512, 512>}, {pipeline_mode = #tpu.pipeline_mode<synchronous>, transform_indices = @transform_10, window_bounds = array<i64: 1, 512>}, {pipeline_mode = #tpu.pipeline_mode<synchronous>, transform_indices = @transform_11, window_bounds = array<i64: 512, 256>}, {pipeline_mode = #tpu.pipeline_mode<synchronous>, transform_indices = @transform_12, window_bounds = array<i64: 1, 256>}, {pipeline_mode = #tpu.pipeline_mode<synchronous>, transform_indices = @transform_13, window_bounds = array<i64: 256, 256>}, {pipeline_mode = #tpu.pipeline_mode<synchronous>, transform_indices = @transform_14, window_bounds = array<i64: 1, 256>}, {pipeline_mode = #tpu.pipeline_mode<synchronous>, transform_indices = @transform_15, window_bounds = array<i64: 256, 512>}, {pipeline_mode = #tpu.pipeline_mode<synchronous>, transform_indices = @transform_16, window_bounds = array<i64: 1, 512>}, {transform_indices = @transform_17, window_bounds = array<i64: 8, 512>}]} {
    %c0 = arith.constant 0 : index
    %c0_0 = arith.constant 0 : index
    %0 = vector.load %arg1[%c0, %c0_0] : memref<8x512xf32, #tpu.memory_space<vmem>>, vector<8x512xf32>
    %cst = arith.constant dense<0.000000e+00> : vector<8xf32>
    %1 = vector.multi_reduction <add>, %0, %cst [1] : vector<8x512xf32> to vector<8xf32>
    %2 = vector.shape_cast %1 : vector<8xf32> to vector<8x1xf32>
    %cst_1 = arith.constant 5.120000e+02 : f32
    %3 = vector.broadcast %cst_1 : f32 to vector<8x1xf32>
    %4 = arith.divf %2, %3 : vector<8x1xf32>
    %5 = vector.broadcast %4 : vector<8x1xf32> to vector<8x512xf32>
    %6 = arith.subf %0, %5 : vector<8x512xf32>
    %7 = arith.mulf %6, %6 : vector<8x512xf32>
    %cst_2 = arith.constant dense<0.000000e+00> : vector<8xf32>
    %8 = vector.multi_reduction <add>, %7, %cst_2 [1] : vector<8x512xf32> to vector<8xf32>
    %9 = vector.shape_cast %8 : vector<8xf32> to vector<8x1xf32>
    %cst_3 = arith.constant 5.120000e+02 : f32
    %10 = vector.broadcast %cst_3 : f32 to vector<8x1xf32>
    %11 = arith.divf %9, %10 : vector<8x1xf32>
    %cst_4 = arith.constant 9.99999997E-7 : f32
    %12 = vector.broadcast %cst_4 : f32 to vector<8x1xf32>
    %13 = arith.addf %11, %12 : vector<8x1xf32>
    %14 = math.rsqrt %13 : vector<8x1xf32>
    %15 = vector.broadcast %14 : vector<8x1xf32> to vector<8x512xf32>
    %16 = arith.mulf %6, %15 : vector<8x512xf32>
    %c0_5 = arith.constant 0 : index
    %c0_6 = arith.constant 0 : index
    %17 = vector.load %arg2[%c0_5, %c0_6] : memref<1x512xf32, #tpu.memory_space<vmem>>, vector<1x512xf32>
    %18 = vector.shape_cast %17 : vector<1x512xf32> to vector<512xf32>
    %19 = vector.shape_cast %18 : vector<512xf32> to vector<1x512xf32>
    %20 = vector.broadcast %19 : vector<1x512xf32> to vector<8x512xf32>
    %21 = arith.mulf %16, %20 : vector<8x512xf32>
    %c0_7 = arith.constant 0 : index
    %c0_8 = arith.constant 0 : index
    %22 = vector.load %arg3[%c0_7, %c0_8] : memref<1x512xf32, #tpu.memory_space<vmem>>, vector<1x512xf32>
    %23 = vector.shape_cast %22 : vector<1x512xf32> to vector<512xf32>
    %24 = vector.shape_cast %23 : vector<512xf32> to vector<1x512xf32>
    %25 = vector.broadcast %24 : vector<1x512xf32> to vector<8x512xf32>
    %26 = arith.addf %21, %25 : vector<8x512xf32>
    %27 = arith.truncf %26 : vector<8x512xf32> to vector<8x512xbf16>
    %c0_9 = arith.constant 0 : index
    %c0_10 = arith.constant 0 : index
    %28 = vector.load %arg4[%c0_9, %c0_10] : memref<512x512xbf16, #tpu.memory_space<vmem>>, vector<512x512xbf16>
    %cst_11 = arith.constant dense<0.000000e+00> : vector<8x512xf32>
    %29 = tpu.matmul %27, %28, %cst_11 {dimension_numbers = #tpu.dot_dimension_numbers<[1], [0], [0], [1], [0, 0, 1, 1], [], []>} : vector<8x512xbf16>, vector<512x512xbf16>, vector<8x512xf32> -> vector<8x512xf32>
    %c0_12 = arith.constant 0 : index
    %c0_13 = arith.constant 0 : index
    %30 = vector.load %arg5[%c0_12, %c0_13] : memref<1x512xf32, #tpu.memory_space<vmem>>, vector<1x512xf32>
    %31 = vector.shape_cast %30 : vector<1x512xf32> to vector<512xf32>
    %32 = vector.shape_cast %31 : vector<512xf32> to vector<1x512xf32>
    %33 = vector.broadcast %32 : vector<1x512xf32> to vector<8x512xf32>
    %34 = arith.addf %29, %33 : vector<8x512xf32>
    %c0_14 = arith.constant 0 : index
    %c0_15 = arith.constant 0 : index
    %35 = vector.load %arg6[%c0_14, %c0_15] : memref<512x512xbf16, #tpu.memory_space<vmem>>, vector<512x512xbf16>
    %cst_16 = arith.constant dense<0.000000e+00> : vector<8x512xf32>
    %36 = tpu.matmul %27, %35, %cst_16 {dimension_numbers = #tpu.dot_dimension_numbers<[1], [0], [0], [1], [0, 0, 1, 1], [], []>} : vector<8x512xbf16>, vector<512x512xbf16>, vector<8x512xf32> -> vector<8x512xf32>
    %c0_17 = arith.constant 0 : index
    %c0_18 = arith.constant 0 : index
    %37 = vector.load %arg7[%c0_17, %c0_18] : memref<1x512xf32, #tpu.memory_space<vmem>>, vector<1x512xf32>
    %38 = vector.shape_cast %37 : vector<1x512xf32> to vector<512xf32>
    %39 = vector.shape_cast %38 : vector<512xf32> to vector<1x512xf32>
    %40 = vector.broadcast %39 : vector<1x512xf32> to vector<8x512xf32>
    %41 = arith.addf %36, %40 : vector<8x512xf32>
    %c0_19 = arith.constant 0 : index
    %c0_20 = arith.constant 0 : index
    %42 = vector.load %arg8[%c0_19, %c0_20] : memref<512x512xbf16, #tpu.memory_space<vmem>>, vector<512x512xbf16>
    %cst_21 = arith.constant dense<0.000000e+00> : vector<8x512xf32>
    %43 = tpu.matmul %27, %42, %cst_21 {dimension_numbers = #tpu.dot_dimension_numbers<[1], [0], [0], [1], [0, 0, 1, 1], [], []>} : vector<8x512xbf16>, vector<512x512xbf16>, vector<8x512xf32> -> vector<8x512xf32>
    %c0_22 = arith.constant 0 : index
    %c0_23 = arith.constant 0 : index
    %44 = vector.load %arg9[%c0_22, %c0_23] : memref<1x512xf32, #tpu.memory_space<vmem>>, vector<1x512xf32>
    %45 = vector.shape_cast %44 : vector<1x512xf32> to vector<512xf32>
    %46 = vector.shape_cast %45 : vector<512xf32> to vector<1x512xf32>
    %47 = vector.broadcast %46 : vector<1x512xf32> to vector<8x512xf32>
    %48 = arith.addf %43, %47 : vector<8x512xf32>
    %49 = vector.extract_strided_slice %34 {offsets = [0, 0], sizes = [8, 128], strides = [1, 1]} : vector<8x512xf32> to vector<8x128xf32>
    %50 = vector.shape_cast %49 : vector<8x128xf32> to vector<1x8x128xf32>
    %51 = vector.extract_strided_slice %41 {offsets = [0, 0], sizes = [8, 128], strides = [1, 1]} : vector<8x512xf32> to vector<8x128xf32>
    %52 = vector.shape_cast %51 : vector<8x128xf32> to vector<1x8x128xf32>
    %53 = vector.extract_strided_slice %48 {offsets = [0, 0], sizes = [8, 128], strides = [1, 1]} : vector<8x512xf32> to vector<8x128xf32>
    %54 = vector.shape_cast %53 : vector<8x128xf32> to vector<1x8x128xf32>
    "tpu.trace_start"() <{level = 10 : i32, message = "bqd,bkd->bqk"}> : () -> ()
    %cst_24 = arith.constant dense<0.000000e+00> : vector<1x8x8xf32>
    %55 = tpu.matmul %50, %52, %cst_24 {dimension_numbers = #tpu.dot_dimension_numbers<[2], [2], [1], [1], [0, 0, 0, 1, 1, 1], [0], [0]>} : vector<1x8x128xf32>, vector<1x8x128xf32>, vector<1x8x8xf32> -> vector<1x8x8xf32>
    "tpu.trace_stop"() : () -> ()
    %cst_25 = arith.constant dense<0xFF800000> : vector<1x8xf32>
    %56 = vector.multi_reduction <maximumf>, %55, %cst_25 [2] : vector<1x8x8xf32> to vector<1x8xf32>
    %57 = vector.shape_cast %56 : vector<1x8xf32> to vector<1x8x1xf32>
    %58 = vector.broadcast %57 : vector<1x8x1xf32> to vector<1x8x8xf32>
    %59 = arith.subf %55, %58 : vector<1x8x8xf32>
    %60 = math.exp %59 : vector<1x8x8xf32>
    %cst_26 = arith.constant dense<0.000000e+00> : vector<1x8xf32>
    %61 = vector.multi_reduction <add>, %60, %cst_26 [2] : vector<1x8x8xf32> to vector<1x8xf32>
    %62 = vector.shape_cast %61 : vector<1x8xf32> to vector<1x8x1xf32>
    %63 = tpu.reciprocal %62 {approx = true} : vector<1x8x1xf32> -> vector<1x8x1xf32>
    %64 = vector.broadcast %63 : vector<1x8x1xf32> to vector<1x8x8xf32>
    %65 = arith.mulf %60, %64 : vector<1x8x8xf32>
    "tpu.trace_start"() <{level = 10 : i32, message = "bqk,bkd->bqd"}> : () -> ()
    %cst_27 = arith.constant dense<0.000000e+00> : vector<1x8x128xf32>
    %66 = tpu.matmul %65, %54, %cst_27 {dimension_numbers = #tpu.dot_dimension_numbers<[2], [1], [1], [2], [0, 0, 0, 1, 1, 2], [0], [0]>} : vector<1x8x8xf32>, vector<1x8x128xf32>, vector<1x8x128xf32> -> vector<1x8x128xf32>
    "tpu.trace_stop"() : () -> ()
    %67 = vector.shape_cast %66 : vector<1x8x128xf32> to vector<8x128xf32>
    %68 = arith.truncf %67 : vector<8x128xf32> to vector<8x128xbf16>
    %69 = vector.extract_strided_slice %34 {offsets = [0, 128], sizes = [8, 128], strides = [1, 1]} : vector<8x512xf32> to vector<8x128xf32>
    %70 = vector.shape_cast %69 : vector<8x128xf32> to vector<1x8x128xf32>
    %71 = vector.extract_strided_slice %41 {offsets = [0, 128], sizes = [8, 128], strides = [1, 1]} : vector<8x512xf32> to vector<8x128xf32>
    %72 = vector.shape_cast %71 : vector<8x128xf32> to vector<1x8x128xf32>
    %73 = vector.extract_strided_slice %48 {offsets = [0, 128], sizes = [8, 128], strides = [1, 1]} : vector<8x512xf32> to vector<8x128xf32>
    %74 = vector.shape_cast %73 : vector<8x128xf32> to vector<1x8x128xf32>
    "tpu.trace_start"() <{level = 10 : i32, message = "bqd,bkd->bqk"}> : () -> ()
    %cst_28 = arith.constant dense<0.000000e+00> : vector<1x8x8xf32>
    %75 = tpu.matmul %70, %72, %cst_28 {dimension_numbers = #tpu.dot_dimension_numbers<[2], [2], [1], [1], [0, 0, 0, 1, 1, 1], [0], [0]>} : vector<1x8x128xf32>, vector<1x8x128xf32>, vector<1x8x8xf32> -> vector<1x8x8xf32>
    "tpu.trace_stop"() : () -> ()
    %cst_29 = arith.constant dense<0xFF800000> : vector<1x8xf32>
    %76 = vector.multi_reduction <maximumf>, %75, %cst_29 [2] : vector<1x8x8xf32> to vector<1x8xf32>
    %77 = vector.shape_cast %76 : vector<1x8xf32> to vector<1x8x1xf32>
    %78 = vector.broadcast %77 : vector<1x8x1xf32> to vector<1x8x8xf32>
    %79 = arith.subf %75, %78 : vector<1x8x8xf32>
    %80 = math.exp %79 : vector<1x8x8xf32>
    %cst_30 = arith.constant dense<0.000000e+00> : vector<1x8xf32>
    %81 = vector.multi_reduction <add>, %80, %cst_30 [2] : vector<1x8x8xf32> to vector<1x8xf32>
    %82 = vector.shape_cast %81 : vector<1x8xf32> to vector<1x8x1xf32>
    %83 = tpu.reciprocal %82 {approx = true} : vector<1x8x1xf32> -> vector<1x8x1xf32>
    %84 = vector.broadcast %83 : vector<1x8x1xf32> to vector<1x8x8xf32>
    %85 = arith.mulf %80, %84 : vector<1x8x8xf32>
    "tpu.trace_start"() <{level = 10 : i32, message = "bqk,bkd->bqd"}> : () -> ()
    %cst_31 = arith.constant dense<0.000000e+00> : vector<1x8x128xf32>
    %86 = tpu.matmul %85, %74, %cst_31 {dimension_numbers = #tpu.dot_dimension_numbers<[2], [1], [1], [2], [0, 0, 0, 1, 1, 2], [0], [0]>} : vector<1x8x8xf32>, vector<1x8x128xf32>, vector<1x8x128xf32> -> vector<1x8x128xf32>
    "tpu.trace_stop"() : () -> ()
    %87 = vector.shape_cast %86 : vector<1x8x128xf32> to vector<8x128xf32>
    %88 = arith.truncf %87 : vector<8x128xf32> to vector<8x128xbf16>
    %89 = vector.extract_strided_slice %34 {offsets = [0, 256], sizes = [8, 128], strides = [1, 1]} : vector<8x512xf32> to vector<8x128xf32>
    %90 = vector.shape_cast %89 : vector<8x128xf32> to vector<1x8x128xf32>
    %91 = vector.extract_strided_slice %41 {offsets = [0, 256], sizes = [8, 128], strides = [1, 1]} : vector<8x512xf32> to vector<8x128xf32>
    %92 = vector.shape_cast %91 : vector<8x128xf32> to vector<1x8x128xf32>
    %93 = vector.extract_strided_slice %48 {offsets = [0, 256], sizes = [8, 128], strides = [1, 1]} : vector<8x512xf32> to vector<8x128xf32>
    %94 = vector.shape_cast %93 : vector<8x128xf32> to vector<1x8x128xf32>
    "tpu.trace_start"() <{level = 10 : i32, message = "bqd,bkd->bqk"}> : () -> ()
    %cst_32 = arith.constant dense<0.000000e+00> : vector<1x8x8xf32>
    %95 = tpu.matmul %90, %92, %cst_32 {dimension_numbers = #tpu.dot_dimension_numbers<[2], [2], [1], [1], [0, 0, 0, 1, 1, 1], [0], [0]>} : vector<1x8x128xf32>, vector<1x8x128xf32>, vector<1x8x8xf32> -> vector<1x8x8xf32>
    "tpu.trace_stop"() : () -> ()
    %cst_33 = arith.constant dense<0xFF800000> : vector<1x8xf32>
    %96 = vector.multi_reduction <maximumf>, %95, %cst_33 [2] : vector<1x8x8xf32> to vector<1x8xf32>
    %97 = vector.shape_cast %96 : vector<1x8xf32> to vector<1x8x1xf32>
    %98 = vector.broadcast %97 : vector<1x8x1xf32> to vector<1x8x8xf32>
    %99 = arith.subf %95, %98 : vector<1x8x8xf32>
    %100 = math.exp %99 : vector<1x8x8xf32>
    %cst_34 = arith.constant dense<0.000000e+00> : vector<1x8xf32>
    %101 = vector.multi_reduction <add>, %100, %cst_34 [2] : vector<1x8x8xf32> to vector<1x8xf32>
    %102 = vector.shape_cast %101 : vector<1x8xf32> to vector<1x8x1xf32>
    %103 = tpu.reciprocal %102 {approx = true} : vector<1x8x1xf32> -> vector<1x8x1xf32>
    %104 = vector.broadcast %103 : vector<1x8x1xf32> to vector<1x8x8xf32>
    %105 = arith.mulf %100, %104 : vector<1x8x8xf32>
    "tpu.trace_start"() <{level = 10 : i32, message = "bqk,bkd->bqd"}> : () -> ()
    %cst_35 = arith.constant dense<0.000000e+00> : vector<1x8x128xf32>
    %106 = tpu.matmul %105, %94, %cst_35 {dimension_numbers = #tpu.dot_dimension_numbers<[2], [1], [1], [2], [0, 0, 0, 1, 1, 2], [0], [0]>} : vector<1x8x8xf32>, vector<1x8x128xf32>, vector<1x8x128xf32> -> vector<1x8x128xf32>
    "tpu.trace_stop"() : () -> ()
    %107 = vector.shape_cast %106 : vector<1x8x128xf32> to vector<8x128xf32>
    %108 = arith.truncf %107 : vector<8x128xf32> to vector<8x128xbf16>
    %109 = vector.extract_strided_slice %34 {offsets = [0, 384], sizes = [8, 128], strides = [1, 1]} : vector<8x512xf32> to vector<8x128xf32>
    %110 = vector.shape_cast %109 : vector<8x128xf32> to vector<1x8x128xf32>
    %111 = vector.extract_strided_slice %41 {offsets = [0, 384], sizes = [8, 128], strides = [1, 1]} : vector<8x512xf32> to vector<8x128xf32>
    %112 = vector.shape_cast %111 : vector<8x128xf32> to vector<1x8x128xf32>
    %113 = vector.extract_strided_slice %48 {offsets = [0, 384], sizes = [8, 128], strides = [1, 1]} : vector<8x512xf32> to vector<8x128xf32>
    %114 = vector.shape_cast %113 : vector<8x128xf32> to vector<1x8x128xf32>
    "tpu.trace_start"() <{level = 10 : i32, message = "bqd,bkd->bqk"}> : () -> ()
    %cst_36 = arith.constant dense<0.000000e+00> : vector<1x8x8xf32>
    %115 = tpu.matmul %110, %112, %cst_36 {dimension_numbers = #tpu.dot_dimension_numbers<[2], [2], [1], [1], [0, 0, 0, 1, 1, 1], [0], [0]>} : vector<1x8x128xf32>, vector<1x8x128xf32>, vector<1x8x8xf32> -> vector<1x8x8xf32>
    "tpu.trace_stop"() : () -> ()
    %cst_37 = arith.constant dense<0xFF800000> : vector<1x8xf32>
    %116 = vector.multi_reduction <maximumf>, %115, %cst_37 [2] : vector<1x8x8xf32> to vector<1x8xf32>
    %117 = vector.shape_cast %116 : vector<1x8xf32> to vector<1x8x1xf32>
    %118 = vector.broadcast %117 : vector<1x8x1xf32> to vector<1x8x8xf32>
    %119 = arith.subf %115, %118 : vector<1x8x8xf32>
    %120 = math.exp %119 : vector<1x8x8xf32>
    %cst_38 = arith.constant dense<0.000000e+00> : vector<1x8xf32>
    %121 = vector.multi_reduction <add>, %120, %cst_38 [2] : vector<1x8x8xf32> to vector<1x8xf32>
    %122 = vector.shape_cast %121 : vector<1x8xf32> to vector<1x8x1xf32>
    %123 = tpu.reciprocal %122 {approx = true} : vector<1x8x1xf32> -> vector<1x8x1xf32>
    %124 = vector.broadcast %123 : vector<1x8x1xf32> to vector<1x8x8xf32>
    %125 = arith.mulf %120, %124 : vector<1x8x8xf32>
    "tpu.trace_start"() <{level = 10 : i32, message = "bqk,bkd->bqd"}> : () -> ()
    %cst_39 = arith.constant dense<0.000000e+00> : vector<1x8x128xf32>
    %126 = tpu.matmul %125, %114, %cst_39 {dimension_numbers = #tpu.dot_dimension_numbers<[2], [1], [1], [2], [0, 0, 0, 1, 1, 2], [0], [0]>} : vector<1x8x8xf32>, vector<1x8x128xf32>, vector<1x8x128xf32> -> vector<1x8x128xf32>
    "tpu.trace_stop"() : () -> ()
    %127 = vector.shape_cast %126 : vector<1x8x128xf32> to vector<8x128xf32>
    %128 = arith.truncf %127 : vector<8x128xf32> to vector<8x128xbf16>
    %129 = tpu.concatenate %68, %88, %108, %128 in 1 : vector<8x128xbf16>, vector<8x128xbf16>, vector<8x128xbf16>, vector<8x128xbf16> -> vector<8x512xbf16>
    %c0_40 = arith.constant 0 : index
    %c0_41 = arith.constant 0 : index
    %130 = vector.load %arg10[%c0_40, %c0_41] : memref<512x512xbf16, #tpu.memory_space<vmem>>, vector<512x512xbf16>
    %cst_42 = arith.constant dense<0.000000e+00> : vector<8x512xf32>
    %131 = tpu.matmul %129, %130, %cst_42 {dimension_numbers = #tpu.dot_dimension_numbers<[1], [0], [0], [1], [0, 0, 1, 1], [], []>} : vector<8x512xbf16>, vector<512x512xbf16>, vector<8x512xf32> -> vector<8x512xf32>
    %132 = arith.addf %0, %131 : vector<8x512xf32>
    %c0_43 = arith.constant 0 : index
    %c0_44 = arith.constant 0 : index
    %133 = vector.load %arg11[%c0_43, %c0_44] : memref<1x512xf32, #tpu.memory_space<vmem>>, vector<1x512xf32>
    %134 = vector.shape_cast %133 : vector<1x512xf32> to vector<512xf32>
    %135 = vector.shape_cast %134 : vector<512xf32> to vector<1x512xf32>
    %136 = vector.broadcast %135 : vector<1x512xf32> to vector<8x512xf32>
    %137 = arith.addf %132, %136 : vector<8x512xf32>
    %138 = arith.truncf %137 : vector<8x512xf32> to vector<8x512xbf16>
    %c0_45 = arith.constant 0 : index
    %c0_46 = arith.constant 0 : index
    %139 = vector.load %arg12[%c0_45, %c0_46] : memref<512x256xbf16, #tpu.memory_space<vmem>>, vector<512x256xbf16>
    %cst_47 = arith.constant dense<0.000000e+00> : vector<8x256xf32>
    %140 = tpu.matmul %138, %139, %cst_47 {dimension_numbers = #tpu.dot_dimension_numbers<[1], [0], [0], [1], [0, 0, 1, 1], [], []>} : vector<8x512xbf16>, vector<512x256xbf16>, vector<8x256xf32> -> vector<8x256xf32>
    %c0_48 = arith.constant 0 : index
    %c0_49 = arith.constant 0 : index
    %141 = vector.load %arg13[%c0_48, %c0_49] : memref<1x256xf32, #tpu.memory_space<vmem>>, vector<1x256xf32>
    %142 = vector.shape_cast %141 : vector<1x256xf32> to vector<256xf32>
    %143 = vector.shape_cast %142 : vector<256xf32> to vector<1x256xf32>
    %144 = vector.broadcast %143 : vector<1x256xf32> to vector<8x256xf32>
    %145 = arith.addf %140, %144 : vector<8x256xf32>
    %cst_50 = arith.constant 5.000000e-01 : f32
    %146 = vector.broadcast %cst_50 : f32 to vector<8x256xf32>
    %147 = arith.mulf %146, %145 : vector<8x256xf32>
    %cst_51 = arith.constant 0.707106769 : f32
    %148 = vector.broadcast %cst_51 : f32 to vector<8x256xf32>
    %149 = arith.mulf %145, %148 : vector<8x256xf32>
    %150 = math.erf %149 : vector<8x256xf32>
    %cst_52 = arith.constant 1.000000e+00 : f32
    %151 = vector.broadcast %cst_52 : f32 to vector<8x256xf32>
    %152 = arith.addf %151, %150 : vector<8x256xf32>
    %153 = arith.mulf %147, %152 : vector<8x256xf32>
    %154 = arith.truncf %153 : vector<8x256xf32> to vector<8x256xbf16>
    %c0_53 = arith.constant 0 : index
    %c0_54 = arith.constant 0 : index
    %155 = vector.load %arg14[%c0_53, %c0_54] : memref<256x256xbf16, #tpu.memory_space<vmem>>, vector<256x256xbf16>
    %cst_55 = arith.constant dense<0.000000e+00> : vector<8x256xf32>
    %156 = tpu.matmul %154, %155, %cst_55 {dimension_numbers = #tpu.dot_dimension_numbers<[1], [0], [0], [1], [0, 0, 1, 1], [], []>} : vector<8x256xbf16>, vector<256x256xbf16>, vector<8x256xf32> -> vector<8x256xf32>
    %c0_56 = arith.constant 0 : index
    %c0_57 = arith.constant 0 : index
    %157 = vector.load %arg15[%c0_56, %c0_57] : memref<1x256xf32, #tpu.memory_space<vmem>>, vector<1x256xf32>
    %158 = vector.shape_cast %157 : vector<1x256xf32> to vector<256xf32>
    %159 = vector.shape_cast %158 : vector<256xf32> to vector<1x256xf32>
    %160 = vector.broadcast %159 : vector<1x256xf32> to vector<8x256xf32>
    %161 = arith.addf %156, %160 : vector<8x256xf32>
    %cst_58 = arith.constant 5.000000e-01 : f32
    %162 = vector.broadcast %cst_58 : f32 to vector<8x256xf32>
    %163 = arith.mulf %162, %161 : vector<8x256xf32>
    %cst_59 = arith.constant 0.707106769 : f32
    %164 = vector.broadcast %cst_59 : f32 to vector<8x256xf32>
    %165 = arith.mulf %161, %164 : vector<8x256xf32>
    %166 = math.erf %165 : vector<8x256xf32>
    %cst_60 = arith.constant 1.000000e+00 : f32
    %167 = vector.broadcast %cst_60 : f32 to vector<8x256xf32>
    %168 = arith.addf %167, %166 : vector<8x256xf32>
    %169 = arith.mulf %163, %168 : vector<8x256xf32>
    %170 = arith.addf %169, %153 : vector<8x256xf32>
    %171 = arith.truncf %170 : vector<8x256xf32> to vector<8x256xbf16>
    %c0_61 = arith.constant 0 : index
    %c0_62 = arith.constant 0 : index
    %172 = vector.load %arg16[%c0_61, %c0_62] : memref<256x512xbf16, #tpu.memory_space<vmem>>, vector<256x512xbf16>
    %cst_63 = arith.constant dense<0.000000e+00> : vector<8x512xf32>
    %173 = tpu.matmul %171, %172, %cst_63 {dimension_numbers = #tpu.dot_dimension_numbers<[1], [0], [0], [1], [0, 0, 1, 1], [], []>} : vector<8x256xbf16>, vector<256x512xbf16>, vector<8x512xf32> -> vector<8x512xf32>
    %c0_64 = arith.constant 0 : index
    %c0_65 = arith.constant 0 : index
    %174 = vector.load %arg17[%c0_64, %c0_65] : memref<1x512xf32, #tpu.memory_space<vmem>>, vector<1x512xf32>
    %175 = vector.shape_cast %174 : vector<1x512xf32> to vector<512xf32>
    %176 = vector.shape_cast %175 : vector<512xf32> to vector<1x512xf32>
    %177 = vector.broadcast %176 : vector<1x512xf32> to vector<8x512xf32>
    %178 = arith.addf %173, %177 : vector<8x512xf32>
    %cst_66 = arith.constant 5.000000e-01 : f32
    %179 = vector.broadcast %cst_66 : f32 to vector<8x512xf32>
    %180 = arith.mulf %179, %178 : vector<8x512xf32>
    %cst_67 = arith.constant 0.707106769 : f32
    %181 = vector.broadcast %cst_67 : f32 to vector<8x512xf32>
    %182 = arith.mulf %178, %181 : vector<8x512xf32>
    %183 = math.erf %182 : vector<8x512xf32>
    %cst_68 = arith.constant 1.000000e+00 : f32
    %184 = vector.broadcast %cst_68 : f32 to vector<8x512xf32>
    %185 = arith.addf %184, %183 : vector<8x512xf32>
    %186 = arith.mulf %180, %185 : vector<8x512xf32>
    %c0_69 = arith.constant 0 : index
    %c0_70 = arith.constant 0 : index
    %187 = vector.load %arg18[%c0_69, %c0_70] : memref<8x512xf32, #tpu.memory_space<vmem>>, vector<8x512xf32>
    tpu.vector_store %arg18[%c0_69, %c0_70], %186 {strides = array<i32>} : memref<8x512xf32, #tpu.memory_space<vmem>>, vector<8x512xf32>,
    return
  }
  func.func @transform_0(%arg0: i32) -> (i32, i32) {
    %c0_i32 = arith.constant 0 : i32
    %c0_i32_0 = arith.constant 0 : i32
    return %arg0, %c0_i32 : i32, i32
  }
  func.func @transform_1(%arg0: i32) -> (i32, i32) {
    %c0_i32 = arith.constant 0 : i32
    %c0_i32_0 = arith.constant 0 : i32
    %c0_i32_1 = arith.constant 0 : i32
    return %c0_i32, %c0_i32_0 : i32, i32
  }
  func.func @transform_2(%arg0: i32) -> (i32, i32) {
    %c0_i32 = arith.constant 0 : i32
    %c0_i32_0 = arith.constant 0 : i32
    %c0_i32_1 = arith.constant 0 : i32
    return %c0_i32, %c0_i32_0 : i32, i32
  }
  func.func @transform_3(%arg0: i32) -> (i32, i32) {
    %c0_i32 = arith.constant 0 : i32
    %c0_i32_0 = arith.constant 0 : i32
    %c0_i32_1 = arith.constant 0 : i32
    return %c0_i32, %c0_i32_0 : i32, i32
  }
  func.func @transform_4(%arg0: i32) -> (i32, i32) {
    %c0_i32 = arith.constant 0 : i32
    %c0_i32_0 = arith.constant 0 : i32
    %c0_i32_1 = arith.constant 0 : i32
    return %c0_i32, %c0_i32_0 : i32, i32
  }
  func.func @transform_5(%arg0: i32) -> (i32, i32) {
    %c0_i32 = arith.constant 0 : i32
    %c0_i32_0 = arith.constant 0 : i32
    %c0_i32_1 = arith.constant 0 : i32
    return %c0_i32, %c0_i32_0 : i32, i32
  }
  func.func @transform_6(%arg0: i32) -> (i32, i32) {
    %c0_i32 = arith.constant 0 : i32
    %c0_i32_0 = arith.constant 0 : i32
    %c0_i32_1 = arith.constant 0 : i32
    return %c0_i32, %c0_i32_0 : i32, i32
  }
  func.func @transform_7(%arg0: i32) -> (i32, i32) {
    %c0_i32 = arith.constant 0 : i32
    %c0_i32_0 = arith.constant 0 : i32
    %c0_i32_1 = arith.constant 0 : i32
    return %c0_i32, %c0_i32_0 : i32, i32
  }
  func.func @transform_8(%arg0: i32) -> (i32, i32) {
    %c0_i32 = arith.constant 0 : i32
    %c0_i32_0 = arith.constant 0 : i32
    %c0_i32_1 = arith.constant 0 : i32
    return %c0_i32, %c0_i32_0 : i32, i32
  }
  func.func @transform_9(%arg0: i32) -> (i32, i32) {
    %c0_i32 = arith.constant 0 : i32
    %c0_i32_0 = arith.constant 0 : i32
    %c0_i32_1 = arith.constant 0 : i32
    return %c0_i32, %c0_i32_0 : i32, i32
  }
  func.func @transform_10(%arg0: i32) -> (i32, i32) {
    %c0_i32 = arith.constant 0 : i32
    %c0_i32_0 = arith.constant 0 : i32
    %c0_i32_1 = arith.constant 0 : i32
    return %c0_i32, %c0_i32_0 : i32, i32
  }
  func.func @transform_11(%arg0: i32) -> (i32, i32) {
    %c0_i32 = arith.constant 0 : i32
    %c0_i32_0 = arith.constant 0 : i32
    %c0_i32_1 = arith.constant 0 : i32
    return %c0_i32, %c0_i32_0 : i32, i32
  }
  func.func @transform_12(%arg0: i32) -> (i32, i32) {
    %c0_i32 = arith.constant 0 : i32
    %c0_i32_0 = arith.constant 0 : i32
    %c0_i32_1 = arith.constant 0 : i32
    return %c0_i32, %c0_i32_0 : i32, i32
  }
  func.func @transform_13(%arg0: i32) -> (i32, i32) {
    %c0_i32 = arith.constant 0 : i32
    %c0_i32_0 = arith.constant 0 : i32
    %c0_i32_1 = arith.constant 0 : i32
    return %c0_i32, %c0_i32_0 : i32, i32
  }
  func.func @transform_14(%arg0: i32) -> (i32, i32) {
    %c0_i32 = arith.constant 0 : i32
    %c0_i32_0 = arith.constant 0 : i32
    %c0_i32_1 = arith.constant 0 : i32
    return %c0_i32, %c0_i32_0 : i32, i32
  }
  func.func @transform_15(%arg0: i32) -> (i32, i32) {
    %c0_i32 = arith.constant 0 : i32
    %c0_i32_0 = arith.constant 0 : i32
    %c0_i32_1 = arith.constant 0 : i32
    return %c0_i32, %c0_i32_0 : i32, i32
  }
  func.func @transform_16(%arg0: i32) -> (i32, i32) {
    %c0_i32 = arith.constant 0 : i32
    %c0_i32_0 = arith.constant 0 : i32
    %c0_i32_1 = arith.constant 0 : i32
    return %c0_i32, %c0_i32_0 : i32, i32
  }
  func.func @transform_17(%arg0: i32) -> (i32, i32) {
    %c0_i32 = arith.constant 0 : i32
    %c0_i32_0 = arith.constant 0 : i32
    return %arg0, %c0_i32 : i32, i32
  }
}

</mosaic_0001>

<llo_original>
// kernel: self_attn_forward.1
$region0: #{self_attn_forward.1}
  #allocation0 [shape = 'u32[]', space=smem, size = 0x4, offset = 0x4, fixed_abs, tag = 'smem constant byte address 0x4 - core index']
  #allocation1 [shape = 'u32[144,128]{1,0:T(1,128)}', space=vmem, size = 0x12000, scoped, tag = 'internal scratch']
  %s0 = inlined_call_operand.hbm [shape: f32[16,512], index: 0, kind: input, shape index: {}]
  %s1 = inlined_call_operand.vmem [shape: f32[1,512], index: 1, kind: input, shape index: {}]
  %s2 = inlined_call_operand.vmem [shape: f32[1,512], index: 2, kind: input, shape index: {}]
  %s3 = inlined_call_operand.hbm [shape: bf16[512,512], index: 3, kind: input, shape index: {}]
  %s4 = inlined_call_operand.vmem [shape: f32[1,512], index: 4, kind: input, shape index: {}]
  %s5 = inlined_call_operand.hbm [shape: bf16[512,512], index: 5, kind: input, shape index: {}]
  %s6 = inlined_call_operand.hbm [shape: f32[1,512], index: 6, kind: input, shape index: {}]
  %s7 = inlined_call_operand.hbm [shape: bf16[512,512], index: 7, kind: input, shape index: {}]
  %s8 = inlined_call_operand.vmem [shape: f32[1,512], index: 8, kind: input, shape index: {}]
  %s9 = inlined_call_operand.hbm [shape: bf16[512,512], index: 9, kind: input, shape index: {}]
  %s10 = inlined_call_operand.hbm [shape: f32[1,512], index: 10, kind: input, shape index: {}]
  %s11 = inlined_call_operand.hbm [shape: bf16[512,256], index: 11, kind: input, shape index: {}]
  %s12 = inlined_call_operand.hbm [shape: f32[1,256], index: 12, kind: input, shape index: {}]
  %s13 = inlined_call_operand.hbm [shape: bf16[256,256], index: 13, kind: input, shape index: {}]
  %s14 = inlined_call_operand.hbm [shape: f32[1,256], index: 14, kind: input, shape index: {}]
  %s15 = inlined_call_operand.hbm [shape: bf16[256,512], index: 15, kind: input, shape index: {}]
  %s16 = inlined_call_operand.hbm [shape: f32[1,512], index: 16, kind: input, shape index: {}]
  %s17 = inlined_call_operand.hbm [shape: f32[16,512], index: 17, kind: output, shape index: {}]
  %s18 = sld [smem:[#allocation0]]
  $region153: #{self_attn_forward.1} parent=0
    _
  %s20 = ssub.s32 1, %s18
  %s21 = scalar_select 0, %s20, %s18
  $region1: #{self_attn_forward.1} parent=0
    #allocation2 [shape = 'u8[32768]{0}', space=vmem, size = 0x8000, scoped, tag = 'input window, operand 0']
    #allocation3 [shape = 's32[2]{0}', space=sflag, size = 0x8, scoped, tag = 'scoped memory for self_attn_forward.1']
    #allocation4 [shape = 's32[2]{0}', space=sflag, size = 0x8, scoped, tag = 'scoped memory for self_attn_forward.1']
    #allocation5 [shape = 'u8[524288]{0}', space=vmem, size = 0x80000, scoped, tag = 'input window, operand 3, single buffered']
    #allocation6 [shape = 's32[1]{0}', space=sflag, size = 0x4, scoped, tag = 'scoped memory for self_attn_forward.1']
    #allocation7 [shape = 'u8[524288]{0}', space=vmem, size = 0x80000, scoped, tag = 'input window, operand 5, single buffered']
    #allocation8 [shape = 'u8[2048]{0}', space=vmem, size = 0x800, scoped, tag = 'input window, operand 6, single buffered']
    #allocation9 [shape = 's32[1]{0}', space=sflag, size = 0x4, scoped, tag = 'scoped memory for self_attn_forward.1']
    #allocation10 [shape = 'u8[524288]{0}', space=vmem, size = 0x80000, scoped, tag = 'input window, operand 7, single buffered']
    #allocation11 [shape = 'u8[524288]{0}', space=vmem, size = 0x80000, scoped, tag = 'input window, operand 9, single buffered']
    #allocation12 [shape = 's32[1]{0}', space=sflag, size = 0x4, scoped, tag = 'scoped memory for self_attn_forward.1']
    #allocation13 [shape = 'u8[2048]{0}', space=vmem, size = 0x800, scoped, tag = 'input window, operand 10, single buffered']
    #allocation14 [shape = 'u8[262144]{0}', space=vmem, size = 0x40000, scoped, tag = 'input window, operand 11, single buffered']
    #allocation15 [shape = 's32[1]{0}', space=sflag, size = 0x4, scoped, tag = 'scoped memory for self_attn_forward.1']
    #allocation16 [shape = 'u8[1024]{0}', space=vmem, size = 0x400, scoped, tag = 'input window, operand 12, single buffered']
    #allocation17 [shape = 'u8[131072]{0}', space=vmem, size = 0x20000, scoped, tag = 'input window, operand 13, single buffered']
    #allocation18 [shape = 's32[1]{0}', space=sflag, size = 0x4, scoped, tag = 'scoped memory for self_attn_forward.1']
    #allocation19 [shape = 'u8[1024]{0}', space=vmem, size = 0x400, scoped, tag = 'input window, operand 14, single buffered']
    #allocation20 [shape = 'u8[262144]{0}', space=vmem, size = 0x40000, scoped, tag = 'input window, operand 15, single buffered']
    #allocation21 [shape = 's32[1]{0}', space=sflag, size = 0x4, scoped, tag = 'scoped memory for self_attn_forward.1']
    #allocation22 [shape = 'u8[2048]{0}', space=vmem, size = 0x800, scoped, tag = 'input window, operand 16, single buffered']
    #allocation23 [shape = 'u8[32768]{0}', space=vmem, size = 0x8000, scoped, tag = 'output window, operand 0']
    %22 = vsyncpa [#allocation3], 0
    %s23 = scalar_lea.sflag [#allocation3], 1
    %24 = vsyncpa %s23, 0
    %25 = vsyncpa [#allocation6], 0
    %26 = vsyncpa [#allocation9], 0
    %27 = vsyncpa [#allocation12], 0
    %28 = vsyncpa [#allocation15], 0
    %29 = vsyncpa [#allocation18], 0
    %30 = vsyncpa [#allocation21], 0
    %31 = vsyncpa [#allocation4], 0
    %s32 = scalar_lea.sflag [#allocation4], 1
    %33 = vsyncpa %s32, 0
    loop: start=0, step=1, limit=4
    $region2: #{self_attn_forward.1} parent=1 // loop_pre_header
      _
    $region3: #{self_attn_forward.1} parent=1 // loop_header
      %s35 = sphi 0, %s39
      %p36 = scmp.ge.s32.totalorder %s35, 4
      %s45 = sphi 0, %s47
      %s48 = sphi 0, %s45
      %s49 = sphi 0, %s48
      %s65 = sphi 0, %s49
      %s69 = sphi 0, %s69
      %s71 = sphi 0, %s69
      %s72 = sphi 0, %s71
      %s86 = sphi 0, %s72
      %s90 = sphi 0, %s90
      %s92 = sphi 0, %s90
      %s93 = sphi 0, %s92
      %s107 = sphi 0, %s93
      %s111 = sphi 0, %s111
      %s113 = sphi 0, %s111
      %s114 = sphi 0, %s113
      %s128 = sphi 0, %s114
      %s132 = sphi 0, %s132
      %s134 = sphi 0, %s132
      %s135 = sphi 0, %s134
      %s149 = sphi 0, %s135
      %s153 = sphi 0, %s153
      %s155 = sphi 0, %s153
      %s156 = sphi 0, %s155
      %s170 = sphi 0, %s156
      %s174 = sphi 0, %s174
      %s176 = sphi 0, %s174
      %s177 = sphi 0, %s176
      %s191 = sphi 0, %s177
      %s195 = sphi 0, %s195
      %s197 = sphi 0, %s195
      %s198 = sphi 0, %s197
      %s212 = sphi 0, %s198
      %s216 = sphi 0, %s216
      %s218 = sphi 0, %s216
      %s219 = sphi 0, %s218
      %s233 = sphi 0, %s219
      %s237 = sphi 0, %s237
      %s239 = sphi 0, %s237
      %s240 = sphi 0, %s239
      %s254 = sphi 0, %s240
      %s258 = sphi 0, %s258
      %s260 = sphi 0, %s258
      %s261 = sphi 0, %s260
      %s275 = sphi 0, %s261
      %s279 = sphi 0, %s279
      %s281 = sphi 0, %s279
      %s282 = sphi 0, %s281
      %s296 = sphi 0, %s282
      %s300 = sphi 0, %s300
      %s302 = sphi 0, %s300
      %s303 = sphi 0, %s302
      %s317 = sphi 0, %s303
      %s321 = sphi 0, %s321
      %s323 = sphi 0, %s321
      %s324 = sphi 0, %s323
      %s338 = sphi 0, %s324
      %s342 = sphi 0, %s342
      %s344 = sphi 0, %s342
      %s345 = sphi 0, %s344
      %s359 = sphi 0, %s345
      %s363 = sphi 0, %s363
      %s365 = sphi 0, %s363
      %s366 = sphi 0, %s365
      %s380 = sphi 0, %s366
      %s384 = sphi 0, %s384
      %s386 = sphi 0, %s384
      %s387 = sphi 0, %s386
      %s401 = sphi 0, %s387
      %s407 = sphi 0, %s409
      %s410 = sphi 0, %s407
      %s411 = sphi 0, %s410
      %s427 = sphi 0, %s411
    $region4: #{self_attn_forward.1} parent=1 // loop_header_branch
      %38 = sbr.rel (%p36) target = $region8
    $region5: #{self_attn_forward.1} parent=1 // loop_body
      %s40 = ssub.s32 %s35, 1
      %s41 = ssub.s32 %s35, 2
      %s42 = sadd.s32 %s35, 1
      %s43 = ssub.s32 %s35, %s42
      %p44 = scmp.eq.s32.totalorder %s43, 0
      %s46 = sadd.s32 %s45, 1
      %s47 = scalar_select %p44, %s45, %s46
      %p50 = pneg %p44
      %p51 = scmp.eq.s32.totalorder %s35, 1
      %p52 = por %p50, %p51
      %p53 = scmp.ne.s32.totalorder %s45, %s48
      %p54 = scmp.eq.s32.totalorder %s35, 0
      %p55 = por %p53, %p54
      %p56 = scmp.ne.s32.totalorder %s45, %s48
      %p57 = scmp.eq.s32.totalorder %s40, 1
      %p58 = por %p56, %p57
      %p59 = scmp.ne.s32.totalorder %s48, %s49
      %p60 = scmp.eq.s32.totalorder %s40, 0
      %p61 = por %p59, %p60
      %p62 = scmp.ne.s32.totalorder %s48, %s49
      %p63 = scmp.eq.s32.totalorder %s41, 1
      %p64 = por %p62, %p63
      %p66 = scmp.ne.s32.totalorder %s49, %s65
      %p67 = scmp.eq.s32.totalorder %s41, 0
      %p68 = por %p66, %p67
      %s70 = sadd.s32 %s69, 1
      %p73 = scmp.eq.s32.totalorder %s35, 1
      %p74 = scmp.ne.s32.totalorder %s69, %s71
      %p75 = scmp.eq.s32.totalorder %s35, 0
      %p76 = por %p74, %p75
      %p77 = scmp.ne.s32.totalorder %s69, %s71
      %p78 = scmp.eq.s32.totalorder %s40, 1
      %p79 = por %p77, %p78
      %p80 = scmp.ne.s32.totalorder %s71, %s72
      %p81 = scmp.eq.s32.totalorder %s40, 0
      %p82 = por %p80, %p81
      %p83 = scmp.ne.s32.totalorder %s71, %s72
      %p84 = scmp.eq.s32.totalorder %s41, 1
      %p85 = por %p83, %p84
      %p87 = scmp.ne.s32.totalorder %s72, %s86
      %p88 = scmp.eq.s32.totalorder %s41, 0
      %p89 = por %p87, %p88
      %s91 = sadd.s32 %s90, 1
      %p94 = scmp.eq.s32.totalorder %s35, 1
      %p95 = scmp.ne.s32.totalorder %s90, %s92
      %p96 = scmp.eq.s32.totalorder %s35, 0
      %p97 = por %p95, %p96
      %p98 = scmp.ne.s32.totalorder %s90, %s92
      %p99 = scmp.eq.s32.totalorder %s40, 1
      %p100 = por %p98, %p99
      %p101 = scmp.ne.s32.totalorder %s92, %s93
      %p102 = scmp.eq.s32.totalorder %s40, 0
      %p103 = por %p101, %p102
      %p104 = scmp.ne.s32.totalorder %s92, %s93
      %p105 = scmp.eq.s32.totalorder %s41, 1
      %p106 = por %p104, %p105
      %p108 = scmp.ne.s32.totalorder %s93, %s107
      %p109 = scmp.eq.s32.totalorder %s41, 0
      %p110 = por %p108, %p109
      %s112 = sadd.s32 %s111, 1
      %p115 = scmp.eq.s32.totalorder %s35, 1
      %p116 = scmp.ne.s32.totalorder %s111, %s113
      %p117 = scmp.eq.s32.totalorder %s35, 0
      %p118 = por %p116, %p117
      %p119 = scmp.ne.s32.totalorder %s111, %s113
      %p120 = scmp.eq.s32.totalorder %s40, 1
      %p121 = por %p119, %p120
      %p122 = scmp.ne.s32.totalorder %s113, %s114
      %p123 = scmp.eq.s32.totalorder %s40, 0
      %p124 = por %p122, %p123
      %p125 = scmp.ne.s32.totalorder %s113, %s114
      %p126 = scmp.eq.s32.totalorder %s41, 1
      %p127 = por %p125, %p126
      %p129 = scmp.ne.s32.totalorder %s114, %s128
      %p130 = scmp.eq.s32.totalorder %s41, 0
      %p131 = por %p129, %p130
      %s133 = sadd.s32 %s132, 1
      %p136 = scmp.eq.s32.totalorder %s35, 1
      %p137 = scmp.ne.s32.totalorder %s132, %s134
      %p138 = scmp.eq.s32.totalorder %s35, 0
      %p139 = por %p137, %p138
      %p140 = scmp.ne.s32.totalorder %s132, %s134
      %p141 = scmp.eq.s32.totalorder %s40, 1
      %p142 = por %p140, %p141
      %p143 = scmp.ne.s32.totalorder %s134, %s135
      %p144 = scmp.eq.s32.totalorder %s40, 0
      %p145 = por %p143, %p144
      %p146 = scmp.ne.s32.totalorder %s134, %s135
      %p147 = scmp.eq.s32.totalorder %s41, 1
      %p148 = por %p146, %p147
      %p150 = scmp.ne.s32.totalorder %s135, %s149
      %p151 = scmp.eq.s32.totalorder %s41, 0
      %p152 = por %p150, %p151
      %s154 = sadd.s32 %s153, 1
      %p157 = scmp.eq.s32.totalorder %s35, 1
      %p158 = scmp.ne.s32.totalorder %s153, %s155
      %p159 = scmp.eq.s32.totalorder %s35, 0
      %p160 = por %p158, %p159
      %p161 = scmp.ne.s32.totalorder %s153, %s155
      %p162 = scmp.eq.s32.totalorder %s40, 1
      %p163 = por %p161, %p162
      %p164 = scmp.ne.s32.totalorder %s155, %s156
      %p165 = scmp.eq.s32.totalorder %s40, 0
      %p166 = por %p164, %p165
      %p167 = scmp.ne.s32.totalorder %s155, %s156
      %p168 = scmp.eq.s32.totalorder %s41, 1
      %p169 = por %p167, %p168
      %p171 = scmp.ne.s32.totalorder %s156, %s170
      %p172 = scmp.eq.s32.totalorder %s41, 0
      %p173 = por %p171, %p172
      %s175 = sadd.s32 %s174, 1
      %p178 = scmp.eq.s32.totalorder %s35, 1
      %p179 = scmp.ne.s32.totalorder %s174, %s176
      %p180 = scmp.eq.s32.totalorder %s35, 0
      %p181 = por %p179, %p180
      %p182 = scmp.ne.s32.totalorder %s174, %s176
      %p183 = scmp.eq.s32.totalorder %s40, 1
      %p184 = por %p182, %p183
      %p185 = scmp.ne.s32.totalorder %s176, %s177
      %p186 = scmp.eq.s32.totalorder %s40, 0
      %p187 = por %p185, %p186
      %p188 = scmp.ne.s32.totalorder %s176, %s177
      %p189 = scmp.eq.s32.totalorder %s41, 1
      %p190 = por %p188, %p189
      %p192 = scmp.ne.s32.totalorder %s177, %s191
      %p193 = scmp.eq.s32.totalorder %s41, 0
      %p194 = por %p192, %p193
      %s196 = sadd.s32 %s195, 1
      %p199 = scmp.eq.s32.totalorder %s35, 1
      %p200 = scmp.ne.s32.totalorder %s195, %s197
      %p201 = scmp.eq.s32.totalorder %s35, 0
      %p202 = por %p200, %p201
      %p203 = scmp.ne.s32.totalorder %s195, %s197
      %p204 = scmp.eq.s32.totalorder %s40, 1
      %p205 = por %p203, %p204
      %p206 = scmp.ne.s32.totalorder %s197, %s198
      %p207 = scmp.eq.s32.totalorder %s40, 0
      %p208 = por %p206, %p207
      %p209 = scmp.ne.s32.totalorder %s197, %s198
      %p210 = scmp.eq.s32.totalorder %s41, 1
      %p211 = por %p209, %p210
      %p213 = scmp.ne.s32.totalorder %s198, %s212
      %p214 = scmp.eq.s32.totalorder %s41, 0
      %p215 = por %p213, %p214
      %s217 = sadd.s32 %s216, 1
      %p220 = scmp.eq.s32.totalorder %s35, 1
      %p221 = scmp.ne.s32.totalorder %s216, %s218
      %p222 = scmp.eq.s32.totalorder %s35, 0
      %p223 = por %p221, %p222
      %p224 = scmp.ne.s32.totalorder %s216, %s218
      %p225 = scmp.eq.s32.totalorder %s40, 1
      %p226 = por %p224, %p225
      %p227 = scmp.ne.s32.totalorder %s218, %s219
      %p228 = scmp.eq.s32.totalorder %s40, 0
      %p229 = por %p227, %p228
      %p230 = scmp.ne.s32.totalorder %s218, %s219
      %p231 = scmp.eq.s32.totalorder %s41, 1
      %p232 = por %p230, %p231
      %p234 = scmp.ne.s32.totalorder %s219, %s233
      %p235 = scmp.eq.s32.totalorder %s41, 0
      %p236 = por %p234, %p235
      %s238 = sadd.s32 %s237, 1
      %p241 = scmp.eq.s32.totalorder %s35, 1
      %p242 = scmp.ne.s32.totalorder %s237, %s239
      %p243 = scmp.eq.s32.totalorder %s35, 0
      %p244 = por %p242, %p243
      %p245 = scmp.ne.s32.totalorder %s237, %s239
      %p246 = scmp.eq.s32.totalorder %s40, 1
      %p247 = por %p245, %p246
      %p248 = scmp.ne.s32.totalorder %s239, %s240
      %p249 = scmp.eq.s32.totalorder %s40, 0
      %p250 = por %p248, %p249
      %p251 = scmp.ne.s32.totalorder %s239, %s240
      %p252 = scmp.eq.s32.totalorder %s41, 1
      %p253 = por %p251, %p252
      %p255 = scmp.ne.s32.totalorder %s240, %s254
      %p256 = scmp.eq.s32.totalorder %s41, 0
      %p257 = por %p255, %p256
      %s259 = sadd.s32 %s258, 1
      %p262 = scmp.eq.s32.totalorder %s35, 1
      %p263 = scmp.ne.s32.totalorder %s258, %s260
      %p264 = scmp.eq.s32.totalorder %s35, 0
      %p265 = por %p263, %p264
      %p266 = scmp.ne.s32.totalorder %s258, %s260
      %p267 = scmp.eq.s32.totalorder %s40, 1
      %p268 = por %p266, %p267
      %p269 = scmp.ne.s32.totalorder %s260, %s261
      %p270 = scmp.eq.s32.totalorder %s40, 0
      %p271 = por %p269, %p270
      %p272 = scmp.ne.s32.totalorder %s260, %s261
      %p273 = scmp.eq.s32.totalorder %s41, 1
      %p274 = por %p272, %p273
      %p276 = scmp.ne.s32.totalorder %s261, %s275
      %p277 = scmp.eq.s32.totalorder %s41, 0
      %p278 = por %p276, %p277
      %s280 = sadd.s32 %s279, 1
      %p283 = scmp.eq.s32.totalorder %s35, 1
      %p284 = scmp.ne.s32.totalorder %s279, %s281
      %p285 = scmp.eq.s32.totalorder %s35, 0
      %p286 = por %p284, %p285
      %p287 = scmp.ne.s32.totalorder %s279, %s281
      %p288 = scmp.eq.s32.totalorder %s40, 1
      %p289 = por %p287, %p288
      %p290 = scmp.ne.s32.totalorder %s281, %s282
      %p291 = scmp.eq.s32.totalorder %s40, 0
      %p292 = por %p290, %p291
      %p293 = scmp.ne.s32.totalorder %s281, %s282
      %p294 = scmp.eq.s32.totalorder %s41, 1
      %p295 = por %p293, %p294
      %p297 = scmp.ne.s32.totalorder %s282, %s296
      %p298 = scmp.eq.s32.totalorder %s41, 0
      %p299 = por %p297, %p298
      %s301 = sadd.s32 %s300, 1
      %p304 = scmp.eq.s32.totalorder %s35, 1
      %p305 = scmp.ne.s32.totalorder %s300, %s302
      %p306 = scmp.eq.s32.totalorder %s35, 0
      %p307 = por %p305, %p306
      %p308 = scmp.ne.s32.totalorder %s300, %s302
      %p309 = scmp.eq.s32.totalorder %s40, 1
      %p310 = por %p308, %p309
      %p311 = scmp.ne.s32.totalorder %s302, %s303
      %p312 = scmp.eq.s32.totalorder %s40, 0
      %p313 = por %p311, %p312
      %p314 = scmp.ne.s32.totalorder %s302, %s303
      %p315 = scmp.eq.s32.totalorder %s41, 1
      %p316 = por %p314, %p315
      %p318 = scmp.ne.s32.totalorder %s303, %s317
      %p319 = scmp.eq.s32.totalorder %s41, 0
      %p320 = por %p318, %p319
      %s322 = sadd.s32 %s321, 1
      %p325 = scmp.eq.s32.totalorder %s35, 1
      %p326 = scmp.ne.s32.totalorder %s321, %s323
      %p327 = scmp.eq.s32.totalorder %s35, 0
      %p328 = por %p326, %p327
      %p329 = scmp.ne.s32.totalorder %s321, %s323
      %p330 = scmp.eq.s32.totalorder %s40, 1
      %p331 = por %p329, %p330
      %p332 = scmp.ne.s32.totalorder %s323, %s324
      %p333 = scmp.eq.s32.totalorder %s40, 0
      %p334 = por %p332, %p333
      %p335 = scmp.ne.s32.totalorder %s323, %s324
      %p336 = scmp.eq.s32.totalorder %s41, 1
      %p337 = por %p335, %p336
      %p339 = scmp.ne.s32.totalorder %s324, %s338
      %p340 = scmp.eq.s32.totalorder %s41, 0
      %p341 = por %p339, %p340
      %s343 = sadd.s32 %s342, 1
      %p346 = scmp.eq.s32.totalorder %s35, 1
      %p347 = scmp.ne.s32.totalorder %s342, %s344
      %p348 = scmp.eq.s32.totalorder %s35, 0
      %p349 = por %p347, %p348
      %p350 = scmp.ne.s32.totalorder %s342, %s344
      %p351 = scmp.eq.s32.totalorder %s40, 1
      %p352 = por %p350, %p351
      %p353 = scmp.ne.s32.totalorder %s344, %s345
      %p354 = scmp.eq.s32.totalorder %s40, 0
      %p355 = por %p353, %p354
      %p356 = scmp.ne.s32.totalorder %s344, %s345
      %p357 = scmp.eq.s32.totalorder %s41, 1
      %p358 = por %p356, %p357
      %p360 = scmp.ne.s32.totalorder %s345, %s359
      %p361 = scmp.eq.s32.totalorder %s41, 0
      %p362 = por %p360, %p361
      %s364 = sadd.s32 %s363, 1
      %p367 = scmp.eq.s32.totalorder %s35, 1
      %p368 = scmp.ne.s32.totalorder %s363, %s365
      %p369 = scmp.eq.s32.totalorder %s35, 0
      %p370 = por %p368, %p369
      %p371 = scmp.ne.s32.totalorder %s363, %s365
      %p372 = scmp.eq.s32.totalorder %s40, 1
      %p373 = por %p371, %p372
      %p374 = scmp.ne.s32.totalorder %s365, %s366
      %p375 = scmp.eq.s32.totalorder %s40, 0
      %p376 = por %p374, %p375
      %p377 = scmp.ne.s32.totalorder %s365, %s366
      %p378 = scmp.eq.s32.totalorder %s41, 1
      %p379 = por %p377, %p378
      %p381 = scmp.ne.s32.totalorder %s366, %s380
      %p382 = scmp.eq.s32.totalorder %s41, 0
      %p383 = por %p381, %p382
      %s385 = sadd.s32 %s384, 1
      %p388 = scmp.eq.s32.totalorder %s35, 1
      %p389 = scmp.ne.s32.totalorder %s384, %s386
      %p390 = scmp.eq.s32.totalorder %s35, 0
      %p391 = por %p389, %p390
      %p392 = scmp.ne.s32.totalorder %s384, %s386
      %p393 = scmp.eq.s32.totalorder %s40, 1
      %p394 = por %p392, %p393
      %p395 = scmp.ne.s32.totalorder %s386, %s387
      %p396 = scmp.eq.s32.totalorder %s40, 0
      %p397 = por %p395, %p396
      %p398 = scmp.ne.s32.totalorder %s386, %s387
      %p399 = scmp.eq.s32.totalorder %s41, 1
      %p400 = por %p398, %p399
      %p402 = scmp.ne.s32.totalorder %s387, %s401
      %p403 = scmp.eq.s32.totalorder %s41, 0
      %p404 = por %p402, %p403
      %s405 = ssub.s32 %s35, %s42
      %p406 = scmp.eq.s32.totalorder %s405, 0
      %s408 = sadd.s32 %s407, 1
      %s409 = scalar_select %p406, %s407, %s408
      %p412 = pneg %p406
      %p413 = scmp.eq.s32.totalorder %s35, 1
      %p414 = por %p412, %p413
      %p415 = scmp.ne.s32.totalorder %s407, %s410
      %p416 = scmp.eq.s32.totalorder %s35, 0
      %p417 = por %p415, %p416
      %p418 = scmp.ne.s32.totalorder %s407, %s410
      %p419 = scmp.eq.s32.totalorder %s40, 1
      %p420 = por %p418, %p419
      %p421 = scmp.ne.s32.totalorder %s410, %s411
      %p422 = scmp.eq.s32.totalorder %s40, 0
      %p423 = por %p421, %p422
      %p424 = scmp.ne.s32.totalorder %s410, %s411
      %p425 = scmp.eq.s32.totalorder %s41, 1
      %p426 = por %p424, %p425
      %p428 = scmp.ne.s32.totalorder %s411, %s427
      %p429 = scmp.eq.s32.totalorder %s41, 0
      %p430 = por %p428, %p429
      %p431 = scmp.le.s32.totalorder 1, %s35
      %p432 = scmp.lt.s32.totalorder %s35, 3
      %p433 = pnand %p431, %p432
      %p434 = pneg %p433
      // Predicated region
      $region9: #{self_attn_forward.1} parent=5 // pred_check
        _
      $region10: #{self_attn_forward.1} parent=5 // pred_check_branch
        %436 = sbr.rel (%p433) target = $region12
      $region11: #{self_attn_forward.1} parent=5 // pred_region
        %s437 = ssub.s32 %s35, 1
        // Predicated region
        $region13: #{self_attn_forward.1} parent=11 // pred_check
          %p438 = pneg %p82
        $region14: #{self_attn_forward.1} parent=11 // pred_check_branch
          %440 = sbr.rel (%p438) target = $region16
        $region15: #{self_attn_forward.1} parent=11 // pred_region
          _
        $region16: #{self_attn_forward.1} parent=11 // pred_fallthru
          _
        // Predicated region
        $region17: #{self_attn_forward.1} parent=11 // pred_check
          %p441 = pneg %p103
        $region18: #{self_attn_forward.1} parent=11 // pred_check_branch
          %443 = sbr.rel (%p441) target = $region20
        $region19: #{self_attn_forward.1} parent=11 // pred_region
          _
        $region20: #{self_attn_forward.1} parent=11 // pred_fallthru
          _
        // Predicated region
        $region21: #{self_attn_forward.1} parent=11 // pred_check
          %p444 = pneg %p124
        $region22: #{self_attn_forward.1} parent=11 // pred_check_branch
          %446 = sbr.rel (%p444) target = $region24
        $region23: #{self_attn_forward.1} parent=11 // pred_region
          %s448 = ssub.s32 16384, 16384
          %449 = vsyncadd [#allocation6], %s448
          %s450 = sshll.u32 [#allocation5], 4
          %s451 = int_to_ptr.vmem [resolvable:$true] %s450
          %456 = dma.hbm_to_vmem [thread:$0]  %s3, 16384, %s451, [#allocation6], 256, 256, 16
        $region24: #{self_attn_forward.1} parent=11 // pred_fallthru
          _
        // Predicated region
        $region25: #{self_attn_forward.1} parent=11 // pred_check
          %p457 = pneg %p145
        $region26: #{self_attn_forward.1} parent=11 // pred_check_branch
          %459 = sbr.rel (%p457) target = $region28
        $region27: #{self_attn_forward.1} parent=11 // pred_region
          _
        $region28: #{self_attn_forward.1} parent=11 // pred_fallthru
          _
        // Predicated region
        $region29: #{self_attn_forward.1} parent=11 // pred_check
          %p460 = pneg %p166
        $region30: #{self_attn_forward.1} parent=11 // pred_check_branch
          %462 = sbr.rel (%p460) target = $region32
        $region31: #{self_attn_forward.1} parent=11 // pred_region
          %s464 = ssub.s32 16384, 16384
          %465 = vsyncadd [#allocation6], %s464
          %s466 = sshll.u32 [#allocation7], 4
          %s467 = int_to_ptr.vmem [resolvable:$true] %s466
          %472 = dma.hbm_to_vmem [thread:$0]  %s5, 16384, %s467, [#allocation6], 256, 256, 16
        $region32: #{self_attn_forward.1} parent=11 // pred_fallthru
          _
        // Predicated region
        $region33: #{self_attn_forward.1} parent=11 // pred_check
          %p473 = pneg %p187
        $region34: #{self_attn_forward.1} parent=11 // pred_check_branch
          %475 = sbr.rel (%p473) target = $region36
        $region35: #{self_attn_forward.1} parent=11 // pred_region
          %s477 = ssub.s32 64, 64
          %478 = vsyncadd [#allocation9], %s477
          %s480 = sshll.u32 [#allocation8], 4
          %s481 = int_to_ptr.vmem [resolvable:$true] %s480
          %483 = dma.hbm_to_vmem [thread:$0]  %s6, 64, %s481, [#allocation9]
        $region36: #{self_attn_forward.1} parent=11 // pred_fallthru
          _
        // Predicated region
        $region37: #{self_attn_forward.1} parent=11 // pred_check
          %p484 = pneg %p208
        $region38: #{self_attn_forward.1} parent=11 // pred_check_branch
          %486 = sbr.rel (%p484) target = $region40
        $region39: #{self_attn_forward.1} parent=11 // pred_region
          %s488 = ssub.s32 16384, 16384
          %489 = vsyncadd [#allocation9], %s488
          %s490 = sshll.u32 [#allocation10], 4
          %s491 = int_to_ptr.vmem [resolvable:$true] %s490
          %496 = dma.hbm_to_vmem [thread:$0]  %s7, 16384, %s491, [#allocation9], 256, 256, 16
        $region40: #{self_attn_forward.1} parent=11 // pred_fallthru
          _
        // Predicated region
        $region41: #{self_attn_forward.1} parent=11 // pred_check
          %p497 = pneg %p229
        $region42: #{self_attn_forward.1} parent=11 // pred_check_branch
          %499 = sbr.rel (%p497) target = $region44
        $region43: #{self_attn_forward.1} parent=11 // pred_region
          _
        $region44: #{self_attn_forward.1} parent=11 // pred_fallthru
          _
        // Predicated region
        $region45: #{self_attn_forward.1} parent=11 // pred_check
          %p500 = pneg %p250
        $region46: #{self_attn_forward.1} parent=11 // pred_check_branch
          %502 = sbr.rel (%p500) target = $region48
        $region47: #{self_attn_forward.1} parent=11 // pred_region
          %s504 = ssub.s32 16384, 16384
          %505 = vsyncadd [#allocation12], %s504
          %s506 = sshll.u32 [#allocation11], 4
          %s507 = int_to_ptr.vmem [resolvable:$true] %s506
          %512 = dma.hbm_to_vmem [thread:$0]  %s9, 16384, %s507, [#allocation12], 256, 256, 16
        $region48: #{self_attn_forward.1} parent=11 // pred_fallthru
          _
        // Predicated region
        $region49: #{self_attn_forward.1} parent=11 // pred_check
          %p513 = pneg %p271
        $region50: #{self_attn_forward.1} parent=11 // pred_check_branch
          %515 = sbr.rel (%p513) target = $region52
        $region51: #{self_attn_forward.1} parent=11 // pred_region
          %s517 = ssub.s32 64, 64
          %518 = vsyncadd [#allocation12], %s517
          %s520 = sshll.u32 [#allocation13], 4
          %s521 = int_to_ptr.vmem [resolvable:$true] %s520
          %523 = dma.hbm_to_vmem [thread:$0]  %s10, 64, %s521, [#allocation12]
        $region52: #{self_attn_forward.1} parent=11 // pred_fallthru
          _
        // Predicated region
        $region53: #{self_attn_forward.1} parent=11 // pred_check
          %p524 = pneg %p292
        $region54: #{self_attn_forward.1} parent=11 // pred_check_branch
          %526 = sbr.rel (%p524) target = $region56
        $region55: #{self_attn_forward.1} parent=11 // pred_region
          %s528 = ssub.s32 8192, 8192
          %529 = vsyncadd [#allocation15], %s528
          %s530 = sshll.u32 [#allocation14], 4
          %s531 = int_to_ptr.vmem [resolvable:$true] %s530
          %536 = dma.hbm_to_vmem [thread:$0]  %s11, 8192, %s531, [#allocation15], 128, 128, 8
        $region56: #{self_attn_forward.1} parent=11 // pred_fallthru
          _
        // Predicated region
        $region57: #{self_attn_forward.1} parent=11 // pred_check
          %p537 = pneg %p313
        $region58: #{self_attn_forward.1} parent=11 // pred_check_branch
          %539 = sbr.rel (%p537) target = $region60
        $region59: #{self_attn_forward.1} parent=11 // pred_region
          %s541 = ssub.s32 32, 32
          %542 = vsyncadd [#allocation15], %s541
          %s544 = sshll.u32 [#allocation16], 4
          %s545 = int_to_ptr.vmem [resolvable:$true] %s544
          %547 = dma.hbm_to_vmem [thread:$0]  %s12, 32, %s545, [#allocation15]
        $region60: #{self_attn_forward.1} parent=11 // pred_fallthru
          _
        // Predicated region
        $region61: #{self_attn_forward.1} parent=11 // pred_check
          %p548 = pneg %p334
        $region62: #{self_attn_forward.1} parent=11 // pred_check_branch
          %550 = sbr.rel (%p548) target = $region64
        $region63: #{self_attn_forward.1} parent=11 // pred_region
          %s552 = ssub.s32 4096, 4096
          %553 = vsyncadd [#allocation18], %s552
          %s554 = sshll.u32 [#allocation17], 4
          %s555 = int_to_ptr.vmem [resolvable:$true] %s554
          %560 = dma.hbm_to_vmem [thread:$0]  %s13, 4096, %s555, [#allocation18], 128, 128, 8
        $region64: #{self_attn_forward.1} parent=11 // pred_fallthru
          _
        // Predicated region
        $region65: #{self_attn_forward.1} parent=11 // pred_check
          %p561 = pneg %p355
        $region66: #{self_attn_forward.1} parent=11 // pred_check_branch
          %563 = sbr.rel (%p561) target = $region68
        $region67: #{self_attn_forward.1} parent=11 // pred_region
          %s565 = ssub.s32 32, 32
          %566 = vsyncadd [#allocation18], %s565
          %s568 = sshll.u32 [#allocation19], 4
          %s569 = int_to_ptr.vmem [resolvable:$true] %s568
          %571 = dma.hbm_to_vmem [thread:$0]  %s14, 32, %s569, [#allocation18]
        $region68: #{self_attn_forward.1} parent=11 // pred_fallthru
          _
        // Predicated region
        $region69: #{self_attn_forward.1} parent=11 // pred_check
          %p572 = pneg %p376
        $region70: #{self_attn_forward.1} parent=11 // pred_check_branch
          %574 = sbr.rel (%p572) target = $region72
        $region71: #{self_attn_forward.1} parent=11 // pred_region
          %s576 = ssub.s32 8192, 8192
          %577 = vsyncadd [#allocation21], %s576
          %s578 = sshll.u32 [#allocation20], 4
          %s579 = int_to_ptr.vmem [resolvable:$true] %s578
          %584 = dma.hbm_to_vmem [thread:$0]  %s15, 8192, %s579, [#allocation21], 256, 256, 16
        $region72: #{self_attn_forward.1} parent=11 // pred_fallthru
          _
        // Predicated region
        $region73: #{self_attn_forward.1} parent=11 // pred_check
          %p585 = pneg %p397
        $region74: #{self_attn_forward.1} parent=11 // pred_check_branch
          %587 = sbr.rel (%p585) target = $region76
        $region75: #{self_attn_forward.1} parent=11 // pred_region
          %s589 = ssub.s32 64, 64
          %590 = vsyncadd [#allocation21], %s589
          %s592 = sshll.u32 [#allocation22], 4
          %s593 = int_to_ptr.vmem [resolvable:$true] %s592
          %595 = dma.hbm_to_vmem [thread:$0]  %s16, 64, %s593, [#allocation21]
        $region76: #{self_attn_forward.1} parent=11 // pred_fallthru
          _
      $region12: #{self_attn_forward.1} parent=5 // pred_fallthru
        _
      %p596 = scmp.lt.s32.totalorder %s35, 2
      // Predicated region
      $region77: #{self_attn_forward.1} parent=5 // pred_check
        %p597 = pneg %p596
      $region78: #{self_attn_forward.1} parent=5 // pred_check_branch
        %599 = sbr.rel (%p597) target = $region80
      $region79: #{self_attn_forward.1} parent=5 // pred_region
        // Predicated region
        $region81: #{self_attn_forward.1} parent=79 // pred_check
          %p600 = pneg %p55
        $region82: #{self_attn_forward.1} parent=79 // pred_check_branch
          %602 = sbr.rel (%p600) target = $region84
        $region83: #{self_attn_forward.1} parent=79 // pred_region
          %s603 = sand.u32 %s45, 1
          %s604 = scalar_lea.sflag [#allocation3], %s603
          %s605 = sand.u32 %s45, 1
          %s606 = smul.addr %s605, 32
          %s607 = scalar_lea.vmem [#allocation2], %s606
          %s609 = ssub.s32 512, 512
          %610 = vsyncadd %s604, %s609
          %s611 = smul.addr %s35, 4
          %s612 = smul.addr %s611, 128
          %s613 = scalar_lea.hbm %s0, %s612
          %s615 = sshll.u32 %s607, 4
          %s616 = int_to_ptr.vmem [resolvable:$true] %s615
          %618 = dma.hbm_to_vmem [thread:$0]  %s613, 512, %s616, %s604
        $region84: #{self_attn_forward.1} parent=79 // pred_fallthru
          _
      $region80: #{self_attn_forward.1} parent=5 // pred_fallthru
        _
      %p619 = scmp.le.s32.totalorder 1, %s35
      %p620 = scmp.lt.s32.totalorder %s35, 3
      %p621 = pnand %p619, %p620
      %p622 = pneg %p621
      // Predicated region
      $region85: #{self_attn_forward.1} parent=5 // pred_check
        _
      $region86: #{self_attn_forward.1} parent=5 // pred_check_branch
        %624 = sbr.rel (%p621) target = $region88
      $region87: #{self_attn_forward.1} parent=5 // pred_region
        %s625 = ssub.s32 %s35, 1
        %s626 = sand.u32 %s48, 1
        %s627 = scalar_lea.sflag [#allocation3], %s626
        %s628 = sand.u32 %s48, 1
        %s629 = smul.addr %s628, 32
        %s630 = scalar_lea.vmem [#allocation2], %s629
        // Predicated region
        $region89: #{self_attn_forward.1} parent=87 // pred_check
          %p631 = pneg %p61
        $region90: #{self_attn_forward.1} parent=87 // pred_check_branch
          %633 = sbr.rel (%p631) target = $region92
        $region91: #{self_attn_forward.1} parent=87 // pred_region
          %634 = dma.done %s627, 512
        $region92: #{self_attn_forward.1} parent=87 // pred_fallthru
          _
        // Predicated region
        $region93: #{self_attn_forward.1} parent=87 // pred_check
          %p635 = pneg %p124
        $region94: #{self_attn_forward.1} parent=87 // pred_check_branch
          %637 = sbr.rel (%p635) target = $region96
        $region95: #{self_attn_forward.1} parent=87 // pred_region
          %638 = dma.done [#allocation6], 16384
        $region96: #{self_attn_forward.1} parent=87 // pred_fallthru
          _
        // Predicated region
        $region97: #{self_attn_forward.1} parent=87 // pred_check
          %p639 = pneg %p166
        $region98: #{self_attn_forward.1} parent=87 // pred_check_branch
          %641 = sbr.rel (%p639) target = $region100
        $region99: #{self_attn_forward.1} parent=87 // pred_region
          %642 = dma.done [#allocation6], 16384
        $region100: #{self_attn_forward.1} parent=87 // pred_fallthru
          _
        // Predicated region
        $region101: #{self_attn_forward.1} parent=87 // pred_check
          %p643 = pneg %p187
        $region102: #{self_attn_forward.1} parent=87 // pred_check_branch
          %645 = sbr.rel (%p643) target = $region104
        $region103: #{self_attn_forward.1} parent=87 // pred_region
          %646 = dma.done [#allocation9], 64
        $region104: #{self_attn_forward.1} parent=87 // pred_fallthru
          _
        // Predicated region
        $region105: #{self_attn_forward.1} parent=87 // pred_check
          %p647 = pneg %p208
        $region106: #{self_attn_forward.1} parent=87 // pred_check_branch
          %649 = sbr.rel (%p647) target = $region108
        $region107: #{self_attn_forward.1} parent=87 // pred_region
          %650 = dma.done [#allocation9], 16384
        $region108: #{self_attn_forward.1} parent=87 // pred_fallthru
          _
        // Predicated region
        $region109: #{self_attn_forward.1} parent=87 // pred_check
          %p651 = pneg %p250
        $region110: #{self_attn_forward.1} parent=87 // pred_check_branch
          %653 = sbr.rel (%p651) target = $region112
        $region111: #{self_attn_forward.1} parent=87 // pred_region
          %654 = dma.done [#allocation12], 16384
        $region112: #{self_attn_forward.1} parent=87 // pred_fallthru
          _
        // Predicated region
        $region113: #{self_attn_forward.1} parent=87 // pred_check
          %p655 = pneg %p271
        $region114: #{self_attn_forward.1} parent=87 // pred_check_branch
          %657 = sbr.rel (%p655) target = $region116
        $region115: #{self_attn_forward.1} parent=87 // pred_region
          %658 = dma.done [#allocation12], 64
        $region116: #{self_attn_forward.1} parent=87 // pred_fallthru
          _
        // Predicated region
        $region117: #{self_attn_forward.1} parent=87 // pred_check
          %p659 = pneg %p292
        $region118: #{self_attn_forward.1} parent=87 // pred_check_branch
          %661 = sbr.rel (%p659) target = $region120
        $region119: #{self_attn_forward.1} parent=87 // pred_region
          %662 = dma.done [#allocation15], 8192
        $region120: #{self_attn_forward.1} parent=87 // pred_fallthru
          _
        // Predicated region
        $region121: #{self_attn_forward.1} parent=87 // pred_check
          %p663 = pneg %p313
        $region122: #{self_attn_forward.1} parent=87 // pred_check_branch
          %665 = sbr.rel (%p663) target = $region124
        $region123: #{self_attn_forward.1} parent=87 // pred_region
          %666 = dma.done [#allocation15], 32
        $region124: #{self_attn_forward.1} parent=87 // pred_fallthru
          _
        // Predicated region
        $region125: #{self_attn_forward.1} parent=87 // pred_check
          %p667 = pneg %p334
        $region126: #{self_attn_forward.1} parent=87 // pred_check_branch
          %669 = sbr.rel (%p667) target = $region128
        $region127: #{self_attn_forward.1} parent=87 // pred_region
          %670 = dma.done [#allocation18], 4096
        $region128: #{self_attn_forward.1} parent=87 // pred_fallthru
          _
        // Predicated region
        $region129: #{self_attn_forward.1} parent=87 // pred_check
          %p671 = pneg %p355
        $region130: #{self_attn_forward.1} parent=87 // pred_check_branch
          %673 = sbr.rel (%p671) target = $region132
        $region131: #{self_attn_forward.1} parent=87 // pred_region
          %674 = dma.done [#allocation18], 32
        $region132: #{self_attn_forward.1} parent=87 // pred_fallthru
          _
        // Predicated region
        $region133: #{self_attn_forward.1} parent=87 // pred_check
          %p675 = pneg %p376
        $region134: #{self_attn_forward.1} parent=87 // pred_check_branch
          %677 = sbr.rel (%p675) target = $region136
        $region135: #{self_attn_forward.1} parent=87 // pred_region
          %678 = dma.done [#allocation21], 8192
        $region136: #{self_attn_forward.1} parent=87 // pred_fallthru
          _
        // Predicated region
        $region137: #{self_attn_forward.1} parent=87 // pred_check
          %p679 = pneg %p397
        $region138: #{self_attn_forward.1} parent=87 // pred_check_branch
          %681 = sbr.rel (%p679) target = $region140
        $region139: #{self_attn_forward.1} parent=87 // pred_region
          %682 = dma.done [#allocation21], 64
        $region140: #{self_attn_forward.1} parent=87 // pred_fallthru
          _
        %s683 = sand.u32 %s48, 1
        %s684 = scalar_lea.sflag [#allocation3], %s683
        %s685 = sand.u32 %s48, 1
        %s686 = smul.addr %s685, 32
        %s687 = scalar_lea.vmem [#allocation2], %s686
        %p688 = pneg %p61
        %p689 = pneg %p58
        %p690 = pneg %p82
        %p691 = pneg %p79
        %p692 = pneg %p103
        %p693 = pneg %p100
        %p694 = pneg %p124
        %p695 = pneg %p121
        %p696 = pneg %p145
        %p697 = pneg %p142
        %p698 = pneg %p166
        %p699 = pneg %p163
        %p700 = pneg %p187
        %p701 = pneg %p184
        %p702 = pneg %p208
        %p703 = pneg %p205
        %p704 = pneg %p229
        %p705 = pneg %p226
        %p706 = pneg %p250
        %p707 = pneg %p247
        %p708 = pneg %p271
        %p709 = pneg %p268
        %p710 = pneg %p292
        %p711 = pneg %p289
        %p712 = pneg %p313
        %p713 = pneg %p310
        %p714 = pneg %p334
        %p715 = pneg %p331
        %p716 = pneg %p355
        %p717 = pneg %p352
        %p718 = pneg %p376
        %p719 = pneg %p373
        %p720 = pneg %p397
        %p721 = pneg %p394
        %p722 = pneg %p423
        %p723 = pneg %p420
        %s724 = sand.u32 %s410, 1
        %s725 = scalar_lea.sflag [#allocation4], %s724
        %s726 = sand.u32 %s410, 1
        %s727 = smul.addr %s726, 32
        %s728 = scalar_lea.vmem [#allocation23], %s727
        %v729 = vld [vmem:[%s630] sm:$0xff]
        %v730 = vld [vmem:[%s630 + $0x8] sm:$0xff]
        %v731 = vld [vmem:[%s630 + $0x10] sm:$0xff]
        %v732 = vld [vmem:[%s630 + $0x18] sm:$0xff]
        %v733 = vadd.f32 %v729, %v730
        %v734 = vadd.f32 %v733, %v731
        %v735 = vadd.f32 %v734, %v732
        %736 = vadd.xlane.f32.xlu0 %v735
        %v737 = vpop.xlane.xlu0 %736
        %v738 = vrcp.pop 512.0
        %v739 = vmul.f32 %v737, %v738
        %v740 = vsub.f32 %v729, %v739
        %v741 = vsub.f32 %v730, %v739
        %v742 = vsub.f32 %v731, %v739
        %v743 = vsub.f32 %v732, %v739
        %v744 = vmul.f32 %v740, %v740
        %v745 = vmul.f32 %v741, %v741
        %v746 = vmul.f32 %v742, %v742
        %v747 = vmul.f32 %v743, %v743
        %v748 = vadd.f32 %v744, %v745
        %v749 = vadd.f32 %v748, %v746
        %v750 = vadd.f32 %v749, %v747
        %751 = vadd.xlane.f32.xlu0 %v750
        %v752 = vpop.xlane.xlu0 %751
        %v753 = vmul.f32 %v752, %v738
        %v754 = vadd.f32 %v753, 1e-06
        %v755 = vrsqrt.pop %v754
        %v756 = vmul.f32 %v740, %v755
        %v757 = vmul.f32 %v741, %v755
        %v758 = vmul.f32 %v742, %v755
        %v759 = vmul.f32 %v743, %v755
        %v760 = vld [vmem:[%s1] sm:$0xf]
        %v762 = vlaneseq
        %v763 = vshrl.u32 %v762, 7
        %v764 = vsub.s32 0, %v763
        %v765 = vrot.slane %v760, %v764
        %v766 = vlaneseq
        %v767 = vshrl.u32 %v766, 7
        %v768 = vsub.s32 1, %v767
        %v769 = vrot.slane %v760, %v768
        %v770 = vlaneseq
        %v771 = vshrl.u32 %v770, 7
        %v772 = vsub.s32 2, %v771
        %v773 = vrot.slane %v760, %v772
        %v774 = vlaneseq
        %v775 = vshrl.u32 %v774, 7
        %v776 = vsub.s32 3, %v775
        %v777 = vrot.slane %v760, %v776
        %v782 = vmul.f32 %v756, %v765
        %v783 = vmul.f32 %v757, %v769
        %v784 = vmul.f32 %v758, %v773
        %v785 = vmul.f32 %v759, %v777
        %v786 = vld [vmem:[%s2] sm:$0xf]
        %v788 = vlaneseq
        %v789 = vshrl.u32 %v788, 7
        %v790 = vsub.s32 0, %v789
        %v791 = vrot.slane %v786, %v790
        %v792 = vlaneseq
        %v793 = vshrl.u32 %v792, 7
        %v794 = vsub.s32 1, %v793
        %v795 = vrot.slane %v786, %v794
        %v796 = vlaneseq
        %v797 = vshrl.u32 %v796, 7
        %v798 = vsub.s32 2, %v797
        %v799 = vrot.slane %v786, %v798
        %v800 = vlaneseq
        %v801 = vshrl.u32 %v800, 7
        %v802 = vsub.s32 3, %v801
        %v803 = vrot.slane %v786, %v802
        %v808 = vadd.f32 %v782, %v791
        %v809 = vadd.f32 %v783, %v795
        %v810 = vadd.f32 %v784, %v799
        %v811 = vadd.f32 %v785, %v803
        %v812 = vpack.c.bf16 %v808, %v808
        %v813 = vpack.c.bf16 %v809, %v809
        %v814 = vpack.c.bf16 %v810, %v810
        %v815 = vpack.c.bf16 %v811, %v811
        %v816 = vld [vmem:[#allocation5] sm:$0xff]
        %v817 = vld [vmem:[#allocation5 + $0x8] sm:$0xff]
        %v818 = vld [vmem:[#allocation5 + $0x10] sm:$0xff]
        %v819 = vld [vmem:[#allocation5 + $0x18] sm:$0xff]
        %v820 = vld [vmem:[#allocation5 + $0x20] sm:$0xff]
        %v821 = vld [vmem:[#allocation5 + $0x28] sm:$0xff]
        %v822 = vld [vmem:[#allocation5 + $0x30] sm:$0xff]
        %v823 = vld [vmem:[#allocation5 + $0x38] sm:$0xff]
        %v824 = vld [vmem:[#allocation5 + $0x40] sm:$0xff]
        %v825 = vld [vmem:[#allocation5 + $0x48] sm:$0xff]
        %v826 = vld [vmem:[#allocation5 + $0x50] sm:$0xff]
        %v827 = vld [vmem:[#allocation5 + $0x58] sm:$0xff]
        %v828 = vld [vmem:[#allocation5 + $0x60] sm:$0xff]
        %v829 = vld [vmem:[#allocation5 + $0x68] sm:$0xff]
        %v830 = vld [vmem:[#allocation5 + $0x70] sm:$0xff]
        %v831 = vld [vmem:[#allocation5 + $0x78] sm:$0xff]
        %v832 = vld [vmem:[#allocation5 + $0x80] sm:$0xff]
        %v833 = vld [vmem:[#allocation5 + $0x88] sm:$0xff]
        %v834 = vld [vmem:[#allocation5 + $0x90] sm:$0xff]
        %v835 = vld [vmem:[#allocation5 + $0x98] sm:$0xff]
        %v836 = vld [vmem:[#allocation5 + $0xa0] sm:$0xff]
        %v837 = vld [vmem:[#allocation5 + $0xa8] sm:$0xff]
        %v838 = vld [vmem:[#allocation5 + $0xb0] sm:$0xff]
        %v839 = vld [vmem:[#allocation5 + $0xb8] sm:$0xff]
        %v840 = vld [vmem:[#allocation5 + $0xc0] sm:$0xff]
        %v841 = vld [vmem:[#allocation5 + $0xc8] sm:$0xff]
        %v842 = vld [vmem:[#allocation5 + $0xd0] sm:$0xff]
        %v843 = vld [vmem:[#allocation5 + $0xd8] sm:$0xff]
        %v844 = vld [vmem:[#allocation5 + $0xe0] sm:$0xff]
        %v845 = vld [vmem:[#allocation5 + $0xe8] sm:$0xff]
        %v846 = vld [vmem:[#allocation5 + $0xf0] sm:$0xff]
        %v847 = vld [vmem:[#allocation5 + $0xf8] sm:$0xff]
        %v848 = vld [vmem:[#allocation5 + $0x100] sm:$0xff]
        %v849 = vld [vmem:[#allocation5 + $0x108] sm:$0xff]
        %v850 = vld [vmem:[#allocation5 + $0x110] sm:$0xff]
        %v851 = vld [vmem:[#allocation5 + $0x118] sm:$0xff]
        %v852 = vld [vmem:[#allocation5 + $0x120] sm:$0xff]
        %v853 = vld [vmem:[#allocation5 + $0x128] sm:$0xff]
        %v854 = vld [vmem:[#allocation5 + $0x130] sm:$0xff]
        %v855 = vld [vmem:[#allocation5 + $0x138] sm:$0xff]
        %v856 = vld [vmem:[#allocation5 + $0x140] sm:$0xff]
        %v857 = vld [vmem:[#allocation5 + $0x148] sm:$0xff]
        %v858 = vld [vmem:[#allocation5 + $0x150] sm:$0xff]
        %v859 = vld [vmem:[#allocation5 + $0x158] sm:$0xff]
        %v860 = vld [vmem:[#allocation5 + $0x160] sm:$0xff]
        %v861 = vld [vmem:[#allocation5 + $0x168] sm:$0xff]
        %v862 = vld [vmem:[#allocation5 + $0x170] sm:$0xff]
        %v863 = vld [vmem:[#allocation5 + $0x178] sm:$0xff]
        %v864 = vld [vmem:[#allocation5 + $0x180] sm:$0xff]
        %v865 = vld [vmem:[#allocation5 + $0x188] sm:$0xff]
        %v866 = vld [vmem:[#allocation5 + $0x190] sm:$0xff]
        %v867 = vld [vmem:[#allocation5 + $0x198] sm:$0xff]
        %v868 = vld [vmem:[#allocation5 + $0x1a0] sm:$0xff]
        %v869 = vld [vmem:[#allocation5 + $0x1a8] sm:$0xff]
        %v870 = vld [vmem:[#allocation5 + $0x1b0] sm:$0xff]
        %v871 = vld [vmem:[#allocation5 + $0x1b8] sm:$0xff]
        %v872 = vld [vmem:[#allocation5 + $0x1c0] sm:$0xff]
        %v873 = vld [vmem:[#allocation5 + $0x1c8] sm:$0xff]
        %v874 = vld [vmem:[#allocation5 + $0x1d0] sm:$0xff]
        %v875 = vld [vmem:[#allocation5 + $0x1d8] sm:$0xff]
        %v876 = vld [vmem:[#allocation5 + $0x1e0] sm:$0xff]
        %v877 = vld [vmem:[#allocation5 + $0x1e8] sm:$0xff]
        %v878 = vld [vmem:[#allocation5 + $0x1f0] sm:$0xff]
        %v879 = vld [vmem:[#allocation5 + $0x1f8] sm:$0xff]
        %v880 = vld [vmem:[#allocation5 + $0x200] sm:$0xff]
        %v881 = vld [vmem:[#allocation5 + $0x208] sm:$0xff]
        %v882 = vld [vmem:[#allocation5 + $0x210] sm:$0xff]
        %v883 = vld [vmem:[#allocation5 + $0x218] sm:$0xff]
        %v884 = vld [vmem:[#allocation5 + $0x220] sm:$0xff]
        %v885 = vld [vmem:[#allocation5 + $0x228] sm:$0xff]
        %v886 = vld [vmem:[#allocation5 + $0x230] sm:$0xff]
        %v887 = vld [vmem:[#allocation5 + $0x238] sm:$0xff]
        %v888 = vld [vmem:[#allocation5 + $0x240] sm:$0xff]
        %v889 = vld [vmem:[#allocation5 + $0x248] sm:$0xff]
        %v890 = vld [vmem:[#allocation5 + $0x250] sm:$0xff]
        %v891 = vld [vmem:[#allocation5 + $0x258] sm:$0xff]
        %v892 = vld [vmem:[#allocation5 + $0x260] sm:$0xff]
        %v893 = vld [vmem:[#allocation5 + $0x268] sm:$0xff]
        %v894 = vld [vmem:[#allocation5 + $0x270] sm:$0xff]
        %v895 = vld [vmem:[#allocation5 + $0x278] sm:$0xff]
        %v896 = vld [vmem:[#allocation5 + $0x280] sm:$0xff]
        %v897 = vld [vmem:[#allocation5 + $0x288] sm:$0xff]
        %v898 = vld [vmem:[#allocation5 + $0x290] sm:$0xff]
        %v899 = vld [vmem:[#allocation5 + $0x298] sm:$0xff]
        %v900 = vld [vmem:[#allocation5 + $0x2a0] sm:$0xff]
        %v901 = vld [vmem:[#allocation5 + $0x2a8] sm:$0xff]
        %v902 = vld [vmem:[#allocation5 + $0x2b0] sm:$0xff]
        %v903 = vld [vmem:[#allocation5 + $0x2b8] sm:$0xff]
        %v904 = vld [vmem:[#allocation5 + $0x2c0] sm:$0xff]
        %v905 = vld [vmem:[#allocation5 + $0x2c8] sm:$0xff]
        %v906 = vld [vmem:[#allocation5 + $0x2d0] sm:$0xff]
        %v907 = vld [vmem:[#allocation5 + $0x2d8] sm:$0xff]
        %v908 = vld [vmem:[#allocation5 + $0x2e0] sm:$0xff]
        %v909 = vld [vmem:[#allocation5 + $0x2e8] sm:$0xff]
        %v910 = vld [vmem:[#allocation5 + $0x2f0] sm:$0xff]
        %v911 = vld [vmem:[#allocation5 + $0x2f8] sm:$0xff]
        %v912 = vld [vmem:[#allocation5 + $0x300] sm:$0xff]
        %v913 = vld [vmem:[#allocation5 + $0x308] sm:$0xff]
        %v914 = vld [vmem:[#allocation5 + $0x310] sm:$0xff]
        %v915 = vld [vmem:[#allocation5 + $0x318] sm:$0xff]
        %v916 = vld [vmem:[#allocation5 + $0x320] sm:$0xff]
        %v917 = vld [vmem:[#allocation5 + $0x328] sm:$0xff]
        %v918 = vld [vmem:[#allocation5 + $0x330] sm:$0xff]
        %v919 = vld [vmem:[#allocation5 + $0x338] sm:$0xff]
        %v920 = vld [vmem:[#allocation5 + $0x340] sm:$0xff]
        %v921 = vld [vmem:[#allocation5 + $0x348] sm:$0xff]
        %v922 = vld [vmem:[#allocation5 + $0x350] sm:$0xff]
        %v923 = vld [vmem:[#allocation5 + $0x358] sm:$0xff]
        %v924 = vld [vmem:[#allocation5 + $0x360] sm:$0xff]
        %v925 = vld [vmem:[#allocation5 + $0x368] sm:$0xff]
        %v926 = vld [vmem:[#allocation5 + $0x370] sm:$0xff]
        %v927 = vld [vmem:[#allocation5 + $0x378] sm:$0xff]
        %v928 = vld [vmem:[#allocation5 + $0x380] sm:$0xff]
        %v929 = vld [vmem:[#allocation5 + $0x388] sm:$0xff]
        %v930 = vld [vmem:[#allocation5 + $0x390] sm:$0xff]
        %v931 = vld [vmem:[#allocation5 + $0x398] sm:$0xff]
        %v932 = vld [vmem:[#allocation5 + $0x3a0] sm:$0xff]
        %v933 = vld [vmem:[#allocation5 + $0x3a8] sm:$0xff]
        %v934 = vld [vmem:[#allocation5 + $0x3b0] sm:$0xff]
        %v935 = vld [vmem:[#allocation5 + $0x3b8] sm:$0xff]
        %v936 = vld [vmem:[#allocation5 + $0x3c0] sm:$0xff]
        %v937 = vld [vmem:[#allocation5 + $0x3c8] sm:$0xff]
        %v938 = vld [vmem:[#allocation5 + $0x3d0] sm:$0xff]
        %v939 = vld [vmem:[#allocation5 + $0x3d8] sm:$0xff]
        %v940 = vld [vmem:[#allocation5 + $0x3e0] sm:$0xff]
        %v941 = vld [vmem:[#allocation5 + $0x3e8] sm:$0xff]
        %v942 = vld [vmem:[#allocation5 + $0x3f0] sm:$0xff]
        %v943 = vld [vmem:[#allocation5 + $0x3f8] sm:$0xff]
        %v944 = vld [vmem:[%s4] sm:$0xf]
        %v946 = vlaneseq
        %v947 = vshrl.u32 %v946, 7
        %v948 = vsub.s32 0, %v947
        %v949 = vrot.slane %v944, %v948
        %v950 = vlaneseq
        %v951 = vshrl.u32 %v950, 7
        %v952 = vsub.s32 1, %v951
        %v953 = vrot.slane %v944, %v952
        %v954 = vlaneseq
        %v955 = vshrl.u32 %v954, 7
        %v956 = vsub.s32 2, %v955
        %v957 = vrot.slane %v944, %v956
        %v958 = vlaneseq
        %v959 = vshrl.u32 %v958, 7
        %v960 = vsub.s32 3, %v959
        %v961 = vrot.slane %v944, %v960
        %v1094 = vunpack.c.l.b16 %v816
        %v1095 = vunpack.c.h.b16 %v816
        %v1096 = vunpack.c.l.b16 %v817
        %v1097 = vunpack.c.h.b16 %v817
        %v1098 = vunpack.c.l.b16 %v818
        %v1099 = vunpack.c.h.b16 %v818
        %v1100 = vunpack.c.l.b16 %v819
        %v1101 = vunpack.c.h.b16 %v819
        %v1102 = vunpack.c.l.b16 %v820
        %v1103 = vunpack.c.h.b16 %v820
        %v1104 = vunpack.c.l.b16 %v821
        %v1105 = vunpack.c.h.b16 %v821
        %v1106 = vunpack.c.l.b16 %v822
        %v1107 = vunpack.c.h.b16 %v822
        %v1108 = vunpack.c.l.b16 %v823
        %v1109 = vunpack.c.h.b16 %v823
        %v1110 = vunpack.c.l.b16 %v824
        %v1111 = vunpack.c.h.b16 %v824
        %v1112 = vunpack.c.l.b16 %v825
        %v1113 = vunpack.c.h.b16 %v825
        %v1114 = vunpack.c.l.b16 %v826
        %v1115 = vunpack.c.h.b16 %v826
        %v1116 = vunpack.c.l.b16 %v827
        %v1117 = vunpack.c.h.b16 %v827
        %v1118 = vunpack.c.l.b16 %v828
        %v1119 = vunpack.c.h.b16 %v828
        %v1120 = vunpack.c.l.b16 %v829
        %v1121 = vunpack.c.h.b16 %v829
        %v1122 = vunpack.c.l.b16 %v830
        %v1123 = vunpack.c.h.b16 %v830
        %v1124 = vunpack.c.l.b16 %v831
        %v1125 = vunpack.c.h.b16 %v831
        %v1126 = vunpack.c.l.b16 %v832
        %v1127 = vunpack.c.h.b16 %v832
        %v1128 = vunpack.c.l.b16 %v833
        %v1129 = vunpack.c.h.b16 %v833
        %v1130 = vunpack.c.l.b16 %v834
        %v1131 = vunpack.c.h.b16 %v834
        %v1132 = vunpack.c.l.b16 %v835
        %v1133 = vunpack.c.h.b16 %v835
        %v1134 = vunpack.c.l.b16 %v836
        %v1135 = vunpack.c.h.b16 %v836
        %v1136 = vunpack.c.l.b16 %v837
        %v1137 = vunpack.c.h.b16 %v837
        %v1138 = vunpack.c.l.b16 %v838
        %v1139 = vunpack.c.h.b16 %v838
        %v1140 = vunpack.c.l.b16 %v839
        %v1141 = vunpack.c.h.b16 %v839
        %v1142 = vunpack.c.l.b16 %v840
        %v1143 = vunpack.c.h.b16 %v840
        %v1144 = vunpack.c.l.b16 %v841
        %v1145 = vunpack.c.h.b16 %v841
        %v1146 = vunpack.c.l.b16 %v842
        %v1147 = vunpack.c.h.b16 %v842
        %v1148 = vunpack.c.l.b16 %v843
        %v1149 = vunpack.c.h.b16 %v843
        %v1150 = vunpack.c.l.b16 %v844
        %v1151 = vunpack.c.h.b16 %v844
        %v1152 = vunpack.c.l.b16 %v845
        %v1153 = vunpack.c.h.b16 %v845
        %v1154 = vunpack.c.l.b16 %v846
        %v1155 = vunpack.c.h.b16 %v846
        %v1156 = vunpack.c.l.b16 %v847
        %v1157 = vunpack.c.h.b16 %v847
        %v1158 = vunpack.c.l.b16 %v848
        %v1159 = vunpack.c.h.b16 %v848
        %v1160 = vunpack.c.l.b16 %v849
        %v1161 = vunpack.c.h.b16 %v849
        %v1162 = vunpack.c.l.b16 %v850
        %v1163 = vunpack.c.h.b16 %v850
        %v1164 = vunpack.c.l.b16 %v851
        %v1165 = vunpack.c.h.b16 %v851
        %v1166 = vunpack.c.l.b16 %v852
        %v1167 = vunpack.c.h.b16 %v852
        %v1168 = vunpack.c.l.b16 %v853
        %v1169 = vunpack.c.h.b16 %v853
        %v1170 = vunpack.c.l.b16 %v854
        %v1171 = vunpack.c.h.b16 %v854
        %v1172 = vunpack.c.l.b16 %v855
        %v1173 = vunpack.c.h.b16 %v855
        %v1174 = vunpack.c.l.b16 %v856
        %v1175 = vunpack.c.h.b16 %v856
        %v1176 = vunpack.c.l.b16 %v857
        %v1177 = vunpack.c.h.b16 %v857
        %v1178 = vunpack.c.l.b16 %v858
        %v1179 = vunpack.c.h.b16 %v858
        %v1180 = vunpack.c.l.b16 %v859
        %v1181 = vunpack.c.h.b16 %v859
        %v1182 = vunpack.c.l.b16 %v860
        %v1183 = vunpack.c.h.b16 %v860
        %v1184 = vunpack.c.l.b16 %v861
        %v1185 = vunpack.c.h.b16 %v861
        %v1186 = vunpack.c.l.b16 %v862
        %v1187 = vunpack.c.h.b16 %v862
        %v1188 = vunpack.c.l.b16 %v863
        %v1189 = vunpack.c.h.b16 %v863
        %v1190 = vunpack.c.l.b16 %v864
        %v1191 = vunpack.c.h.b16 %v864
        %v1192 = vunpack.c.l.b16 %v865
        %v1193 = vunpack.c.h.b16 %v865
        %v1194 = vunpack.c.l.b16 %v866
        %v1195 = vunpack.c.h.b16 %v866
        %v1196 = vunpack.c.l.b16 %v867
        %v1197 = vunpack.c.h.b16 %v867
        %v1198 = vunpack.c.l.b16 %v868
        %v1199 = vunpack.c.h.b16 %v868
        %v1200 = vunpack.c.l.b16 %v869
        %v1201 = vunpack.c.h.b16 %v869
        %v1202 = vunpack.c.l.b16 %v870
        %v1203 = vunpack.c.h.b16 %v870
        %v1204 = vunpack.c.l.b16 %v871
        %v1205 = vunpack.c.h.b16 %v871
        %v1206 = vunpack.c.l.b16 %v872
        %v1207 = vunpack.c.h.b16 %v872
        %v1208 = vunpack.c.l.b16 %v873
        %v1209 = vunpack.c.h.b16 %v873
        %v1210 = vunpack.c.l.b16 %v874
        %v1211 = vunpack.c.h.b16 %v874
        %v1212 = vunpack.c.l.b16 %v875
        %v1213 = vunpack.c.h.b16 %v875
        %v1214 = vunpack.c.l.b16 %v876
        %v1215 = vunpack.c.h.b16 %v876
        %v1216 = vunpack.c.l.b16 %v877
        %v1217 = vunpack.c.h.b16 %v877
        %v1218 = vunpack.c.l.b16 %v878
        %v1219 = vunpack.c.h.b16 %v878
        %v1220 = vunpack.c.l.b16 %v879
        %v1221 = vunpack.c.h.b16 %v879
        %v1222 = vunpack.c.l.b16 %v880
        %v1223 = vunpack.c.h.b16 %v880
        %v1224 = vunpack.c.l.b16 %v881
        %v1225 = vunpack.c.h.b16 %v881
        %v1226 = vunpack.c.l.b16 %v882
        %v1227 = vunpack.c.h.b16 %v882
        %v1228 = vunpack.c.l.b16 %v883
        %v1229 = vunpack.c.h.b16 %v883
        %v1230 = vunpack.c.l.b16 %v884
        %v1231 = vunpack.c.h.b16 %v884
        %v1232 = vunpack.c.l.b16 %v885
        %v1233 = vunpack.c.h.b16 %v885
        %v1234 = vunpack.c.l.b16 %v886
        %v1235 = vunpack.c.h.b16 %v886
        %v1236 = vunpack.c.l.b16 %v887
        %v1237 = vunpack.c.h.b16 %v887
        %v1238 = vunpack.c.l.b16 %v888
        %v1239 = vunpack.c.h.b16 %v888
        %v1240 = vunpack.c.l.b16 %v889
        %v1241 = vunpack.c.h.b16 %v889
        %v1242 = vunpack.c.l.b16 %v890
        %v1243 = vunpack.c.h.b16 %v890
        %v1244 = vunpack.c.l.b16 %v891
        %v1245 = vunpack.c.h.b16 %v891
        %v1246 = vunpack.c.l.b16 %v892
        %v1247 = vunpack.c.h.b16 %v892
        %v1248 = vunpack.c.l.b16 %v893
        %v1249 = vunpack.c.h.b16 %v893
        %v1250 = vunpack.c.l.b16 %v894
        %v1251 = vunpack.c.h.b16 %v894
        %v1252 = vunpack.c.l.b16 %v895
        %v1253 = vunpack.c.h.b16 %v895
        %v1254 = vunpack.c.l.b16 %v896
        %v1255 = vunpack.c.h.b16 %v896
        %v1256 = vunpack.c.l.b16 %v897
        %v1257 = vunpack.c.h.b16 %v897
        %v1258 = vunpack.c.l.b16 %v898
        %v1259 = vunpack.c.h.b16 %v898
        %v1260 = vunpack.c.l.b16 %v899
        %v1261 = vunpack.c.h.b16 %v899
        %v1262 = vunpack.c.l.b16 %v900
        %v1263 = vunpack.c.h.b16 %v900
        %v1264 = vunpack.c.l.b16 %v901
        %v1265 = vunpack.c.h.b16 %v901
        %v1266 = vunpack.c.l.b16 %v902
        %v1267 = vunpack.c.h.b16 %v902
        %v1268 = vunpack.c.l.b16 %v903
        %v1269 = vunpack.c.h.b16 %v903
        %v1270 = vunpack.c.l.b16 %v904
        %v1271 = vunpack.c.h.b16 %v904
        %v1272 = vunpack.c.l.b16 %v905
        %v1273 = vunpack.c.h.b16 %v905
        %v1274 = vunpack.c.l.b16 %v906
        %v1275 = vunpack.c.h.b16 %v906
        %v1276 = vunpack.c.l.b16 %v907
        %v1277 = vunpack.c.h.b16 %v907
        %v1278 = vunpack.c.l.b16 %v908
        %v1279 = vunpack.c.h.b16 %v908
        %v1280 = vunpack.c.l.b16 %v909
        %v1281 = vunpack.c.h.b16 %v909
        %v1282 = vunpack.c.l.b16 %v910
        %v1283 = vunpack.c.h.b16 %v910
        %v1284 = vunpack.c.l.b16 %v911
        %v1285 = vunpack.c.h.b16 %v911
        %v1286 = vunpack.c.l.b16 %v912
        %v1287 = vunpack.c.h.b16 %v912
        %v1288 = vunpack.c.l.b16 %v913
        %v1289 = vunpack.c.h.b16 %v913
        %v1290 = vunpack.c.l.b16 %v914
        %v1291 = vunpack.c.h.b16 %v914
        %v1292 = vunpack.c.l.b16 %v915
        %v1293 = vunpack.c.h.b16 %v915
        %v1294 = vunpack.c.l.b16 %v916
        %v1295 = vunpack.c.h.b16 %v916
        %v1296 = vunpack.c.l.b16 %v917
        %v1297 = vunpack.c.h.b16 %v917
        %v1298 = vunpack.c.l.b16 %v918
        %v1299 = vunpack.c.h.b16 %v918
        %v1300 = vunpack.c.l.b16 %v919
        %v1301 = vunpack.c.h.b16 %v919
        %v1302 = vunpack.c.l.b16 %v920
        %v1303 = vunpack.c.h.b16 %v920
        %v1304 = vunpack.c.l.b16 %v921
        %v1305 = vunpack.c.h.b16 %v921
        %v1306 = vunpack.c.l.b16 %v922
        %v1307 = vunpack.c.h.b16 %v922
        %v1308 = vunpack.c.l.b16 %v923
        %v1309 = vunpack.c.h.b16 %v923
        %v1310 = vunpack.c.l.b16 %v924
        %v1311 = vunpack.c.h.b16 %v924
        %v1312 = vunpack.c.l.b16 %v925
        %v1313 = vunpack.c.h.b16 %v925
        %v1314 = vunpack.c.l.b16 %v926
        %v1315 = vunpack.c.h.b16 %v926
        %v1316 = vunpack.c.l.b16 %v927
        %v1317 = vunpack.c.h.b16 %v927
        %v1318 = vunpack.c.l.b16 %v928
        %v1319 = vunpack.c.h.b16 %v928
        %v1320 = vunpack.c.l.b16 %v929
        %v1321 = vunpack.c.h.b16 %v929
        %v1322 = vunpack.c.l.b16 %v930
        %v1323 = vunpack.c.h.b16 %v930
        %v1324 = vunpack.c.l.b16 %v931
        %v1325 = vunpack.c.h.b16 %v931
        %v1326 = vunpack.c.l.b16 %v932
        %v1327 = vunpack.c.h.b16 %v932
        %v1328 = vunpack.c.l.b16 %v933
        %v1329 = vunpack.c.h.b16 %v933
        %v1330 = vunpack.c.l.b16 %v934
        %v1331 = vunpack.c.h.b16 %v934
        %v1332 = vunpack.c.l.b16 %v935
        %v1333 = vunpack.c.h.b16 %v935
        %v1334 = vunpack.c.l.b16 %v936
        %v1335 = vunpack.c.h.b16 %v936
        %v1336 = vunpack.c.l.b16 %v937
        %v1337 = vunpack.c.h.b16 %v937
        %v1338 = vunpack.c.l.b16 %v938
        %v1339 = vunpack.c.h.b16 %v938
        %v1340 = vunpack.c.l.b16 %v939
        %v1341 = vunpack.c.h.b16 %v939
        %v1342 = vunpack.c.l.b16 %v940
        %v1343 = vunpack.c.h.b16 %v940
        %v1344 = vunpack.c.l.b16 %v941
        %v1345 = vunpack.c.h.b16 %v941
        %v1346 = vunpack.c.l.b16 %v942
        %v1347 = vunpack.c.h.b16 %v942
        %v1348 = vunpack.c.l.b16 %v943
        %v1349 = vunpack.c.h.b16 %v943
        %v1350 = vpack.c.b16 %v1098, %v1094
        %v1351 = vpack.c.b16 %v1099, %v1095
        %v1352 = vpack.c.b16 %v1100, %v1096
        %v1353 = vpack.c.b16 %v1101, %v1097
        %v1354 = vpack.c.b16 %v1106, %v1102
        %v1355 = vpack.c.b16 %v1107, %v1103
        %v1356 = vpack.c.b16 %v1108, %v1104
        %v1357 = vpack.c.b16 %v1109, %v1105
        %v1358 = vpack.c.b16 %v1114, %v1110
        %v1359 = vpack.c.b16 %v1115, %v1111
        %v1360 = vpack.c.b16 %v1116, %v1112
        %v1361 = vpack.c.b16 %v1117, %v1113
        %v1362 = vpack.c.b16 %v1122, %v1118
        %v1363 = vpack.c.b16 %v1123, %v1119
        %v1364 = vpack.c.b16 %v1124, %v1120
        %v1365 = vpack.c.b16 %v1125, %v1121
        %v1366 = vpack.c.b16 %v1130, %v1126
        %v1367 = vpack.c.b16 %v1131, %v1127
        %v1368 = vpack.c.b16 %v1132, %v1128
        %v1369 = vpack.c.b16 %v1133, %v1129
        %v1370 = vpack.c.b16 %v1138, %v1134
        %v1371 = vpack.c.b16 %v1139, %v1135
        %v1372 = vpack.c.b16 %v1140, %v1136
        %v1373 = vpack.c.b16 %v1141, %v1137
        %v1374 = vpack.c.b16 %v1146, %v1142
        %v1375 = vpack.c.b16 %v1147, %v1143
        %v1376 = vpack.c.b16 %v1148, %v1144
        %v1377 = vpack.c.b16 %v1149, %v1145
        %v1378 = vpack.c.b16 %v1154, %v1150
        %v1379 = vpack.c.b16 %v1155, %v1151
        %v1380 = vpack.c.b16 %v1156, %v1152
        %v1381 = vpack.c.b16 %v1157, %v1153
        %v1382 = vpack.c.b16 %v1162, %v1158
        %v1383 = vpack.c.b16 %v1163, %v1159
        %v1384 = vpack.c.b16 %v1164, %v1160
        %v1385 = vpack.c.b16 %v1165, %v1161
        %v1386 = vpack.c.b16 %v1170, %v1166
        %v1387 = vpack.c.b16 %v1171, %v1167
        %v1388 = vpack.c.b16 %v1172, %v1168
        %v1389 = vpack.c.b16 %v1173, %v1169
        %v1390 = vpack.c.b16 %v1178, %v1174
        %v1391 = vpack.c.b16 %v1179, %v1175
        %v1392 = vpack.c.b16 %v1180, %v1176
        %v1393 = vpack.c.b16 %v1181, %v1177
        %v1394 = vpack.c.b16 %v1186, %v1182
        %v1395 = vpack.c.b16 %v1187, %v1183
        %v1396 = vpack.c.b16 %v1188, %v1184
        %v1397 = vpack.c.b16 %v1189, %v1185
        %v1398 = vpack.c.b16 %v1194, %v1190
        %v1399 = vpack.c.b16 %v1195, %v1191
        %v1400 = vpack.c.b16 %v1196, %v1192
        %v1401 = vpack.c.b16 %v1197, %v1193
        %v1402 = vpack.c.b16 %v1202, %v1198
        %v1403 = vpack.c.b16 %v1203, %v1199
        %v1404 = vpack.c.b16 %v1204, %v1200
        %v1405 = vpack.c.b16 %v1205, %v1201
        %v1406 = vpack.c.b16 %v1210, %v1206
        %v1407 = vpack.c.b16 %v1211, %v1207
        %v1408 = vpack.c.b16 %v1212, %v1208
        %v1409 = vpack.c.b16 %v1213, %v1209
        %v1410 = vpack.c.b16 %v1218, %v1214
        %v1411 = vpack.c.b16 %v1219, %v1215
        %v1412 = vpack.c.b16 %v1220, %v1216
        %v1413 = vpack.c.b16 %v1221, %v1217
        %v1414 = vpack.c.b16 %v1226, %v1222
        %v1415 = vpack.c.b16 %v1227, %v1223
        %v1416 = vpack.c.b16 %v1228, %v1224
        %v1417 = vpack.c.b16 %v1229, %v1225
        %v1418 = vpack.c.b16 %v1234, %v1230
        %v1419 = vpack.c.b16 %v1235, %v1231
        %v1420 = vpack.c.b16 %v1236, %v1232
        %v1421 = vpack.c.b16 %v1237, %v1233
        %v1422 = vpack.c.b16 %v1242, %v1238
        %v1423 = vpack.c.b16 %v1243, %v1239
        %v1424 = vpack.c.b16 %v1244, %v1240
        %v1425 = vpack.c.b16 %v1245, %v1241
        %v1426 = vpack.c.b16 %v1250, %v1246
        %v1427 = vpack.c.b16 %v1251, %v1247
        %v1428 = vpack.c.b16 %v1252, %v1248
        %v1429 = vpack.c.b16 %v1253, %v1249
        %v1430 = vpack.c.b16 %v1258, %v1254
        %v1431 = vpack.c.b16 %v1259, %v1255
        %v1432 = vpack.c.b16 %v1260, %v1256
        %v1433 = vpack.c.b16 %v1261, %v1257
        %v1434 = vpack.c.b16 %v1266, %v1262
        %v1435 = vpack.c.b16 %v1267, %v1263
        %v1436 = vpack.c.b16 %v1268, %v1264
        %v1437 = vpack.c.b16 %v1269, %v1265
        %v1438 = vpack.c.b16 %v1274, %v1270
        %v1439 = vpack.c.b16 %v1275, %v1271
        %v1440 = vpack.c.b16 %v1276, %v1272
        %v1441 = vpack.c.b16 %v1277, %v1273
        %v1442 = vpack.c.b16 %v1282, %v1278
        %v1443 = vpack.c.b16 %v1283, %v1279
        %v1444 = vpack.c.b16 %v1284, %v1280
        %v1445 = vpack.c.b16 %v1285, %v1281
        %v1446 = vpack.c.b16 %v1290, %v1286
        %v1447 = vpack.c.b16 %v1291, %v1287
        %v1448 = vpack.c.b16 %v1292, %v1288
        %v1449 = vpack.c.b16 %v1293, %v1289
        %v1450 = vpack.c.b16 %v1298, %v1294
        %v1451 = vpack.c.b16 %v1299, %v1295
        %v1452 = vpack.c.b16 %v1300, %v1296
        %v1453 = vpack.c.b16 %v1301, %v1297
        %v1454 = vpack.c.b16 %v1306, %v1302
        %v1455 = vpack.c.b16 %v1307, %v1303
        %v1456 = vpack.c.b16 %v1308, %v1304
        %v1457 = vpack.c.b16 %v1309, %v1305
        %v1458 = vpack.c.b16 %v1314, %v1310
        %v1459 = vpack.c.b16 %v1315, %v1311
        %v1460 = vpack.c.b16 %v1316, %v1312
        %v1461 = vpack.c.b16 %v1317, %v1313
        %v1462 = vpack.c.b16 %v1322, %v1318
        %v1463 = vpack.c.b16 %v1323, %v1319
        %v1464 = vpack.c.b16 %v1324, %v1320
        %v1465 = vpack.c.b16 %v1325, %v1321
        %v1466 = vpack.c.b16 %v1330, %v1326
        %v1467 = vpack.c.b16 %v1331, %v1327
        %v1468 = vpack.c.b16 %v1332, %v1328
        %v1469 = vpack.c.b16 %v1333, %v1329
        %v1470 = vpack.c.b16 %v1338, %v1334
        %v1471 = vpack.c.b16 %v1339, %v1335
        %v1472 = vpack.c.b16 %v1340, %v1336
        %v1473 = vpack.c.b16 %v1341, %v1337
        %v1474 = vpack.c.b16 %v1346, %v1342
        %v1475 = vpack.c.b16 %v1347, %v1343
        %v1476 = vpack.c.b16 %v1348, %v1344
        %v1477 = vpack.c.b16 %v1349, %v1345
        %1606 = vmatprep.subr.bf16.mxu0 %v1379
        %1607 = vmatpush1.bf16.msra.mxu0 %v1378
        %1608 = vmatprep.subr.bf16.mxu0 %v1375
        %1609 = vmatpush1.bf16.msra.mxu0 %v1374
        %1610 = vmatprep.subr.bf16.mxu0 %v1371
        %1611 = vmatpush1.bf16.msra.mxu0 %v1370
        %1612 = vmatprep.subr.bf16.mxu0 %v1367
        %1613 = vmatpush1.bf16.msra.mxu0 %v1366
        %1614 = vmatprep.subr.bf16.mxu0 %v1363
        %1615 = vmatpush1.bf16.msra.mxu0 %v1362
        %1616 = vmatprep.subr.bf16.mxu0 %v1359
        %1617 = vmatpush1.bf16.msra.mxu0 %v1358
        %1618 = vmatprep.subr.bf16.mxu0 %v1355
        %1619 = vmatpush1.bf16.msra.mxu0 %v1354
        %1620 = vmatprep.subr.bf16.mxu0 %v1351
        %1621 = vmatpush1.bf16.msra.mxu0 %v1350
        %1622 = vmatprep.subr.bf16.mxu0 %v1411
        %1623 = vmatpush2.bf16.msra.mxu0 %v1410
        %1624 = vmatprep.subr.bf16.mxu0 %v1407
        %1625 = vmatpush2.bf16.msra.mxu0 %v1406
        %1626 = vmatprep.subr.bf16.mxu0 %v1403
        %1627 = vmatpush2.bf16.msra.mxu0 %v1402
        %1628 = vmatprep.subr.bf16.mxu0 %v1399
        %1629 = vmatpush2.bf16.msra.mxu0 %v1398
        %1630 = vmatprep.subr.bf16.mxu0 %v1395
        %1631 = vmatpush2.bf16.msra.mxu0 %v1394
        %1632 = vmatprep.subr.bf16.mxu0 %v1391
        %1633 = vmatpush2.bf16.msra.mxu0 %v1390
        %1634 = vmatprep.subr.bf16.mxu0 %v1387
        %1635 = vmatpush2.bf16.msra.mxu0 %v1386
        %1636 = vmatprep.subr.bf16.mxu0 %v1383
        %1637 = vmatpush2.bf16.msra.mxu0 %v1382
        %1638 = vmatprep.mubr.bf16.mxu0 %v813
        %1639 = vmatmul.mubr.bf16.gmra.mxu0 %v812
        %v1640 = vpop.f32.mrf.mxu0
        %v1641 = vadd.f32 %v949, %v1640
        %v1642 = vpop.f32.mrf.mxu0
        %v1643 = vadd.f32 %v953, %v1642
        %v1644 = vpop.f32.mrf.mxu0
        %v1645 = vpop.f32.mrf.mxu0
        %1646 = vdwg.mxu0
        %1647 = vmatprep.subr.bf16.mxu0 %v1443
        %1648 = vmatpush1.bf16.msra.mxu0 %v1442
        %1649 = vmatprep.subr.bf16.mxu0 %v1439
        %1650 = vmatpush1.bf16.msra.mxu0 %v1438
        %1651 = vmatprep.subr.bf16.mxu0 %v1435
        %1652 = vmatpush1.bf16.msra.mxu0 %v1434
        %1653 = vmatprep.subr.bf16.mxu0 %v1431
        %1654 = vmatpush1.bf16.msra.mxu0 %v1430
        %1655 = vmatprep.subr.bf16.mxu0 %v1427
        %1656 = vmatpush1.bf16.msra.mxu0 %v1426
        %1657 = vmatprep.subr.bf16.mxu0 %v1423
        %1658 = vmatpush1.bf16.msra.mxu0 %v1422
        %1659 = vmatprep.subr.bf16.mxu0 %v1419
        %1660 = vmatpush1.bf16.msra.mxu0 %v1418
        %1661 = vmatprep.subr.bf16.mxu0 %v1415
        %1662 = vmatpush1.bf16.msra.mxu0 %v1414
        %1663 = vmatprep.subr.bf16.mxu0 %v1475
        %1664 = vmatpush2.bf16.msra.mxu0 %v1474
        %1665 = vmatprep.subr.bf16.mxu0 %v1471
        %1666 = vmatpush2.bf16.msra.mxu0 %v1470
        %1667 = vmatprep.subr.bf16.mxu0 %v1467
        %1668 = vmatpush2.bf16.msra.mxu0 %v1466
        %1669 = vmatprep.subr.bf16.mxu0 %v1463
        %1670 = vmatpush2.bf16.msra.mxu0 %v1462
        %1671 = vmatprep.subr.bf16.mxu0 %v1459
        %1672 = vmatpush2.bf16.msra.mxu0 %v1458
        %1673 = vmatprep.subr.bf16.mxu0 %v1455
        %1674 = vmatpush2.bf16.msra.mxu0 %v1454
        %1675 = vmatprep.subr.bf16.mxu0 %v1451
        %1676 = vmatpush2.bf16.msra.mxu0 %v1450
        %1677 = vmatprep.subr.bf16.mxu0 %v1447
        %1678 = vmatpush2.bf16.msra.mxu0 %v1446
        %1679 = vmatprep.mubr.bf16.mxu0 %v815
        %1680 = vmatmul.mubr.bf16.gmra.mxu0 %v814
        %v1681 = vpop.f32.mrf.mxu0
        %v1682 = vadd.f32 %v1641, %v1681
        %v1683 = vpop.f32.mrf.mxu0
        %v1684 = vadd.f32 %v1643, %v1683
        %v1685 = vpop.f32.mrf.mxu0
        %v1686 = vpop.f32.mrf.mxu0
        %1687 = vdwg.mxu0
        %1688 = vmatprep.subr.bf16.mxu0 %v1381
        %1689 = vmatpush1.bf16.msra.mxu0 %v1380
        %1690 = vmatprep.subr.bf16.mxu0 %v1377
        %1691 = vmatpush1.bf16.msra.mxu0 %v1376
        %1692 = vmatprep.subr.bf16.mxu0 %v1373
        %1693 = vmatpush1.bf16.msra.mxu0 %v1372
        %1694 = vmatprep.subr.bf16.mxu0 %v1369
        %1695 = vmatpush1.bf16.msra.mxu0 %v1368
        %1696 = vmatprep.subr.bf16.mxu0 %v1365
        %1697 = vmatpush1.bf16.msra.mxu0 %v1364
        %1698 = vmatprep.subr.bf16.mxu0 %v1361
        %1699 = vmatpush1.bf16.msra.mxu0 %v1360
        %1700 = vmatprep.subr.bf16.mxu0 %v1357
        %1701 = vmatpush1.bf16.msra.mxu0 %v1356
        %1702 = vmatprep.subr.bf16.mxu0 %v1353
        %1703 = vmatpush1.bf16.msra.mxu0 %v1352
        %1704 = vmatprep.subr.bf16.mxu0 %v1413
        %1705 = vmatpush2.bf16.msra.mxu0 %v1412
        %1706 = vmatprep.subr.bf16.mxu0 %v1409
        %1707 = vmatpush2.bf16.msra.mxu0 %v1408
        %1708 = vmatprep.subr.bf16.mxu0 %v1405
        %1709 = vmatpush2.bf16.msra.mxu0 %v1404
        %1710 = vmatprep.subr.bf16.mxu0 %v1401
        %1711 = vmatpush2.bf16.msra.mxu0 %v1400
        %1712 = vmatprep.subr.bf16.mxu0 %v1397
        %1713 = vmatpush2.bf16.msra.mxu0 %v1396
        %1714 = vmatprep.subr.bf16.mxu0 %v1393
        %1715 = vmatpush2.bf16.msra.mxu0 %v1392
        %1716 = vmatprep.subr.bf16.mxu0 %v1389
        %1717 = vmatpush2.bf16.msra.mxu0 %v1388
        %1718 = vmatprep.subr.bf16.mxu0 %v1385
        %1719 = vmatpush2.bf16.msra.mxu0 %v1384
        %1720 = vmatprep.mubr.bf16.mxu0 %v813
        %1721 = vmatmul.mubr.bf16.gmra.mxu0 %v812
        %v1722 = vpop.f32.mrf.mxu0
        %v1723 = vadd.f32 %v957, %v1722
        %v1724 = vpop.f32.mrf.mxu0
        %v1725 = vadd.f32 %v961, %v1724
        %v1726 = vpop.f32.mrf.mxu0
        %v1727 = vpop.f32.mrf.mxu0
        %1728 = vdwg.mxu0
        %1729 = vmatprep.subr.bf16.mxu0 %v1445
        %1730 = vmatpush1.bf16.msra.mxu0 %v1444
        %1731 = vmatprep.subr.bf16.mxu0 %v1441
        %1732 = vmatpush1.bf16.msra.mxu0 %v1440
        %1733 = vmatprep.subr.bf16.mxu0 %v1437
        %1734 = vmatpush1.bf16.msra.mxu0 %v1436
        %1735 = vmatprep.subr.bf16.mxu0 %v1433
        %1736 = vmatpush1.bf16.msra.mxu0 %v1432
        %1737 = vmatprep.subr.bf16.mxu0 %v1429
        %1738 = vmatpush1.bf16.msra.mxu0 %v1428
        %1739 = vmatprep.subr.bf16.mxu0 %v1425
        %1740 = vmatpush1.bf16.msra.mxu0 %v1424
        %1741 = vmatprep.subr.bf16.mxu0 %v1421
        %1742 = vmatpush1.bf16.msra.mxu0 %v1420
        %1743 = vmatprep.subr.bf16.mxu0 %v1417
        %1744 = vmatpush1.bf16.msra.mxu0 %v1416
        %1745 = vmatprep.subr.bf16.mxu0 %v1477
        %1746 = vmatpush2.bf16.msra.mxu0 %v1476
        %1747 = vmatprep.subr.bf16.mxu0 %v1473
        %1748 = vmatpush2.bf16.msra.mxu0 %v1472
        %1749 = vmatprep.subr.bf16.mxu0 %v1469
        %1750 = vmatpush2.bf16.msra.mxu0 %v1468
        %1751 = vmatprep.subr.bf16.mxu0 %v1465
        %1752 = vmatpush2.bf16.msra.mxu0 %v1464
        %1753 = vmatprep.subr.bf16.mxu0 %v1461
        %1754 = vmatpush2.bf16.msra.mxu0 %v1460
        %1755 = vmatprep.subr.bf16.mxu0 %v1457
        %1756 = vmatpush2.bf16.msra.mxu0 %v1456
        %1757 = vmatprep.subr.bf16.mxu0 %v1453
        %1758 = vmatpush2.bf16.msra.mxu0 %v1452
        %1759 = vmatprep.subr.bf16.mxu0 %v1449
        %1760 = vmatpush2.bf16.msra.mxu0 %v1448
        %1761 = vmatprep.mubr.bf16.mxu0 %v815
        %1762 = vmatmul.mubr.bf16.gmra.mxu0 %v814
        %v1763 = vpop.f32.mrf.mxu0
        %v1764 = vadd.f32 %v1723, %v1763
        %v1765 = vpop.f32.mrf.mxu0
        %v1766 = vadd.f32 %v1725, %v1765
        %v1767 = vpop.f32.mrf.mxu0
        %v1768 = vpop.f32.mrf.mxu0
        %1769 = vdwg.mxu0
        %v1770 = vld [vmem:[#allocation7] sm:$0xff]
        %v1771 = vld [vmem:[#allocation7 + $0x8] sm:$0xff]
        %v1772 = vld [vmem:[#allocation7 + $0x10] sm:$0xff]
        %v1773 = vld [vmem:[#allocation7 + $0x18] sm:$0xff]
        %v1774 = vld [vmem:[#allocation7 + $0x20] sm:$0xff]
        %v1775 = vld [vmem:[#allocation7 + $0x28] sm:$0xff]
        %v1776 = vld [vmem:[#allocation7 + $0x30] sm:$0xff]
        %v1777 = vld [vmem:[#allocation7 + $0x38] sm:$0xff]
        %v1778 = vld [vmem:[#allocation7 + $0x40] sm:$0xff]
        %v1779 = vld [vmem:[#allocation7 + $0x48] sm:$0xff]
        %v1780 = vld [vmem:[#allocation7 + $0x50] sm:$0xff]
        %v1781 = vld [vmem:[#allocation7 + $0x58] sm:$0xff]
        %v1782 = vld [vmem:[#allocation7 + $0x60] sm:$0xff]
        %v1783 = vld [vmem:[#allocation7 + $0x68] sm:$0xff]
        %v1784 = vld [vmem:[#allocation7 + $0x70] sm:$0xff]
        %v1785 = vld [vmem:[#allocation7 + $0x78] sm:$0xff]
        %v1786 = vld [vmem:[#allocation7 + $0x80] sm:$0xff]
        %v1787 = vld [vmem:[#allocation7 + $0x88] sm:$0xff]
        %v1788 = vld [vmem:[#allocation7 + $0x90] sm:$0xff]
        %v1789 = vld [vmem:[#allocation7 + $0x98] sm:$0xff]
        %v1790 = vld [vmem:[#allocation7 + $0xa0] sm:$0xff]
        %v1791 = vld [vmem:[#allocation7 + $0xa8] sm:$0xff]
        %v1792 = vld [vmem:[#allocation7 + $0xb0] sm:$0xff]
        %v1793 = vld [vmem:[#allocation7 + $0xb8] sm:$0xff]
        %v1794 = vld [vmem:[#allocation7 + $0xc0] sm:$0xff]
        %v1795 = vld [vmem:[#allocation7 + $0xc8] sm:$0xff]
        %v1796 = vld [vmem:[#allocation7 + $0xd0] sm:$0xff]
        %v1797 = vld [vmem:[#allocation7 + $0xd8] sm:$0xff]
        %v1798 = vld [vmem:[#allocation7 + $0xe0] sm:$0xff]
        %v1799 = vld [vmem:[#allocation7 + $0xe8] sm:$0xff]
        %v1800 = vld [vmem:[#allocation7 + $0xf0] sm:$0xff]
        %v1801 = vld [vmem:[#allocation7 + $0xf8] sm:$0xff]
        %v1802 = vld [vmem:[#allocation7 + $0x100] sm:$0xff]
        %v1803 = vld [vmem:[#allocation7 + $0x108] sm:$0xff]
        %v1804 = vld [vmem:[#allocation7 + $0x110] sm:$0xff]
        %v1805 = vld [vmem:[#allocation7 + $0x118] sm:$0xff]
        %v1806 = vld [vmem:[#allocation7 + $0x120] sm:$0xff]
        %v1807 = vld [vmem:[#allocation7 + $0x128] sm:$0xff]
        %v1808 = vld [vmem:[#allocation7 + $0x130] sm:$0xff]
        %v1809 = vld [vmem:[#allocation7 + $0x138] sm:$0xff]
        %v1810 = vld [vmem:[#allocation7 + $0x140] sm:$0xff]
        %v1811 = vld [vmem:[#allocation7 + $0x148] sm:$0xff]
        %v1812 = vld [vmem:[#allocation7 + $0x150] sm:$0xff]
        %v1813 = vld [vmem:[#allocation7 + $0x158] sm:$0xff]
        %v1814 = vld [vmem:[#allocation7 + $0x160] sm:$0xff]
        %v1815 = vld [vmem:[#allocation7 + $0x168] sm:$0xff]
        %v1816 = vld [vmem:[#allocation7 + $0x170] sm:$0xff]
        %v1817 = vld [vmem:[#allocation7 + $0x178] sm:$0xff]
        %v1818 = vld [vmem:[#allocation7 + $0x180] sm:$0xff]
        %v1819 = vld [vmem:[#allocation7 + $0x188] sm:$0xff]
        %v1820 = vld [vmem:[#allocation7 + $0x190] sm:$0xff]
        %v1821 = vld [vmem:[#allocation7 + $0x198] sm:$0xff]
        %v1822 = vld [vmem:[#allocation7 + $0x1a0] sm:$0xff]
        %v1823 = vld [vmem:[#allocation7 + $0x1a8] sm:$0xff]
        %v1824 = vld [vmem:[#allocation7 + $0x1b0] sm:$0xff]
        %v1825 = vld [vmem:[#allocation7 + $0x1b8] sm:$0xff]
        %v1826 = vld [vmem:[#allocation7 + $0x1c0] sm:$0xff]
        %v1827 = vld [vmem:[#allocation7 + $0x1c8] sm:$0xff]
        %v1828 = vld [vmem:[#allocation7 + $0x1d0] sm:$0xff]
        %v1829 = vld [vmem:[#allocation7 + $0x1d8] sm:$0xff]
        %v1830 = vld [vmem:[#allocation7 + $0x1e0] sm:$0xff]
        %v1831 = vld [vmem:[#allocation7 + $0x1e8] sm:$0xff]
        %v1832 = vld [vmem:[#allocation7 + $0x1f0] sm:$0xff]
        %v1833 = vld [vmem:[#allocation7 + $0x1f8] sm:$0xff]
        %v1834 = vld [vmem:[#allocation7 + $0x200] sm:$0xff]
        %v1835 = vld [vmem:[#allocation7 + $0x208] sm:$0xff]
        %v1836 = vld [vmem:[#allocation7 + $0x210] sm:$0xff]
        %v1837 = vld [vmem:[#allocation7 + $0x218] sm:$0xff]
        %v1838 = vld [vmem:[#allocation7 + $0x220] sm:$0xff]
        %v1839 = vld [vmem:[#allocation7 + $0x228] sm:$0xff]
        %v1840 = vld [vmem:[#allocation7 + $0x230] sm:$0xff]
        %v1841 = vld [vmem:[#allocation7 + $0x238] sm:$0xff]
        %v1842 = vld [vmem:[#allocation7 + $0x240] sm:$0xff]
        %v1843 = vld [vmem:[#allocation7 + $0x248] sm:$0xff]
        %v1844 = vld [vmem:[#allocation7 + $0x250] sm:$0xff]
        %v1845 = vld [vmem:[#allocation7 + $0x258] sm:$0xff]
        %v1846 = vld [vmem:[#allocation7 + $0x260] sm:$0xff]
        %v1847 = vld [vmem:[#allocation7 + $0x268] sm:$0xff]
        %v1848 = vld [vmem:[#allocation7 + $0x270] sm:$0xff]
        %v1849 = vld [vmem:[#allocation7 + $0x278] sm:$0xff]
        %v1850 = vld [vmem:[#allocation7 + $0x280] sm:$0xff]
        %v1851 = vld [vmem:[#allocation7 + $0x288] sm:$0xff]
        %v1852 = vld [vmem:[#allocation7 + $0x290] sm:$0xff]
        %v1853 = vld [vmem:[#allocation7 + $0x298] sm:$0xff]
        %v1854 = vld [vmem:[#allocation7 + $0x2a0] sm:$0xff]
        %v1855 = vld [vmem:[#allocation7 + $0x2a8] sm:$0xff]
        %v1856 = vld [vmem:[#allocation7 + $0x2b0] sm:$0xff]
        %v1857 = vld [vmem:[#allocation7 + $0x2b8] sm:$0xff]
        %v1858 = vld [vmem:[#allocation7 + $0x2c0] sm:$0xff]
        %v1859 = vld [vmem:[#allocation7 + $0x2c8] sm:$0xff]
        %v1860 = vld [vmem:[#allocation7 + $0x2d0] sm:$0xff]
        %v1861 = vld [vmem:[#allocation7 + $0x2d8] sm:$0xff]
        %v1862 = vld [vmem:[#allocation7 + $0x2e0] sm:$0xff]
        %v1863 = vld [vmem:[#allocation7 + $0x2e8] sm:$0xff]
        %v1864 = vld [vmem:[#allocation7 + $0x2f0] sm:$0xff]
        %v1865 = vld [vmem:[#allocation7 + $0x2f8] sm:$0xff]
        %v1866 = vld [vmem:[#allocation7 + $0x300] sm:$0xff]
        %v1867 = vld [vmem:[#allocation7 + $0x308] sm:$0xff]
        %v1868 = vld [vmem:[#allocation7 + $0x310] sm:$0xff]
        %v1869 = vld [vmem:[#allocation7 + $0x318] sm:$0xff]
        %v1870 = vld [vmem:[#allocation7 + $0x320] sm:$0xff]
        %v1871 = vld [vmem:[#allocation7 + $0x328] sm:$0xff]
        %v1872 = vld [vmem:[#allocation7 + $0x330] sm:$0xff]
        %v1873 = vld [vmem:[#allocation7 + $0x338] sm:$0xff]
        %v1874 = vld [vmem:[#allocation7 + $0x340] sm:$0xff]
        %v1875 = vld [vmem:[#allocation7 + $0x348] sm:$0xff]
        %v1876 = vld [vmem:[#allocation7 + $0x350] sm:$0xff]
        %v1877 = vld [vmem:[#allocation7 + $0x358] sm:$0xff]
        %v1878 = vld [vmem:[#allocation7 + $0x360] sm:$0xff]
        %v1879 = vld [vmem:[#allocation7 + $0x368] sm:$0xff]
        %v1880 = vld [vmem:[#allocation7 + $0x370] sm:$0xff]
        %v1881 = vld [vmem:[#allocation7 + $0x378] sm:$0xff]
        %v1882 = vld [vmem:[#allocation7 + $0x380] sm:$0xff]
        %v1883 = vld [vmem:[#allocation7 + $0x388] sm:$0xff]
        %v1884 = vld [vmem:[#allocation7 + $0x390] sm:$0xff]
        %v1885 = vld [vmem:[#allocation7 + $0x398] sm:$0xff]
        %v1886 = vld [vmem:[#allocation7 + $0x3a0] sm:$0xff]
        %v1887 = vld [vmem:[#allocation7 + $0x3a8] sm:$0xff]
        %v1888 = vld [vmem:[#allocation7 + $0x3b0] sm:$0xff]
        %v1889 = vld [vmem:[#allocation7 + $0x3b8] sm:$0xff]
        %v1890 = vld [vmem:[#allocation7 + $0x3c0] sm:$0xff]
        %v1891 = vld [vmem:[#allocation7 + $0x3c8] sm:$0xff]
        %v1892 = vld [vmem:[#allocation7 + $0x3d0] sm:$0xff]
        %v1893 = vld [vmem:[#allocation7 + $0x3d8] sm:$0xff]
        %v1894 = vld [vmem:[#allocation7 + $0x3e0] sm:$0xff]
        %v1895 = vld [vmem:[#allocation7 + $0x3e8] sm:$0xff]
        %v1896 = vld [vmem:[#allocation7 + $0x3f0] sm:$0xff]
        %v1897 = vld [vmem:[#allocation7 + $0x3f8] sm:$0xff]
        %v1898 = vld [vmem:[#allocation8] sm:$0xf]
        %v1900 = vlaneseq
        %v1901 = vshrl.u32 %v1900, 7
        %v1902 = vsub.s32 0, %v1901
        %v1903 = vrot.slane %v1898, %v1902
        %v1904 = vlaneseq
        %v1905 = vshrl.u32 %v1904, 7
        %v1906 = vsub.s32 1, %v1905
        %v1907 = vrot.slane %v1898, %v1906
        %v1908 = vlaneseq
        %v1909 = vshrl.u32 %v1908, 7
        %v1910 = vsub.s32 2, %v1909
        %v1911 = vrot.slane %v1898, %v1910
        %v1912 = vlaneseq
        %v1913 = vshrl.u32 %v1912, 7
        %v1914 = vsub.s32 3, %v1913
        %v1915 = vrot.slane %v1898, %v1914
        %v2048 = vunpack.c.l.b16 %v1770
        %v2049 = vunpack.c.h.b16 %v1770
        %v2050 = vunpack.c.l.b16 %v1771
        %v2051 = vunpack.c.h.b16 %v1771
        %v2052 = vunpack.c.l.b16 %v1772
        %v2053 = vunpack.c.h.b16 %v1772
        %v2054 = vunpack.c.l.b16 %v1773
        %v2055 = vunpack.c.h.b16 %v1773
        %v2056 = vunpack.c.l.b16 %v1774
        %v2057 = vunpack.c.h.b16 %v1774
        %v2058 = vunpack.c.l.b16 %v1775
        %v2059 = vunpack.c.h.b16 %v1775
        %v2060 = vunpack.c.l.b16 %v1776
        %v2061 = vunpack.c.h.b16 %v1776
        %v2062 = vunpack.c.l.b16 %v1777
        %v2063 = vunpack.c.h.b16 %v1777
        %v2064 = vunpack.c.l.b16 %v1778
        %v2065 = vunpack.c.h.b16 %v1778
        %v2066 = vunpack.c.l.b16 %v1779
        %v2067 = vunpack.c.h.b16 %v1779
        %v2068 = vunpack.c.l.b16 %v1780
        %v2069 = vunpack.c.h.b16 %v1780
        %v2070 = vunpack.c.l.b16 %v1781
        %v2071 = vunpack.c.h.b16 %v1781
        %v2072 = vunpack.c.l.b16 %v1782
        %v2073 = vunpack.c.h.b16 %v1782
        %v2074 = vunpack.c.l.b16 %v1783
        %v2075 = vunpack.c.h.b16 %v1783
        %v2076 = vunpack.c.l.b16 %v1784
        %v2077 = vunpack.c.h.b16 %v1784
        %v2078 = vunpack.c.l.b16 %v1785
        %v2079 = vunpack.c.h.b16 %v1785
        %v2080 = vunpack.c.l.b16 %v1786
        %v2081 = vunpack.c.h.b16 %v1786
        %v2082 = vunpack.c.l.b16 %v1787
        %v2083 = vunpack.c.h.b16 %v1787
        %v2084 = vunpack.c.l.b16 %v1788
        %v2085 = vunpack.c.h.b16 %v1788
        %v2086 = vunpack.c.l.b16 %v1789
        %v2087 = vunpack.c.h.b16 %v1789
        %v2088 = vunpack.c.l.b16 %v1790
        %v2089 = vunpack.c.h.b16 %v1790
        %v2090 = vunpack.c.l.b16 %v1791
        %v2091 = vunpack.c.h.b16 %v1791
        %v2092 = vunpack.c.l.b16 %v1792
        %v2093 = vunpack.c.h.b16 %v1792
        %v2094 = vunpack.c.l.b16 %v1793
        %v2095 = vunpack.c.h.b16 %v1793
        %v2096 = vunpack.c.l.b16 %v1794
        %v2097 = vunpack.c.h.b16 %v1794
        %v2098 = vunpack.c.l.b16 %v1795
        %v2099 = vunpack.c.h.b16 %v1795
        %v2100 = vunpack.c.l.b16 %v1796
        %v2101 = vunpack.c.h.b16 %v1796
        %v2102 = vunpack.c.l.b16 %v1797
        %v2103 = vunpack.c.h.b16 %v1797
        %v2104 = vunpack.c.l.b16 %v1798
        %v2105 = vunpack.c.h.b16 %v1798
        %v2106 = vunpack.c.l.b16 %v1799
        %v2107 = vunpack.c.h.b16 %v1799
        %v2108 = vunpack.c.l.b16 %v1800
        %v2109 = vunpack.c.h.b16 %v1800
        %v2110 = vunpack.c.l.b16 %v1801
        %v2111 = vunpack.c.h.b16 %v1801
        %v2112 = vunpack.c.l.b16 %v1802
        %v2113 = vunpack.c.h.b16 %v1802
        %v2114 = vunpack.c.l.b16 %v1803
        %v2115 = vunpack.c.h.b16 %v1803
        %v2116 = vunpack.c.l.b16 %v1804
        %v2117 = vunpack.c.h.b16 %v1804
        %v2118 = vunpack.c.l.b16 %v1805
        %v2119 = vunpack.c.h.b16 %v1805
        %v2120 = vunpack.c.l.b16 %v1806
        %v2121 = vunpack.c.h.b16 %v1806
        %v2122 = vunpack.c.l.b16 %v1807
        %v2123 = vunpack.c.h.b16 %v1807
        %v2124 = vunpack.c.l.b16 %v1808
        %v2125 = vunpack.c.h.b16 %v1808
        %v2126 = vunpack.c.l.b16 %v1809
        %v2127 = vunpack.c.h.b16 %v1809
        %v2128 = vunpack.c.l.b16 %v1810
        %v2129 = vunpack.c.h.b16 %v1810
        %v2130 = vunpack.c.l.b16 %v1811
        %v2131 = vunpack.c.h.b16 %v1811
        %v2132 = vunpack.c.l.b16 %v1812
        %v2133 = vunpack.c.h.b16 %v1812
        %v2134 = vunpack.c.l.b16 %v1813
        %v2135 = vunpack.c.h.b16 %v1813
        %v2136 = vunpack.c.l.b16 %v1814
        %v2137 = vunpack.c.h.b16 %v1814
        %v2138 = vunpack.c.l.b16 %v1815
        %v2139 = vunpack.c.h.b16 %v1815
        %v2140 = vunpack.c.l.b16 %v1816
        %v2141 = vunpack.c.h.b16 %v1816
        %v2142 = vunpack.c.l.b16 %v1817
        %v2143 = vunpack.c.h.b16 %v1817
        %v2144 = vunpack.c.l.b16 %v1818
        %v2145 = vunpack.c.h.b16 %v1818
        %v2146 = vunpack.c.l.b16 %v1819
        %v2147 = vunpack.c.h.b16 %v1819
        %v2148 = vunpack.c.l.b16 %v1820
        %v2149 = vunpack.c.h.b16 %v1820
        %v2150 = vunpack.c.l.b16 %v1821
        %v2151 = vunpack.c.h.b16 %v1821
        %v2152 = vunpack.c.l.b16 %v1822
        %v2153 = vunpack.c.h.b16 %v1822
        %v2154 = vunpack.c.l.b16 %v1823
        %v2155 = vunpack.c.h.b16 %v1823
        %v2156 = vunpack.c.l.b16 %v1824
        %v2157 = vunpack.c.h.b16 %v1824
        %v2158 = vunpack.c.l.b16 %v1825
        %v2159 = vunpack.c.h.b16 %v1825
        %v2160 = vunpack.c.l.b16 %v1826
        %v2161 = vunpack.c.h.b16 %v1826
        %v2162 = vunpack.c.l.b16 %v1827
        %v2163 = vunpack.c.h.b16 %v1827
        %v2164 = vunpack.c.l.b16 %v1828
        %v2165 = vunpack.c.h.b16 %v1828
        %v2166 = vunpack.c.l.b16 %v1829
        %v2167 = vunpack.c.h.b16 %v1829
        %v2168 = vunpack.c.l.b16 %v1830
        %v2169 = vunpack.c.h.b16 %v1830
        %v2170 = vunpack.c.l.b16 %v1831
        %v2171 = vunpack.c.h.b16 %v1831
        %v2172 = vunpack.c.l.b16 %v1832
        %v2173 = vunpack.c.h.b16 %v1832
        %v2174 = vunpack.c.l.b16 %v1833
        %v2175 = vunpack.c.h.b16 %v1833
        %v2176 = vunpack.c.l.b16 %v1834
        %v2177 = vunpack.c.h.b16 %v1834
        %v2178 = vunpack.c.l.b16 %v1835
        %v2179 = vunpack.c.h.b16 %v1835
        %v2180 = vunpack.c.l.b16 %v1836
        %v2181 = vunpack.c.h.b16 %v1836
        %v2182 = vunpack.c.l.b16 %v1837
        %v2183 = vunpack.c.h.b16 %v1837
        %v2184 = vunpack.c.l.b16 %v1838
        %v2185 = vunpack.c.h.b16 %v1838
        %v2186 = vunpack.c.l.b16 %v1839
        %v2187 = vunpack.c.h.b16 %v1839
        %v2188 = vunpack.c.l.b16 %v1840
        %v2189 = vunpack.c.h.b16 %v1840
        %v2190 = vunpack.c.l.b16 %v1841
        %v2191 = vunpack.c.h.b16 %v1841
        %v2192 = vunpack.c.l.b16 %v1842
        %v2193 = vunpack.c.h.b16 %v1842
        %v2194 = vunpack.c.l.b16 %v1843
        %v2195 = vunpack.c.h.b16 %v1843
        %v2196 = vunpack.c.l.b16 %v1844
        %v2197 = vunpack.c.h.b16 %v1844
        %v2198 = vunpack.c.l.b16 %v1845
        %v2199 = vunpack.c.h.b16 %v1845
        %v2200 = vunpack.c.l.b16 %v1846
        %v2201 = vunpack.c.h.b16 %v1846
        %v2202 = vunpack.c.l.b16 %v1847
        %v2203 = vunpack.c.h.b16 %v1847
        %v2204 = vunpack.c.l.b16 %v1848
        %v2205 = vunpack.c.h.b16 %v1848
        %v2206 = vunpack.c.l.b16 %v1849
        %v2207 = vunpack.c.h.b16 %v1849
        %v2208 = vunpack.c.l.b16 %v1850
        %v2209 = vunpack.c.h.b16 %v1850
        %v2210 = vunpack.c.l.b16 %v1851
        %v2211 = vunpack.c.h.b16 %v1851
        %v2212 = vunpack.c.l.b16 %v1852
        %v2213 = vunpack.c.h.b16 %v1852
        %v2214 = vunpack.c.l.b16 %v1853
        %v2215 = vunpack.c.h.b16 %v1853
        %v2216 = vunpack.c.l.b16 %v1854
        %v2217 = vunpack.c.h.b16 %v1854
        %v2218 = vunpack.c.l.b16 %v1855
        %v2219 = vunpack.c.h.b16 %v1855
        %v2220 = vunpack.c.l.b16 %v1856
        %v2221 = vunpack.c.h.b16 %v1856
        %v2222 = vunpack.c.l.b16 %v1857
        %v2223 = vunpack.c.h.b16 %v1857
        %v2224 = vunpack.c.l.b16 %v1858
        %v2225 = vunpack.c.h.b16 %v1858
        %v2226 = vunpack.c.l.b16 %v1859
        %v2227 = vunpack.c.h.b16 %v1859
        %v2228 = vunpack.c.l.b16 %v1860
        %v2229 = vunpack.c.h.b16 %v1860
        %v2230 = vunpack.c.l.b16 %v1861
        %v2231 = vunpack.c.h.b16 %v1861
        %v2232 = vunpack.c.l.b16 %v1862
        %v2233 = vunpack.c.h.b16 %v1862
        %v2234 = vunpack.c.l.b16 %v1863
        %v2235 = vunpack.c.h.b16 %v1863
        %v2236 = vunpack.c.l.b16 %v1864
        %v2237 = vunpack.c.h.b16 %v1864
        %v2238 = vunpack.c.l.b16 %v1865
        %v2239 = vunpack.c.h.b16 %v1865
        %v2240 = vunpack.c.l.b16 %v1866
        %v2241 = vunpack.c.h.b16 %v1866
        %v2242 = vunpack.c.l.b16 %v1867
        %v2243 = vunpack.c.h.b16 %v1867
        %v2244 = vunpack.c.l.b16 %v1868
        %v2245 = vunpack.c.h.b16 %v1868
        %v2246 = vunpack.c.l.b16 %v1869
        %v2247 = vunpack.c.h.b16 %v1869
        %v2248 = vunpack.c.l.b16 %v1870
        %v2249 = vunpack.c.h.b16 %v1870
        %v2250 = vunpack.c.l.b16 %v1871
        %v2251 = vunpack.c.h.b16 %v1871
        %v2252 = vunpack.c.l.b16 %v1872
        %v2253 = vunpack.c.h.b16 %v1872
        %v2254 = vunpack.c.l.b16 %v1873
        %v2255 = vunpack.c.h.b16 %v1873
        %v2256 = vunpack.c.l.b16 %v1874
        %v2257 = vunpack.c.h.b16 %v1874
        %v2258 = vunpack.c.l.b16 %v1875
        %v2259 = vunpack.c.h.b16 %v1875
        %v2260 = vunpack.c.l.b16 %v1876
        %v2261 = vunpack.c.h.b16 %v1876
        %v2262 = vunpack.c.l.b16 %v1877
        %v2263 = vunpack.c.h.b16 %v1877
        %v2264 = vunpack.c.l.b16 %v1878
        %v2265 = vunpack.c.h.b16 %v1878
        %v2266 = vunpack.c.l.b16 %v1879
        %v2267 = vunpack.c.h.b16 %v1879
        %v2268 = vunpack.c.l.b16 %v1880
        %v2269 = vunpack.c.h.b16 %v1880
        %v2270 = vunpack.c.l.b16 %v1881
        %v2271 = vunpack.c.h.b16 %v1881
        %v2272 = vunpack.c.l.b16 %v1882
        %v2273 = vunpack.c.h.b16 %v1882
        %v2274 = vunpack.c.l.b16 %v1883
        %v2275 = vunpack.c.h.b16 %v1883
        %v2276 = vunpack.c.l.b16 %v1884
        %v2277 = vunpack.c.h.b16 %v1884
        %v2278 = vunpack.c.l.b16 %v1885
        %v2279 = vunpack.c.h.b16 %v1885
        %v2280 = vunpack.c.l.b16 %v1886
        %v2281 = vunpack.c.h.b16 %v1886
        %v2282 = vunpack.c.l.b16 %v1887
        %v2283 = vunpack.c.h.b16 %v1887
        %v2284 = vunpack.c.l.b16 %v1888
        %v2285 = vunpack.c.h.b16 %v1888
        %v2286 = vunpack.c.l.b16 %v1889
        %v2287 = vunpack.c.h.b16 %v1889
        %v2288 = vunpack.c.l.b16 %v1890
        %v2289 = vunpack.c.h.b16 %v1890
        %v2290 = vunpack.c.l.b16 %v1891
        %v2291 = vunpack.c.h.b16 %v1891
        %v2292 = vunpack.c.l.b16 %v1892
        %v2293 = vunpack.c.h.b16 %v1892
        %v2294 = vunpack.c.l.b16 %v1893
        %v2295 = vunpack.c.h.b16 %v1893
        %v2296 = vunpack.c.l.b16 %v1894
        %v2297 = vunpack.c.h.b16 %v1894
        %v2298 = vunpack.c.l.b16 %v1895
        %v2299 = vunpack.c.h.b16 %v1895
        %v2300 = vunpack.c.l.b16 %v1896
        %v2301 = vunpack.c.h.b16 %v1896
        %v2302 = vunpack.c.l.b16 %v1897
        %v2303 = vunpack.c.h.b16 %v1897
        %v2304 = vpack.c.b16 %v2052, %v2048
        %v2305 = vpack.c.b16 %v2053, %v2049
        %v2306 = vpack.c.b16 %v2054, %v2050
        %v2307 = vpack.c.b16 %v2055, %v2051
        %v2308 = vpack.c.b16 %v2060, %v2056
        %v2309 = vpack.c.b16 %v2061, %v2057
        %v2310 = vpack.c.b16 %v2062, %v2058
        %v2311 = vpack.c.b16 %v2063, %v2059
        %v2312 = vpack.c.b16 %v2068, %v2064
        %v2313 = vpack.c.b16 %v2069, %v2065
        %v2314 = vpack.c.b16 %v2070, %v2066
        %v2315 = vpack.c.b16 %v2071, %v2067
        %v2316 = vpack.c.b16 %v2076, %v2072
        %v2317 = vpack.c.b16 %v2077, %v2073
        %v2318 = vpack.c.b16 %v2078, %v2074
        %v2319 = vpack.c.b16 %v2079, %v2075
        %v2320 = vpack.c.b16 %v2084, %v2080
        %v2321 = vpack.c.b16 %v2085, %v2081
        %v2322 = vpack.c.b16 %v2086, %v2082
        %v2323 = vpack.c.b16 %v2087, %v2083
        %v2324 = vpack.c.b16 %v2092, %v2088
        %v2325 = vpack.c.b16 %v2093, %v2089
        %v2326 = vpack.c.b16 %v2094, %v2090
        %v2327 = vpack.c.b16 %v2095, %v2091
        %v2328 = vpack.c.b16 %v2100, %v2096
        %v2329 = vpack.c.b16 %v2101, %v2097
        %v2330 = vpack.c.b16 %v2102, %v2098
        %v2331 = vpack.c.b16 %v2103, %v2099
        %v2332 = vpack.c.b16 %v2108, %v2104
        %v2333 = vpack.c.b16 %v2109, %v2105
        %v2334 = vpack.c.b16 %v2110, %v2106
        %v2335 = vpack.c.b16 %v2111, %v2107
        %v2336 = vpack.c.b16 %v2116, %v2112
        %v2337 = vpack.c.b16 %v2117, %v2113
        %v2338 = vpack.c.b16 %v2118, %v2114
        %v2339 = vpack.c.b16 %v2119, %v2115
        %v2340 = vpack.c.b16 %v2124, %v2120
        %v2341 = vpack.c.b16 %v2125, %v2121
        %v2342 = vpack.c.b16 %v2126, %v2122
        %v2343 = vpack.c.b16 %v2127, %v2123
        %v2344 = vpack.c.b16 %v2132, %v2128
        %v2345 = vpack.c.b16 %v2133, %v2129
        %v2346 = vpack.c.b16 %v2134, %v2130
        %v2347 = vpack.c.b16 %v2135, %v2131
        %v2348 = vpack.c.b16 %v2140, %v2136
        %v2349 = vpack.c.b16 %v2141, %v2137
        %v2350 = vpack.c.b16 %v2142, %v2138
        %v2351 = vpack.c.b16 %v2143, %v2139
        %v2352 = vpack.c.b16 %v2148, %v2144
        %v2353 = vpack.c.b16 %v2149, %v2145
        %v2354 = vpack.c.b16 %v2150, %v2146
        %v2355 = vpack.c.b16 %v2151, %v2147
        %v2356 = vpack.c.b16 %v2156, %v2152
        %v2357 = vpack.c.b16 %v2157, %v2153
        %v2358 = vpack.c.b16 %v2158, %v2154
        %v2359 = vpack.c.b16 %v2159, %v2155
        %v2360 = vpack.c.b16 %v2164, %v2160
        %v2361 = vpack.c.b16 %v2165, %v2161
        %v2362 = vpack.c.b16 %v2166, %v2162
        %v2363 = vpack.c.b16 %v2167, %v2163
        %v2364 = vpack.c.b16 %v2172, %v2168
        %v2365 = vpack.c.b16 %v2173, %v2169
        %v2366 = vpack.c.b16 %v2174, %v2170
        %v2367 = vpack.c.b16 %v2175, %v2171
        %v2368 = vpack.c.b16 %v2180, %v2176
        %v2369 = vpack.c.b16 %v2181, %v2177
        %v2370 = vpack.c.b16 %v2182, %v2178
        %v2371 = vpack.c.b16 %v2183, %v2179
        %v2372 = vpack.c.b16 %v2188, %v2184
        %v2373 = vpack.c.b16 %v2189, %v2185
        %v2374 = vpack.c.b16 %v2190, %v2186
        %v2375 = vpack.c.b16 %v2191, %v2187
        %v2376 = vpack.c.b16 %v2196, %v2192
        %v2377 = vpack.c.b16 %v2197, %v2193
        %v2378 = vpack.c.b16 %v2198, %v2194
        %v2379 = vpack.c.b16 %v2199, %v2195
        %v2380 = vpack.c.b16 %v2204, %v2200
        %v2381 = vpack.c.b16 %v2205, %v2201
        %v2382 = vpack.c.b16 %v2206, %v2202
        %v2383 = vpack.c.b16 %v2207, %v2203
        %v2384 = vpack.c.b16 %v2212, %v2208
        %v2385 = vpack.c.b16 %v2213, %v2209
        %v2386 = vpack.c.b16 %v2214, %v2210
        %v2387 = vpack.c.b16 %v2215, %v2211
        %v2388 = vpack.c.b16 %v2220, %v2216
        %v2389 = vpack.c.b16 %v2221, %v2217
        %v2390 = vpack.c.b16 %v2222, %v2218
        %v2391 = vpack.c.b16 %v2223, %v2219
        %v2392 = vpack.c.b16 %v2228, %v2224
        %v2393 = vpack.c.b16 %v2229, %v2225
        %v2394 = vpack.c.b16 %v2230, %v2226
        %v2395 = vpack.c.b16 %v2231, %v2227
        %v2396 = vpack.c.b16 %v2236, %v2232
        %v2397 = vpack.c.b16 %v2237, %v2233
        %v2398 = vpack.c.b16 %v2238, %v2234
        %v2399 = vpack.c.b16 %v2239, %v2235
        %v2400 = vpack.c.b16 %v2244, %v2240
        %v2401 = vpack.c.b16 %v2245, %v2241
        %v2402 = vpack.c.b16 %v2246, %v2242
        %v2403 = vpack.c.b16 %v2247, %v2243
        %v2404 = vpack.c.b16 %v2252, %v2248
        %v2405 = vpack.c.b16 %v2253, %v2249
        %v2406 = vpack.c.b16 %v2254, %v2250
        %v2407 = vpack.c.b16 %v2255, %v2251
        %v2408 = vpack.c.b16 %v2260, %v2256
        %v2409 = vpack.c.b16 %v2261, %v2257
        %v2410 = vpack.c.b16 %v2262, %v2258
        %v2411 = vpack.c.b16 %v2263, %v2259
        %v2412 = vpack.c.b16 %v2268, %v2264
        %v2413 = vpack.c.b16 %v2269, %v2265
        %v2414 = vpack.c.b16 %v2270, %v2266
        %v2415 = vpack.c.b16 %v2271, %v2267
        %v2416 = vpack.c.b16 %v2276, %v2272
        %v2417 = vpack.c.b16 %v2277, %v2273
        %v2418 = vpack.c.b16 %v2278, %v2274
        %v2419 = vpack.c.b16 %v2279, %v2275
        %v2420 = vpack.c.b16 %v2284, %v2280
        %v2421 = vpack.c.b16 %v2285, %v2281
        %v2422 = vpack.c.b16 %v2286, %v2282
        %v2423 = vpack.c.b16 %v2287, %v2283
        %v2424 = vpack.c.b16 %v2292, %v2288
        %v2425 = vpack.c.b16 %v2293, %v2289
        %v2426 = vpack.c.b16 %v2294, %v2290
        %v2427 = vpack.c.b16 %v2295, %v2291
        %v2428 = vpack.c.b16 %v2300, %v2296
        %v2429 = vpack.c.b16 %v2301, %v2297
        %v2430 = vpack.c.b16 %v2302, %v2298
        %v2431 = vpack.c.b16 %v2303, %v2299
        %2560 = vmatprep.subr.bf16.mxu0 %v2333
        %2561 = vmatpush1.bf16.msra.mxu0 %v2332
        %2562 = vmatprep.subr.bf16.mxu0 %v2329
        %2563 = vmatpush1.bf16.msra.mxu0 %v2328
        %2564 = vmatprep.subr.bf16.mxu0 %v2325
        %2565 = vmatpush1.bf16.msra.mxu0 %v2324
        %2566 = vmatprep.subr.bf16.mxu0 %v2321
        %2567 = vmatpush1.bf16.msra.mxu0 %v2320
        %2568 = vmatprep.subr.bf16.mxu0 %v2317
        %2569 = vmatpush1.bf16.msra.mxu0 %v2316
        %2570 = vmatprep.subr.bf16.mxu0 %v2313
        %2571 = vmatpush1.bf16.msra.mxu0 %v2312
        %2572 = vmatprep.subr.bf16.mxu0 %v2309
        %2573 = vmatpush1.bf16.msra.mxu0 %v2308
        %2574 = vmatprep.subr.bf16.mxu0 %v2305
        %2575 = vmatpush1.bf16.msra.mxu0 %v2304
        %2576 = vmatprep.subr.bf16.mxu0 %v2365
        %2577 = vmatpush2.bf16.msra.mxu0 %v2364
        %2578 = vmatprep.subr.bf16.mxu0 %v2361
        %2579 = vmatpush2.bf16.msra.mxu0 %v2360
        %2580 = vmatprep.subr.bf16.mxu0 %v2357
        %2581 = vmatpush2.bf16.msra.mxu0 %v2356
        %2582 = vmatprep.subr.bf16.mxu0 %v2353
        %2583 = vmatpush2.bf16.msra.mxu0 %v2352
        %2584 = vmatprep.subr.bf16.mxu0 %v2349
        %2585 = vmatpush2.bf16.msra.mxu0 %v2348
        %2586 = vmatprep.subr.bf16.mxu0 %v2345
        %2587 = vmatpush2.bf16.msra.mxu0 %v2344
        %2588 = vmatprep.subr.bf16.mxu0 %v2341
        %2589 = vmatpush2.bf16.msra.mxu0 %v2340
        %2590 = vmatprep.subr.bf16.mxu0 %v2337
        %2591 = vmatpush2.bf16.msra.mxu0 %v2336
        %2592 = vmatprep.mubr.bf16.mxu0 %v813
        %2593 = vmatmul.mubr.bf16.gmra.mxu0 %v812
        %v2594 = vpop.f32.mrf.mxu0
        %v2595 = vadd.f32 %v1903, %v2594
        %v2596 = vpop.f32.mrf.mxu0
        %v2597 = vadd.f32 %v1907, %v2596
        %v2598 = vpop.f32.mrf.mxu0
        %v2599 = vpop.f32.mrf.mxu0
        %2600 = vdwg.mxu0
        %2601 = vmatprep.subr.bf16.mxu0 %v2397
        %2602 = vmatpush1.bf16.msra.mxu0 %v2396
        %2603 = vmatprep.subr.bf16.mxu0 %v2393
        %2604 = vmatpush1.bf16.msra.mxu0 %v2392
        %2605 = vmatprep.subr.bf16.mxu0 %v2389
        %2606 = vmatpush1.bf16.msra.mxu0 %v2388
        %2607 = vmatprep.subr.bf16.mxu0 %v2385
        %2608 = vmatpush1.bf16.msra.mxu0 %v2384
        %2609 = vmatprep.subr.bf16.mxu0 %v2381
        %2610 = vmatpush1.bf16.msra.mxu0 %v2380
        %2611 = vmatprep.subr.bf16.mxu0 %v2377
        %2612 = vmatpush1.bf16.msra.mxu0 %v2376
        %2613 = vmatprep.subr.bf16.mxu0 %v2373
        %2614 = vmatpush1.bf16.msra.mxu0 %v2372
        %2615 = vmatprep.subr.bf16.mxu0 %v2369
        %2616 = vmatpush1.bf16.msra.mxu0 %v2368
        %2617 = vmatprep.subr.bf16.mxu0 %v2429
        %2618 = vmatpush2.bf16.msra.mxu0 %v2428
        %2619 = vmatprep.subr.bf16.mxu0 %v2425
        %2620 = vmatpush2.bf16.msra.mxu0 %v2424
        %2621 = vmatprep.subr.bf16.mxu0 %v2421
        %2622 = vmatpush2.bf16.msra.mxu0 %v2420
        %2623 = vmatprep.subr.bf16.mxu0 %v2417
        %2624 = vmatpush2.bf16.msra.mxu0 %v2416
        %2625 = vmatprep.subr.bf16.mxu0 %v2413
        %2626 = vmatpush2.bf16.msra.mxu0 %v2412
        %2627 = vmatprep.subr.bf16.mxu0 %v2409
        %2628 = vmatpush2.bf16.msra.mxu0 %v2408
        %2629 = vmatprep.subr.bf16.mxu0 %v2405
        %2630 = vmatpush2.bf16.msra.mxu0 %v2404
        %2631 = vmatprep.subr.bf16.mxu0 %v2401
        %2632 = vmatpush2.bf16.msra.mxu0 %v2400
        %2633 = vmatprep.mubr.bf16.mxu0 %v815
        %2634 = vmatmul.mubr.bf16.gmra.mxu0 %v814
        %v2635 = vpop.f32.mrf.mxu0
        %v2636 = vadd.f32 %v2595, %v2635
        %v2637 = vpop.f32.mrf.mxu0
        %v2638 = vadd.f32 %v2597, %v2637
        %v2639 = vpop.f32.mrf.mxu0
        %v2640 = vpop.f32.mrf.mxu0
        %2641 = vdwg.mxu0
        %2642 = vmatprep.subr.bf16.mxu0 %v2335
        %2643 = vmatpush1.bf16.msra.mxu0 %v2334
        %2644 = vmatprep.subr.bf16.mxu0 %v2331
        %2645 = vmatpush1.bf16.msra.mxu0 %v2330
        %2646 = vmatprep.subr.bf16.mxu0 %v2327
        %2647 = vmatpush1.bf16.msra.mxu0 %v2326
        %2648 = vmatprep.subr.bf16.mxu0 %v2323
        %2649 = vmatpush1.bf16.msra.mxu0 %v2322
        %2650 = vmatprep.subr.bf16.mxu0 %v2319
        %2651 = vmatpush1.bf16.msra.mxu0 %v2318
        %2652 = vmatprep.subr.bf16.mxu0 %v2315
        %2653 = vmatpush1.bf16.msra.mxu0 %v2314
        %2654 = vmatprep.subr.bf16.mxu0 %v2311
        %2655 = vmatpush1.bf16.msra.mxu0 %v2310
        %2656 = vmatprep.subr.bf16.mxu0 %v2307
        %2657 = vmatpush1.bf16.msra.mxu0 %v2306
        %2658 = vmatprep.subr.bf16.mxu0 %v2367
        %2659 = vmatpush2.bf16.msra.mxu0 %v2366
        %2660 = vmatprep.subr.bf16.mxu0 %v2363
        %2661 = vmatpush2.bf16.msra.mxu0 %v2362
        %2662 = vmatprep.subr.bf16.mxu0 %v2359
        %2663 = vmatpush2.bf16.msra.mxu0 %v2358
        %2664 = vmatprep.subr.bf16.mxu0 %v2355
        %2665 = vmatpush2.bf16.msra.mxu0 %v2354
        %2666 = vmatprep.subr.bf16.mxu0 %v2351
        %2667 = vmatpush2.bf16.msra.mxu0 %v2350
        %2668 = vmatprep.subr.bf16.mxu0 %v2347
        %2669 = vmatpush2.bf16.msra.mxu0 %v2346
        %2670 = vmatprep.subr.bf16.mxu0 %v2343
        %2671 = vmatpush2.bf16.msra.mxu0 %v2342
        %2672 = vmatprep.subr.bf16.mxu0 %v2339
        %2673 = vmatpush2.bf16.msra.mxu0 %v2338
        %2674 = vmatprep.mubr.bf16.mxu0 %v813
        %2675 = vmatmul.mubr.bf16.gmra.mxu0 %v812
        %v2676 = vpop.f32.mrf.mxu0
        %v2677 = vadd.f32 %v1911, %v2676
        %v2678 = vpop.f32.mrf.mxu0
        %v2679 = vadd.f32 %v1915, %v2678
        %v2680 = vpop.f32.mrf.mxu0
        %v2681 = vpop.f32.mrf.mxu0
        %2682 = vdwg.mxu0
        %2683 = vmatprep.subr.bf16.mxu0 %v2399
        %2684 = vmatpush1.bf16.msra.mxu0 %v2398
        %2685 = vmatprep.subr.bf16.mxu0 %v2395
        %2686 = vmatpush1.bf16.msra.mxu0 %v2394
        %2687 = vmatprep.subr.bf16.mxu0 %v2391
        %2688 = vmatpush1.bf16.msra.mxu0 %v2390
        %2689 = vmatprep.subr.bf16.mxu0 %v2387
        %2690 = vmatpush1.bf16.msra.mxu0 %v2386
        %2691 = vmatprep.subr.bf16.mxu0 %v2383
        %2692 = vmatpush1.bf16.msra.mxu0 %v2382
        %2693 = vmatprep.subr.bf16.mxu0 %v2379
        %2694 = vmatpush1.bf16.msra.mxu0 %v2378
        %2695 = vmatprep.subr.bf16.mxu0 %v2375
        %2696 = vmatpush1.bf16.msra.mxu0 %v2374
        %2697 = vmatprep.subr.bf16.mxu0 %v2371
        %2698 = vmatpush1.bf16.msra.mxu0 %v2370
        %2699 = vmatprep.subr.bf16.mxu0 %v2431
        %2700 = vmatpush2.bf16.msra.mxu0 %v2430
        %2701 = vmatprep.subr.bf16.mxu0 %v2427
        %2702 = vmatpush2.bf16.msra.mxu0 %v2426
        %2703 = vmatprep.subr.bf16.mxu0 %v2423
        %2704 = vmatpush2.bf16.msra.mxu0 %v2422
        %2705 = vmatprep.subr.bf16.mxu0 %v2419
        %2706 = vmatpush2.bf16.msra.mxu0 %v2418
        %2707 = vmatprep.subr.bf16.mxu0 %v2415
        %2708 = vmatpush2.bf16.msra.mxu0 %v2414
        %2709 = vmatprep.subr.bf16.mxu0 %v2411
        %2710 = vmatpush2.bf16.msra.mxu0 %v2410
        %2711 = vmatprep.subr.bf16.mxu0 %v2407
        %2712 = vmatpush2.bf16.msra.mxu0 %v2406
        %2713 = vmatprep.subr.bf16.mxu0 %v2403
        %2714 = vmatpush2.bf16.msra.mxu0 %v2402
        %2715 = vmatprep.mubr.bf16.mxu0 %v815
        %2716 = vmatmul.mubr.bf16.gmra.mxu0 %v814
        %v2717 = vpop.f32.mrf.mxu0
        %v2718 = vadd.f32 %v2677, %v2717
        %v2719 = vpop.f32.mrf.mxu0
        %v2720 = vadd.f32 %v2679, %v2719
        %v2721 = vpop.f32.mrf.mxu0
        %v2722 = vpop.f32.mrf.mxu0
        %2723 = vdwg.mxu0
        %v2724 = vld [vmem:[#allocation10] sm:$0xff]
        %v2725 = vld [vmem:[#allocation10 + $0x8] sm:$0xff]
        %v2726 = vld [vmem:[#allocation10 + $0x10] sm:$0xff]
        %v2727 = vld [vmem:[#allocation10 + $0x18] sm:$0xff]
        %v2728 = vld [vmem:[#allocation10 + $0x20] sm:$0xff]
        %v2729 = vld [vmem:[#allocation10 + $0x28] sm:$0xff]
        %v2730 = vld [vmem:[#allocation10 + $0x30] sm:$0xff]
        %v2731 = vld [vmem:[#allocation10 + $0x38] sm:$0xff]
        %v2732 = vld [vmem:[#allocation10 + $0x40] sm:$0xff]
        %v2733 = vld [vmem:[#allocation10 + $0x48] sm:$0xff]
        %v2734 = vld [vmem:[#allocation10 + $0x50] sm:$0xff]
        %v2735 = vld [vmem:[#allocation10 + $0x58] sm:$0xff]
        %v2736 = vld [vmem:[#allocation10 + $0x60] sm:$0xff]
        %v2737 = vld [vmem:[#allocation10 + $0x68] sm:$0xff]
        %v2738 = vld [vmem:[#allocation10 + $0x70] sm:$0xff]
        %v2739 = vld [vmem:[#allocation10 + $0x78] sm:$0xff]
        %v2740 = vld [vmem:[#allocation10 + $0x80] sm:$0xff]
        %v2741 = vld [vmem:[#allocation10 + $0x88] sm:$0xff]
        %v2742 = vld [vmem:[#allocation10 + $0x90] sm:$0xff]
        %v2743 = vld [vmem:[#allocation10 + $0x98] sm:$0xff]
        %v2744 = vld [vmem:[#allocation10 + $0xa0] sm:$0xff]
        %v2745 = vld [vmem:[#allocation10 + $0xa8] sm:$0xff]
        %v2746 = vld [vmem:[#allocation10 + $0xb0] sm:$0xff]
        %v2747 = vld [vmem:[#allocation10 + $0xb8] sm:$0xff]
        %v2748 = vld [vmem:[#allocation10 + $0xc0] sm:$0xff]
        %v2749 = vld [vmem:[#allocation10 + $0xc8] sm:$0xff]
        %v2750 = vld [vmem:[#allocation10 + $0xd0] sm:$0xff]
        %v2751 = vld [vmem:[#allocation10 + $0xd8] sm:$0xff]
        %v2752 = vld [vmem:[#allocation10 + $0xe0] sm:$0xff]
        %v2753 = vld [vmem:[#allocation10 + $0xe8] sm:$0xff]
        %v2754 = vld [vmem:[#allocation10 + $0xf0] sm:$0xff]
        %v2755 = vld [vmem:[#allocation10 + $0xf8] sm:$0xff]
        %v2756 = vld [vmem:[#allocation10 + $0x100] sm:$0xff]
        %v2757 = vld [vmem:[#allocation10 + $0x108] sm:$0xff]
        %v2758 = vld [vmem:[#allocation10 + $0x110] sm:$0xff]
        %v2759 = vld [vmem:[#allocation10 + $0x118] sm:$0xff]
        %v2760 = vld [vmem:[#allocation10 + $0x120] sm:$0xff]
        %v2761 = vld [vmem:[#allocation10 + $0x128] sm:$0xff]
        %v2762 = vld [vmem:[#allocation10 + $0x130] sm:$0xff]
        %v2763 = vld [vmem:[#allocation10 + $0x138] sm:$0xff]
        %v2764 = vld [vmem:[#allocation10 + $0x140] sm:$0xff]
        %v2765 = vld [vmem:[#allocation10 + $0x148] sm:$0xff]
        %v2766 = vld [vmem:[#allocation10 + $0x150] sm:$0xff]
        %v2767 = vld [vmem:[#allocation10 + $0x158] sm:$0xff]
        %v2768 = vld [vmem:[#allocation10 + $0x160] sm:$0xff]
        %v2769 = vld [vmem:[#allocation10 + $0x168] sm:$0xff]
        %v2770 = vld [vmem:[#allocation10 + $0x170] sm:$0xff]
        %v2771 = vld [vmem:[#allocation10 + $0x178] sm:$0xff]
        %v2772 = vld [vmem:[#allocation10 + $0x180] sm:$0xff]
        %v2773 = vld [vmem:[#allocation10 + $0x188] sm:$0xff]
        %v2774 = vld [vmem:[#allocation10 + $0x190] sm:$0xff]
        %v2775 = vld [vmem:[#allocation10 + $0x198] sm:$0xff]
        %v2776 = vld [vmem:[#allocation10 + $0x1a0] sm:$0xff]
        %v2777 = vld [vmem:[#allocation10 + $0x1a8] sm:$0xff]
        %v2778 = vld [vmem:[#allocation10 + $0x1b0] sm:$0xff]
        %v2779 = vld [vmem:[#allocation10 + $0x1b8] sm:$0xff]
        %v2780 = vld [vmem:[#allocation10 + $0x1c0] sm:$0xff]
        %v2781 = vld [vmem:[#allocation10 + $0x1c8] sm:$0xff]
        %v2782 = vld [vmem:[#allocation10 + $0x1d0] sm:$0xff]
        %v2783 = vld [vmem:[#allocation10 + $0x1d8] sm:$0xff]
        %v2784 = vld [vmem:[#allocation10 + $0x1e0] sm:$0xff]
        %v2785 = vld [vmem:[#allocation10 + $0x1e8] sm:$0xff]
        %v2786 = vld [vmem:[#allocation10 + $0x1f0] sm:$0xff]
        %v2787 = vld [vmem:[#allocation10 + $0x1f8] sm:$0xff]
        %v2788 = vld [vmem:[#allocation10 + $0x200] sm:$0xff]
        %v2789 = vld [vmem:[#allocation10 + $0x208] sm:$0xff]
        %v2790 = vld [vmem:[#allocation10 + $0x210] sm:$0xff]
        %v2791 = vld [vmem:[#allocation10 + $0x218] sm:$0xff]
        %v2792 = vld [vmem:[#allocation10 + $0x220] sm:$0xff]
        %v2793 = vld [vmem:[#allocation10 + $0x228] sm:$0xff]
        %v2794 = vld [vmem:[#allocation10 + $0x230] sm:$0xff]
        %v2795 = vld [vmem:[#allocation10 + $0x238] sm:$0xff]
        %v2796 = vld [vmem:[#allocation10 + $0x240] sm:$0xff]
        %v2797 = vld [vmem:[#allocation10 + $0x248] sm:$0xff]
        %v2798 = vld [vmem:[#allocation10 + $0x250] sm:$0xff]
        %v2799 = vld [vmem:[#allocation10 + $0x258] sm:$0xff]
        %v2800 = vld [vmem:[#allocation10 + $0x260] sm:$0xff]
        %v2801 = vld [vmem:[#allocation10 + $0x268] sm:$0xff]
        %v2802 = vld [vmem:[#allocation10 + $0x270] sm:$0xff]
        %v2803 = vld [vmem:[#allocation10 + $0x278] sm:$0xff]
        %v2804 = vld [vmem:[#allocation10 + $0x280] sm:$0xff]
        %v2805 = vld [vmem:[#allocation10 + $0x288] sm:$0xff]
        %v2806 = vld [vmem:[#allocation10 + $0x290] sm:$0xff]
        %v2807 = vld [vmem:[#allocation10 + $0x298] sm:$0xff]
        %v2808 = vld [vmem:[#allocation10 + $0x2a0] sm:$0xff]
        %v2809 = vld [vmem:[#allocation10 + $0x2a8] sm:$0xff]
        %v2810 = vld [vmem:[#allocation10 + $0x2b0] sm:$0xff]
        %v2811 = vld [vmem:[#allocation10 + $0x2b8] sm:$0xff]
        %v2812 = vld [vmem:[#allocation10 + $0x2c0] sm:$0xff]
        %v2813 = vld [vmem:[#allocation10 + $0x2c8] sm:$0xff]
        %v2814 = vld [vmem:[#allocation10 + $0x2d0] sm:$0xff]
        %v2815 = vld [vmem:[#allocation10 + $0x2d8] sm:$0xff]
        %v2816 = vld [vmem:[#allocation10 + $0x2e0] sm:$0xff]
        %v2817 = vld [vmem:[#allocation10 + $0x2e8] sm:$0xff]
        %v2818 = vld [vmem:[#allocation10 + $0x2f0] sm:$0xff]
        %v2819 = vld [vmem:[#allocation10 + $0x2f8] sm:$0xff]
        %v2820 = vld [vmem:[#allocation10 + $0x300] sm:$0xff]
        %v2821 = vld [vmem:[#allocation10 + $0x308] sm:$0xff]
        %v2822 = vld [vmem:[#allocation10 + $0x310] sm:$0xff]
        %v2823 = vld [vmem:[#allocation10 + $0x318] sm:$0xff]
        %v2824 = vld [vmem:[#allocation10 + $0x320] sm:$0xff]
        %v2825 = vld [vmem:[#allocation10 + $0x328] sm:$0xff]
        %v2826 = vld [vmem:[#allocation10 + $0x330] sm:$0xff]
        %v2827 = vld [vmem:[#allocation10 + $0x338] sm:$0xff]
        %v2828 = vld [vmem:[#allocation10 + $0x340] sm:$0xff]
        %v2829 = vld [vmem:[#allocation10 + $0x348] sm:$0xff]
        %v2830 = vld [vmem:[#allocation10 + $0x350] sm:$0xff]
        %v2831 = vld [vmem:[#allocation10 + $0x358] sm:$0xff]
        %v2832 = vld [vmem:[#allocation10 + $0x360] sm:$0xff]
        %v2833 = vld [vmem:[#allocation10 + $0x368] sm:$0xff]
        %v2834 = vld [vmem:[#allocation10 + $0x370] sm:$0xff]
        %v2835 = vld [vmem:[#allocation10 + $0x378] sm:$0xff]
        %v2836 = vld [vmem:[#allocation10 + $0x380] sm:$0xff]
        %v2837 = vld [vmem:[#allocation10 + $0x388] sm:$0xff]
        %v2838 = vld [vmem:[#allocation10 + $0x390] sm:$0xff]
        %v2839 = vld [vmem:[#allocation10 + $0x398] sm:$0xff]
        %v2840 = vld [vmem:[#allocation10 + $0x3a0] sm:$0xff]
        %v2841 = vld [vmem:[#allocation10 + $0x3a8] sm:$0xff]
        %v2842 = vld [vmem:[#allocation10 + $0x3b0] sm:$0xff]
        %v2843 = vld [vmem:[#allocation10 + $0x3b8] sm:$0xff]
        %v2844 = vld [vmem:[#allocation10 + $0x3c0] sm:$0xff]
        %v2845 = vld [vmem:[#allocation10 + $0x3c8] sm:$0xff]
        %v2846 = vld [vmem:[#allocation10 + $0x3d0] sm:$0xff]
        %v2847 = vld [vmem:[#allocation10 + $0x3d8] sm:$0xff]
        %v2848 = vld [vmem:[#allocation10 + $0x3e0] sm:$0xff]
        %v2849 = vld [vmem:[#allocation10 + $0x3e8] sm:$0xff]
        %v2850 = vld [vmem:[#allocation10 + $0x3f0] sm:$0xff]
        %v2851 = vld [vmem:[#allocation10 + $0x3f8] sm:$0xff]
        %v2852 = vld [vmem:[%s8] sm:$0xf]
        %v2854 = vlaneseq
        %v2855 = vshrl.u32 %v2854, 7
        %v2856 = vsub.s32 0, %v2855
        %v2857 = vrot.slane %v2852, %v2856
        %v2858 = vlaneseq
        %v2859 = vshrl.u32 %v2858, 7
        %v2860 = vsub.s32 1, %v2859
        %v2861 = vrot.slane %v2852, %v2860
        %v2862 = vlaneseq
        %v2863 = vshrl.u32 %v2862, 7
        %v2864 = vsub.s32 2, %v2863
        %v2865 = vrot.slane %v2852, %v2864
        %v2866 = vlaneseq
        %v2867 = vshrl.u32 %v2866, 7
        %v2868 = vsub.s32 3, %v2867
        %v2869 = vrot.slane %v2852, %v2868
        %v3002 = vunpack.c.l.b16 %v2724
        %v3003 = vunpack.c.h.b16 %v2724
        %v3004 = vunpack.c.l.b16 %v2725
        %v3005 = vunpack.c.h.b16 %v2725
        %v3006 = vunpack.c.l.b16 %v2726
        %v3007 = vunpack.c.h.b16 %v2726
        %v3008 = vunpack.c.l.b16 %v2727
        %v3009 = vunpack.c.h.b16 %v2727
        %v3010 = vunpack.c.l.b16 %v2728
        %v3011 = vunpack.c.h.b16 %v2728
        %v3012 = vunpack.c.l.b16 %v2729
        %v3013 = vunpack.c.h.b16 %v2729
        %v3014 = vunpack.c.l.b16 %v2730
        %v3015 = vunpack.c.h.b16 %v2730
        %v3016 = vunpack.c.l.b16 %v2731
        %v3017 = vunpack.c.h.b16 %v2731
        %v3018 = vunpack.c.l.b16 %v2732
        %v3019 = vunpack.c.h.b16 %v2732
        %v3020 = vunpack.c.l.b16 %v2733
        %v3021 = vunpack.c.h.b16 %v2733
        %v3022 = vunpack.c.l.b16 %v2734
        %v3023 = vunpack.c.h.b16 %v2734
        %v3024 = vunpack.c.l.b16 %v2735
        %v3025 = vunpack.c.h.b16 %v2735
        %v3026 = vunpack.c.l.b16 %v2736
        %v3027 = vunpack.c.h.b16 %v2736
        %v3028 = vunpack.c.l.b16 %v2737
        %v3029 = vunpack.c.h.b16 %v2737
        %v3030 = vunpack.c.l.b16 %v2738
        %v3031 = vunpack.c.h.b16 %v2738
        %v3032 = vunpack.c.l.b16 %v2739
        %v3033 = vunpack.c.h.b16 %v2739
        %v3034 = vunpack.c.l.b16 %v2740
        %v3035 = vunpack.c.h.b16 %v2740
        %v3036 = vunpack.c.l.b16 %v2741
        %v3037 = vunpack.c.h.b16 %v2741
        %v3038 = vunpack.c.l.b16 %v2742
        %v3039 = vunpack.c.h.b16 %v2742
        %v3040 = vunpack.c.l.b16 %v2743
        %v3041 = vunpack.c.h.b16 %v2743
        %v3042 = vunpack.c.l.b16 %v2744
        %v3043 = vunpack.c.h.b16 %v2744
        %v3044 = vunpack.c.l.b16 %v2745
        %v3045 = vunpack.c.h.b16 %v2745
        %v3046 = vunpack.c.l.b16 %v2746
        %v3047 = vunpack.c.h.b16 %v2746
        %v3048 = vunpack.c.l.b16 %v2747
        %v3049 = vunpack.c.h.b16 %v2747
        %v3050 = vunpack.c.l.b16 %v2748
        %v3051 = vunpack.c.h.b16 %v2748
        %v3052 = vunpack.c.l.b16 %v2749
        %v3053 = vunpack.c.h.b16 %v2749
        %v3054 = vunpack.c.l.b16 %v2750
        %v3055 = vunpack.c.h.b16 %v2750
        %v3056 = vunpack.c.l.b16 %v2751
        %v3057 = vunpack.c.h.b16 %v2751
        %v3058 = vunpack.c.l.b16 %v2752
        %v3059 = vunpack.c.h.b16 %v2752
        %v3060 = vunpack.c.l.b16 %v2753
        %v3061 = vunpack.c.h.b16 %v2753
        %v3062 = vunpack.c.l.b16 %v2754
        %v3063 = vunpack.c.h.b16 %v2754
        %v3064 = vunpack.c.l.b16 %v2755
        %v3065 = vunpack.c.h.b16 %v2755
        %v3066 = vunpack.c.l.b16 %v2756
        %v3067 = vunpack.c.h.b16 %v2756
        %v3068 = vunpack.c.l.b16 %v2757
        %v3069 = vunpack.c.h.b16 %v2757
        %v3070 = vunpack.c.l.b16 %v2758
        %v3071 = vunpack.c.h.b16 %v2758
        %v3072 = vunpack.c.l.b16 %v2759
        %v3073 = vunpack.c.h.b16 %v2759
        %v3074 = vunpack.c.l.b16 %v2760
        %v3075 = vunpack.c.h.b16 %v2760
        %v3076 = vunpack.c.l.b16 %v2761
        %v3077 = vunpack.c.h.b16 %v2761
        %v3078 = vunpack.c.l.b16 %v2762
        %v3079 = vunpack.c.h.b16 %v2762
        %v3080 = vunpack.c.l.b16 %v2763
        %v3081 = vunpack.c.h.b16 %v2763
        %v3082 = vunpack.c.l.b16 %v2764
        %v3083 = vunpack.c.h.b16 %v2764
        %v3084 = vunpack.c.l.b16 %v2765
        %v3085 = vunpack.c.h.b16 %v2765
        %v3086 = vunpack.c.l.b16 %v2766
        %v3087 = vunpack.c.h.b16 %v2766
        %v3088 = vunpack.c.l.b16 %v2767
        %v3089 = vunpack.c.h.b16 %v2767
        %v3090 = vunpack.c.l.b16 %v2768
        %v3091 = vunpack.c.h.b16 %v2768
        %v3092 = vunpack.c.l.b16 %v2769
        %v3093 = vunpack.c.h.b16 %v2769
        %v3094 = vunpack.c.l.b16 %v2770
        %v3095 = vunpack.c.h.b16 %v2770
        %v3096 = vunpack.c.l.b16 %v2771
        %v3097 = vunpack.c.h.b16 %v2771
        %v3098 = vunpack.c.l.b16 %v2772
        %v3099 = vunpack.c.h.b16 %v2772
        %v3100 = vunpack.c.l.b16 %v2773
        %v3101 = vunpack.c.h.b16 %v2773
        %v3102 = vunpack.c.l.b16 %v2774
        %v3103 = vunpack.c.h.b16 %v2774
        %v3104 = vunpack.c.l.b16 %v2775
        %v3105 = vunpack.c.h.b16 %v2775
        %v3106 = vunpack.c.l.b16 %v2776
        %v3107 = vunpack.c.h.b16 %v2776
        %v3108 = vunpack.c.l.b16 %v2777
        %v3109 = vunpack.c.h.b16 %v2777
        %v3110 = vunpack.c.l.b16 %v2778
        %v3111 = vunpack.c.h.b16 %v2778
        %v3112 = vunpack.c.l.b16 %v2779
        %v3113 = vunpack.c.h.b16 %v2779
        %v3114 = vunpack.c.l.b16 %v2780
        %v3115 = vunpack.c.h.b16 %v2780
        %v3116 = vunpack.c.l.b16 %v2781
        %v3117 = vunpack.c.h.b16 %v2781
        %v3118 = vunpack.c.l.b16 %v2782
        %v3119 = vunpack.c.h.b16 %v2782
        %v3120 = vunpack.c.l.b16 %v2783
        %v3121 = vunpack.c.h.b16 %v2783
        %v3122 = vunpack.c.l.b16 %v2784
        %v3123 = vunpack.c.h.b16 %v2784
        %v3124 = vunpack.c.l.b16 %v2785
        %v3125 = vunpack.c.h.b16 %v2785
        %v3126 = vunpack.c.l.b16 %v2786
        %v3127 = vunpack.c.h.b16 %v2786
        %v3128 = vunpack.c.l.b16 %v2787
        %v3129 = vunpack.c.h.b16 %v2787
        %v3130 = vunpack.c.l.b16 %v2788
        %v3131 = vunpack.c.h.b16 %v2788
        %v3132 = vunpack.c.l.b16 %v2789
        %v3133 = vunpack.c.h.b16 %v2789
        %v3134 = vunpack.c.l.b16 %v2790
        %v3135 = vunpack.c.h.b16 %v2790
        %v3136 = vunpack.c.l.b16 %v2791
        %v3137 = vunpack.c.h.b16 %v2791
        %v3138 = vunpack.c.l.b16 %v2792
        %v3139 = vunpack.c.h.b16 %v2792
        %v3140 = vunpack.c.l.b16 %v2793
        %v3141 = vunpack.c.h.b16 %v2793
        %v3142 = vunpack.c.l.b16 %v2794
        %v3143 = vunpack.c.h.b16 %v2794
        %v3144 = vunpack.c.l.b16 %v2795
        %v3145 = vunpack.c.h.b16 %v2795
        %v3146 = vunpack.c.l.b16 %v2796
        %v3147 = vunpack.c.h.b16 %v2796
        %v3148 = vunpack.c.l.b16 %v2797
        %v3149 = vunpack.c.h.b16 %v2797
        %v3150 = vunpack.c.l.b16 %v2798
        %v3151 = vunpack.c.h.b16 %v2798
        %v3152 = vunpack.c.l.b16 %v2799
        %v3153 = vunpack.c.h.b16 %v2799
        %v3154 = vunpack.c.l.b16 %v2800
        %v3155 = vunpack.c.h.b16 %v2800
        %v3156 = vunpack.c.l.b16 %v2801
        %v3157 = vunpack.c.h.b16 %v2801
        %v3158 = vunpack.c.l.b16 %v2802
        %v3159 = vunpack.c.h.b16 %v2802
        %v3160 = vunpack.c.l.b16 %v2803
        %v3161 = vunpack.c.h.b16 %v2803
        %v3162 = vunpack.c.l.b16 %v2804
        %v3163 = vunpack.c.h.b16 %v2804
        %v3164 = vunpack.c.l.b16 %v2805
        %v3165 = vunpack.c.h.b16 %v2805
        %v3166 = vunpack.c.l.b16 %v2806
        %v3167 = vunpack.c.h.b16 %v2806
        %v3168 = vunpack.c.l.b16 %v2807
        %v3169 = vunpack.c.h.b16 %v2807
        %v3170 = vunpack.c.l.b16 %v2808
        %v3171 = vunpack.c.h.b16 %v2808
        %v3172 = vunpack.c.l.b16 %v2809
        %v3173 = vunpack.c.h.b16 %v2809
        %v3174 = vunpack.c.l.b16 %v2810
        %v3175 = vunpack.c.h.b16 %v2810
        %v3176 = vunpack.c.l.b16 %v2811
        %v3177 = vunpack.c.h.b16 %v2811
        %v3178 = vunpack.c.l.b16 %v2812
        %v3179 = vunpack.c.h.b16 %v2812
        %v3180 = vunpack.c.l.b16 %v2813
        %v3181 = vunpack.c.h.b16 %v2813
        %v3182 = vunpack.c.l.b16 %v2814
        %v3183 = vunpack.c.h.b16 %v2814
        %v3184 = vunpack.c.l.b16 %v2815
        %v3185 = vunpack.c.h.b16 %v2815
        %v3186 = vunpack.c.l.b16 %v2816
        %v3187 = vunpack.c.h.b16 %v2816
        %v3188 = vunpack.c.l.b16 %v2817
        %v3189 = vunpack.c.h.b16 %v2817
        %v3190 = vunpack.c.l.b16 %v2818
        %v3191 = vunpack.c.h.b16 %v2818
        %v3192 = vunpack.c.l.b16 %v2819
        %v3193 = vunpack.c.h.b16 %v2819
        %v3194 = vunpack.c.l.b16 %v2820
        %v3195 = vunpack.c.h.b16 %v2820
        %v3196 = vunpack.c.l.b16 %v2821
        %v3197 = vunpack.c.h.b16 %v2821
        %v3198 = vunpack.c.l.b16 %v2822
        %v3199 = vunpack.c.h.b16 %v2822
        %v3200 = vunpack.c.l.b16 %v2823
        %v3201 = vunpack.c.h.b16 %v2823
        %v3202 = vunpack.c.l.b16 %v2824
        %v3203 = vunpack.c.h.b16 %v2824
        %v3204 = vunpack.c.l.b16 %v2825
        %v3205 = vunpack.c.h.b16 %v2825
        %v3206 = vunpack.c.l.b16 %v2826
        %v3207 = vunpack.c.h.b16 %v2826
        %v3208 = vunpack.c.l.b16 %v2827
        %v3209 = vunpack.c.h.b16 %v2827
        %v3210 = vunpack.c.l.b16 %v2828
        %v3211 = vunpack.c.h.b16 %v2828
        %v3212 = vunpack.c.l.b16 %v2829
        %v3213 = vunpack.c.h.b16 %v2829
        %v3214 = vunpack.c.l.b16 %v2830
        %v3215 = vunpack.c.h.b16 %v2830
        %v3216 = vunpack.c.l.b16 %v2831
        %v3217 = vunpack.c.h.b16 %v2831
        %v3218 = vunpack.c.l.b16 %v2832
        %v3219 = vunpack.c.h.b16 %v2832
        %v3220 = vunpack.c.l.b16 %v2833
        %v3221 = vunpack.c.h.b16 %v2833
        %v3222 = vunpack.c.l.b16 %v2834
        %v3223 = vunpack.c.h.b16 %v2834
        %v3224 = vunpack.c.l.b16 %v2835
        %v3225 = vunpack.c.h.b16 %v2835
        %v3226 = vunpack.c.l.b16 %v2836
        %v3227 = vunpack.c.h.b16 %v2836
        %v3228 = vunpack.c.l.b16 %v2837
        %v3229 = vunpack.c.h.b16 %v2837
        %v3230 = vunpack.c.l.b16 %v2838
        %v3231 = vunpack.c.h.b16 %v2838
        %v3232 = vunpack.c.l.b16 %v2839
        %v3233 = vunpack.c.h.b16 %v2839
        %v3234 = vunpack.c.l.b16 %v2840
        %v3235 = vunpack.c.h.b16 %v2840
        %v3236 = vunpack.c.l.b16 %v2841
        %v3237 = vunpack.c.h.b16 %v2841
        %v3238 = vunpack.c.l.b16 %v2842
        %v3239 = vunpack.c.h.b16 %v2842
        %v3240 = vunpack.c.l.b16 %v2843
        %v3241 = vunpack.c.h.b16 %v2843
        %v3242 = vunpack.c.l.b16 %v2844
        %v3243 = vunpack.c.h.b16 %v2844
        %v3244 = vunpack.c.l.b16 %v2845
        %v3245 = vunpack.c.h.b16 %v2845
        %v3246 = vunpack.c.l.b16 %v2846
        %v3247 = vunpack.c.h.b16 %v2846
        %v3248 = vunpack.c.l.b16 %v2847
        %v3249 = vunpack.c.h.b16 %v2847
        %v3250 = vunpack.c.l.b16 %v2848
        %v3251 = vunpack.c.h.b16 %v2848
        %v3252 = vunpack.c.l.b16 %v2849
        %v3253 = vunpack.c.h.b16 %v2849
        %v3254 = vunpack.c.l.b16 %v2850
        %v3255 = vunpack.c.h.b16 %v2850
        %v3256 = vunpack.c.l.b16 %v2851
        %v3257 = vunpack.c.h.b16 %v2851
        %v3258 = vpack.c.b16 %v3006, %v3002
        %v3259 = vpack.c.b16 %v3007, %v3003
        %v3260 = vpack.c.b16 %v3008, %v3004
        %v3261 = vpack.c.b16 %v3009, %v3005
        %v3262 = vpack.c.b16 %v3014, %v3010
        %v3263 = vpack.c.b16 %v3015, %v3011
        %v3264 = vpack.c.b16 %v3016, %v3012
        %v3265 = vpack.c.b16 %v3017, %v3013
        %v3266 = vpack.c.b16 %v3022, %v3018
        %v3267 = vpack.c.b16 %v3023, %v3019
        %v3268 = vpack.c.b16 %v3024, %v3020
        %v3269 = vpack.c.b16 %v3025, %v3021
        %v3270 = vpack.c.b16 %v3030, %v3026
        %v3271 = vpack.c.b16 %v3031, %v3027
        %v3272 = vpack.c.b16 %v3032, %v3028
        %v3273 = vpack.c.b16 %v3033, %v3029
        %v3274 = vpack.c.b16 %v3038, %v3034
        %v3275 = vpack.c.b16 %v3039, %v3035
        %v3276 = vpack.c.b16 %v3040, %v3036
        %v3277 = vpack.c.b16 %v3041, %v3037
        %v3278 = vpack.c.b16 %v3046, %v3042
        %v3279 = vpack.c.b16 %v3047, %v3043
        %v3280 = vpack.c.b16 %v3048, %v3044
        %v3281 = vpack.c.b16 %v3049, %v3045
        %v3282 = vpack.c.b16 %v3054, %v3050
        %v3283 = vpack.c.b16 %v3055, %v3051
        %v3284 = vpack.c.b16 %v3056, %v3052
        %v3285 = vpack.c.b16 %v3057, %v3053
        %v3286 = vpack.c.b16 %v3062, %v3058
        %v3287 = vpack.c.b16 %v3063, %v3059
        %v3288 = vpack.c.b16 %v3064, %v3060
        %v3289 = vpack.c.b16 %v3065, %v3061
        %v3290 = vpack.c.b16 %v3070, %v3066
        %v3291 = vpack.c.b16 %v3071, %v3067
        %v3292 = vpack.c.b16 %v3072, %v3068
        %v3293 = vpack.c.b16 %v3073, %v3069
        %v3294 = vpack.c.b16 %v3078, %v3074
        %v3295 = vpack.c.b16 %v3079, %v3075
        %v3296 = vpack.c.b16 %v3080, %v3076
        %v3297 = vpack.c.b16 %v3081, %v3077
        %v3298 = vpack.c.b16 %v3086, %v3082
        %v3299 = vpack.c.b16 %v3087, %v3083
        %v3300 = vpack.c.b16 %v3088, %v3084
        %v3301 = vpack.c.b16 %v3089, %v3085
        %v3302 = vpack.c.b16 %v3094, %v3090
        %v3303 = vpack.c.b16 %v3095, %v3091
        %v3304 = vpack.c.b16 %v3096, %v3092
        %v3305 = vpack.c.b16 %v3097, %v3093
        %v3306 = vpack.c.b16 %v3102, %v3098
        %v3307 = vpack.c.b16 %v3103, %v3099
        %v3308 = vpack.c.b16 %v3104, %v3100
        %v3309 = vpack.c.b16 %v3105, %v3101
        %v3310 = vpack.c.b16 %v3110, %v3106
        %v3311 = vpack.c.b16 %v3111, %v3107
        %v3312 = vpack.c.b16 %v3112, %v3108
        %v3313 = vpack.c.b16 %v3113, %v3109
        %v3314 = vpack.c.b16 %v3118, %v3114
        %v3315 = vpack.c.b16 %v3119, %v3115
        %v3316 = vpack.c.b16 %v3120, %v3116
        %v3317 = vpack.c.b16 %v3121, %v3117
        %v3318 = vpack.c.b16 %v3126, %v3122
        %v3319 = vpack.c.b16 %v3127, %v3123
        %v3320 = vpack.c.b16 %v3128, %v3124
        %v3321 = vpack.c.b16 %v3129, %v3125
        %v3322 = vpack.c.b16 %v3134, %v3130
        %v3323 = vpack.c.b16 %v3135, %v3131
        %v3324 = vpack.c.b16 %v3136, %v3132
        %v3325 = vpack.c.b16 %v3137, %v3133
        %v3326 = vpack.c.b16 %v3142, %v3138
        %v3327 = vpack.c.b16 %v3143, %v3139
        %v3328 = vpack.c.b16 %v3144, %v3140
        %v3329 = vpack.c.b16 %v3145, %v3141
        %v3330 = vpack.c.b16 %v3150, %v3146
        %v3331 = vpack.c.b16 %v3151, %v3147
        %v3332 = vpack.c.b16 %v3152, %v3148
        %v3333 = vpack.c.b16 %v3153, %v3149
        %v3334 = vpack.c.b16 %v3158, %v3154
        %v3335 = vpack.c.b16 %v3159, %v3155
        %v3336 = vpack.c.b16 %v3160, %v3156
        %v3337 = vpack.c.b16 %v3161, %v3157
        %v3338 = vpack.c.b16 %v3166, %v3162
        %v3339 = vpack.c.b16 %v3167, %v3163
        %v3340 = vpack.c.b16 %v3168, %v3164
        %v3341 = vpack.c.b16 %v3169, %v3165
        %v3342 = vpack.c.b16 %v3174, %v3170
        %v3343 = vpack.c.b16 %v3175, %v3171
        %v3344 = vpack.c.b16 %v3176, %v3172
        %v3345 = vpack.c.b16 %v3177, %v3173
        %v3346 = vpack.c.b16 %v3182, %v3178
        %v3347 = vpack.c.b16 %v3183, %v3179
        %v3348 = vpack.c.b16 %v3184, %v3180
        %v3349 = vpack.c.b16 %v3185, %v3181
        %v3350 = vpack.c.b16 %v3190, %v3186
        %v3351 = vpack.c.b16 %v3191, %v3187
        %v3352 = vpack.c.b16 %v3192, %v3188
        %v3353 = vpack.c.b16 %v3193, %v3189
        %v3354 = vpack.c.b16 %v3198, %v3194
        %v3355 = vpack.c.b16 %v3199, %v3195
        %v3356 = vpack.c.b16 %v3200, %v3196
        %v3357 = vpack.c.b16 %v3201, %v3197
        %v3358 = vpack.c.b16 %v3206, %v3202
        %v3359 = vpack.c.b16 %v3207, %v3203
        %v3360 = vpack.c.b16 %v3208, %v3204
        %v3361 = vpack.c.b16 %v3209, %v3205
        %v3362 = vpack.c.b16 %v3214, %v3210
        %v3363 = vpack.c.b16 %v3215, %v3211
        %v3364 = vpack.c.b16 %v3216, %v3212
        %v3365 = vpack.c.b16 %v3217, %v3213
        %v3366 = vpack.c.b16 %v3222, %v3218
        %v3367 = vpack.c.b16 %v3223, %v3219
        %v3368 = vpack.c.b16 %v3224, %v3220
        %v3369 = vpack.c.b16 %v3225, %v3221
        %v3370 = vpack.c.b16 %v3230, %v3226
        %v3371 = vpack.c.b16 %v3231, %v3227
        %v3372 = vpack.c.b16 %v3232, %v3228
        %v3373 = vpack.c.b16 %v3233, %v3229
        %v3374 = vpack.c.b16 %v3238, %v3234
        %v3375 = vpack.c.b16 %v3239, %v3235
        %v3376 = vpack.c.b16 %v3240, %v3236
        %v3377 = vpack.c.b16 %v3241, %v3237
        %v3378 = vpack.c.b16 %v3246, %v3242
        %v3379 = vpack.c.b16 %v3247, %v3243
        %v3380 = vpack.c.b16 %v3248, %v3244
        %v3381 = vpack.c.b16 %v3249, %v3245
        %v3382 = vpack.c.b16 %v3254, %v3250
        %v3383 = vpack.c.b16 %v3255, %v3251
        %v3384 = vpack.c.b16 %v3256, %v3252
        %v3385 = vpack.c.b16 %v3257, %v3253
        %3514 = vmatprep.subr.bf16.mxu0 %v3287
        %3515 = vmatpush1.bf16.msra.mxu0 %v3286
        %3516 = vmatprep.subr.bf16.mxu0 %v3283
        %3517 = vmatpush1.bf16.msra.mxu0 %v3282
        %3518 = vmatprep.subr.bf16.mxu0 %v3279
        %3519 = vmatpush1.bf16.msra.mxu0 %v3278
        %3520 = vmatprep.subr.bf16.mxu0 %v3275
        %3521 = vmatpush1.bf16.msra.mxu0 %v3274
        %3522 = vmatprep.subr.bf16.mxu0 %v3271
        %3523 = vmatpush1.bf16.msra.mxu0 %v3270
        %3524 = vmatprep.subr.bf16.mxu0 %v3267
        %3525 = vmatpush1.bf16.msra.mxu0 %v3266
        %3526 = vmatprep.subr.bf16.mxu0 %v3263
        %3527 = vmatpush1.bf16.msra.mxu0 %v3262
        %3528 = vmatprep.subr.bf16.mxu0 %v3259
        %3529 = vmatpush1.bf16.msra.mxu0 %v3258
        %3530 = vmatprep.subr.bf16.mxu0 %v3319
        %3531 = vmatpush2.bf16.msra.mxu0 %v3318
        %3532 = vmatprep.subr.bf16.mxu0 %v3315
        %3533 = vmatpush2.bf16.msra.mxu0 %v3314
        %3534 = vmatprep.subr.bf16.mxu0 %v3311
        %3535 = vmatpush2.bf16.msra.mxu0 %v3310
        %3536 = vmatprep.subr.bf16.mxu0 %v3307
        %3537 = vmatpush2.bf16.msra.mxu0 %v3306
        %3538 = vmatprep.subr.bf16.mxu0 %v3303
        %3539 = vmatpush2.bf16.msra.mxu0 %v3302
        %3540 = vmatprep.subr.bf16.mxu0 %v3299
        %3541 = vmatpush2.bf16.msra.mxu0 %v3298
        %3542 = vmatprep.subr.bf16.mxu0 %v3295
        %3543 = vmatpush2.bf16.msra.mxu0 %v3294
        %3544 = vmatprep.subr.bf16.mxu0 %v3291
        %3545 = vmatpush2.bf16.msra.mxu0 %v3290
        %3546 = vmatprep.mubr.bf16.mxu0 %v813
        %3547 = vmatmul.mubr.bf16.gmra.mxu0 %v812
        %v3548 = vpop.f32.mrf.mxu0
        %v3549 = vadd.f32 %v2857, %v3548
        %v3550 = vpop.f32.mrf.mxu0
        %v3551 = vadd.f32 %v2861, %v3550
        %v3552 = vpop.f32.mrf.mxu0
        %v3553 = vpop.f32.mrf.mxu0
        %3554 = vdwg.mxu0
        %3555 = vmatprep.subr.bf16.mxu0 %v3351
        %3556 = vmatpush1.bf16.msra.mxu0 %v3350
        %3557 = vmatprep.subr.bf16.mxu0 %v3347
        %3558 = vmatpush1.bf16.msra.mxu0 %v3346
        %3559 = vmatprep.subr.bf16.mxu0 %v3343
        %3560 = vmatpush1.bf16.msra.mxu0 %v3342
        %3561 = vmatprep.subr.bf16.mxu0 %v3339
        %3562 = vmatpush1.bf16.msra.mxu0 %v3338
        %3563 = vmatprep.subr.bf16.mxu0 %v3335
        %3564 = vmatpush1.bf16.msra.mxu0 %v3334
        %3565 = vmatprep.subr.bf16.mxu0 %v3331
        %3566 = vmatpush1.bf16.msra.mxu0 %v3330
        %3567 = vmatprep.subr.bf16.mxu0 %v3327
        %3568 = vmatpush1.bf16.msra.mxu0 %v3326
        %3569 = vmatprep.subr.bf16.mxu0 %v3323
        %3570 = vmatpush1.bf16.msra.mxu0 %v3322
        %3571 = vmatprep.subr.bf16.mxu0 %v3383
        %3572 = vmatpush2.bf16.msra.mxu0 %v3382
        %3573 = vmatprep.subr.bf16.mxu0 %v3379
        %3574 = vmatpush2.bf16.msra.mxu0 %v3378
        %3575 = vmatprep.subr.bf16.mxu0 %v3375
        %3576 = vmatpush2.bf16.msra.mxu0 %v3374
        %3577 = vmatprep.subr.bf16.mxu0 %v3371
        %3578 = vmatpush2.bf16.msra.mxu0 %v3370
        %3579 = vmatprep.subr.bf16.mxu0 %v3367
        %3580 = vmatpush2.bf16.msra.mxu0 %v3366
        %3581 = vmatprep.subr.bf16.mxu0 %v3363
        %3582 = vmatpush2.bf16.msra.mxu0 %v3362
        %3583 = vmatprep.subr.bf16.mxu0 %v3359
        %3584 = vmatpush2.bf16.msra.mxu0 %v3358
        %3585 = vmatprep.subr.bf16.mxu0 %v3355
        %3586 = vmatpush2.bf16.msra.mxu0 %v3354
        %3587 = vmatprep.mubr.bf16.mxu0 %v815
        %3588 = vmatmul.mubr.bf16.gmra.mxu0 %v814
        %v3589 = vpop.f32.mrf.mxu0
        %v3590 = vadd.f32 %v3549, %v3589
        %v3591 = vpop.f32.mrf.mxu0
        %v3592 = vadd.f32 %v3551, %v3591
        %v3593 = vpop.f32.mrf.mxu0
        %v3594 = vpop.f32.mrf.mxu0
        %3595 = vdwg.mxu0
        %3596 = vmatprep.subr.bf16.mxu0 %v3289
        %3597 = vmatpush1.bf16.msra.mxu0 %v3288
        %3598 = vmatprep.subr.bf16.mxu0 %v3285
        %3599 = vmatpush1.bf16.msra.mxu0 %v3284
        %3600 = vmatprep.subr.bf16.mxu0 %v3281
        %3601 = vmatpush1.bf16.msra.mxu0 %v3280
        %3602 = vmatprep.subr.bf16.mxu0 %v3277
        %3603 = vmatpush1.bf16.msra.mxu0 %v3276
        %3604 = vmatprep.subr.bf16.mxu0 %v3273
        %3605 = vmatpush1.bf16.msra.mxu0 %v3272
        %3606 = vmatprep.subr.bf16.mxu0 %v3269
        %3607 = vmatpush1.bf16.msra.mxu0 %v3268
        %3608 = vmatprep.subr.bf16.mxu0 %v3265
        %3609 = vmatpush1.bf16.msra.mxu0 %v3264
        %3610 = vmatprep.subr.bf16.mxu0 %v3261
        %3611 = vmatpush1.bf16.msra.mxu0 %v3260
        %3612 = vmatprep.subr.bf16.mxu0 %v3321
        %3613 = vmatpush2.bf16.msra.mxu0 %v3320
        %3614 = vmatprep.subr.bf16.mxu0 %v3317
        %3615 = vmatpush2.bf16.msra.mxu0 %v3316
        %3616 = vmatprep.subr.bf16.mxu0 %v3313
        %3617 = vmatpush2.bf16.msra.mxu0 %v3312
        %3618 = vmatprep.subr.bf16.mxu0 %v3309
        %3619 = vmatpush2.bf16.msra.mxu0 %v3308
        %3620 = vmatprep.subr.bf16.mxu0 %v3305
        %3621 = vmatpush2.bf16.msra.mxu0 %v3304
        %3622 = vmatprep.subr.bf16.mxu0 %v3301
        %3623 = vmatpush2.bf16.msra.mxu0 %v3300
        %3624 = vmatprep.subr.bf16.mxu0 %v3297
        %3625 = vmatpush2.bf16.msra.mxu0 %v3296
        %3626 = vmatprep.subr.bf16.mxu0 %v3293
        %3627 = vmatpush2.bf16.msra.mxu0 %v3292
        %3628 = vmatprep.mubr.bf16.mxu0 %v813
        %3629 = vmatmul.mubr.bf16.gmra.mxu0 %v812
        %v3630 = vpop.f32.mrf.mxu0
        %v3631 = vadd.f32 %v2865, %v3630
        %v3632 = vpop.f32.mrf.mxu0
        %v3633 = vadd.f32 %v2869, %v3632
        %v3634 = vpop.f32.mrf.mxu0
        %v3635 = vpop.f32.mrf.mxu0
        %3636 = vdwg.mxu0
        %3637 = vmatprep.subr.bf16.mxu0 %v3353
        %3638 = vmatpush1.bf16.msra.mxu0 %v3352
        %3639 = vmatprep.subr.bf16.mxu0 %v3349
        %3640 = vmatpush1.bf16.msra.mxu0 %v3348
        %3641 = vmatprep.subr.bf16.mxu0 %v3345
        %3642 = vmatpush1.bf16.msra.mxu0 %v3344
        %3643 = vmatprep.subr.bf16.mxu0 %v3341
        %3644 = vmatpush1.bf16.msra.mxu0 %v3340
        %3645 = vmatprep.subr.bf16.mxu0 %v3337
        %3646 = vmatpush1.bf16.msra.mxu0 %v3336
        %3647 = vmatprep.subr.bf16.mxu0 %v3333
        %3648 = vmatpush1.bf16.msra.mxu0 %v3332
        %3649 = vmatprep.subr.bf16.mxu0 %v3329
        %3650 = vmatpush1.bf16.msra.mxu0 %v3328
        %3651 = vmatprep.subr.bf16.mxu0 %v3325
        %3652 = vmatpush1.bf16.msra.mxu0 %v3324
        %3653 = vmatprep.subr.bf16.mxu0 %v3385
        %3654 = vmatpush2.bf16.msra.mxu0 %v3384
        %3655 = vmatprep.subr.bf16.mxu0 %v3381
        %3656 = vmatpush2.bf16.msra.mxu0 %v3380
        %3657 = vmatprep.subr.bf16.mxu0 %v3377
        %3658 = vmatpush2.bf16.msra.mxu0 %v3376
        %3659 = vmatprep.subr.bf16.mxu0 %v3373
        %3660 = vmatpush2.bf16.msra.mxu0 %v3372
        %3661 = vmatprep.subr.bf16.mxu0 %v3369
        %3662 = vmatpush2.bf16.msra.mxu0 %v3368
        %3663 = vmatprep.subr.bf16.mxu0 %v3365
        %3664 = vmatpush2.bf16.msra.mxu0 %v3364
        %3665 = vmatprep.subr.bf16.mxu0 %v3361
        %3666 = vmatpush2.bf16.msra.mxu0 %v3360
        %3667 = vmatprep.subr.bf16.mxu0 %v3357
        %3668 = vmatpush2.bf16.msra.mxu0 %v3356
        %3669 = vmatprep.mubr.bf16.mxu0 %v815
        %3670 = vmatmul.mubr.bf16.gmra.mxu0 %v814
        %v3671 = vpop.f32.mrf.mxu0
        %v3672 = vadd.f32 %v3631, %v3671
        %v3673 = vpop.f32.mrf.mxu0
        %v3674 = vadd.f32 %v3633, %v3673
        %v3675 = vpop.f32.mrf.mxu0
        %v3676 = vpop.f32.mrf.mxu0
        %3677 = vdwg.mxu0
        %3678 = vmatprep.subr.mxu0 0.0
        %3679 = vmatpush1.xpose.msra.mxu0 0.0
        %3680 = vmatprep.subr.mxu0 0.0
        %3681 = vmatpush1.xpose.msra.mxu0 0.0
        %3682 = vmatprep.subr.mxu0 0.0
        %3683 = vmatpush1.xpose.msra.mxu0 0.0
        %3684 = vmatprep.subr.mxu0 0.0
        %3685 = vmatpush1.xpose.msra.mxu0 0.0
        %3686 = vmatprep.subr.mxu0 0.0
        %3687 = vmatpush1.xpose.msra.mxu0 0.0
        %3688 = vmatprep.subr.mxu0 0.0
        %3689 = vmatpush1.xpose.msra.mxu0 0.0
        %3690 = vmatprep.subr.mxu0 0.0
        %3691 = vmatpush1.xpose.msra.mxu0 0.0
        %3692 = vmatprep.subr.mxu0 0.0
        %3693 = vmatpush1.xpose.msra.mxu0 0.0
        %3694 = vmatprep.subr.mxu0 0.0
        %3695 = vmatpush1.xpose.msra.mxu0 0.0
        %3696 = vmatprep.subr.mxu0 0.0
        %3697 = vmatpush1.xpose.msra.mxu0 0.0
        %3698 = vmatprep.subr.mxu0 0.0
        %3699 = vmatpush1.xpose.msra.mxu0 0.0
        %3700 = vmatprep.subr.mxu0 0.0
        %3701 = vmatpush1.xpose.msra.mxu0 0.0
        %3702 = vmatprep.subr.mxu0 0.0
        %3703 = vmatpush1.xpose.msra.mxu0 0.0
        %3704 = vmatprep.subr.mxu0 0.0
        %3705 = vmatpush1.xpose.msra.mxu0 0.0
        %3706 = vmatprep.subr.mxu0 0.0
        %3707 = vmatpush1.xpose.msra.mxu0 0.0
        %3708 = vmatprep.subr.mxu0 0.0
        %3709 = vmatpush1.xpose.msra.mxu0 %v2636
        %3710 = vmatprep.subr.mxu0 0.0
        %3711 = vmatpush2.xpose.msra.mxu0 0.0
        %3712 = vmatprep.subr.mxu0 0.0
        %3713 = vmatpush2.xpose.msra.mxu0 0.0
        %3714 = vmatprep.subr.mxu0 0.0
        %3715 = vmatpush2.xpose.msra.mxu0 0.0
        %3716 = vmatprep.subr.mxu0 0.0
        %3717 = vmatpush2.xpose.msra.mxu0 0.0
        %3718 = vmatprep.subr.mxu0 0.0
        %3719 = vmatpush2.xpose.msra.mxu0 0.0
        %3720 = vmatprep.subr.mxu0 0.0
        %3721 = vmatpush2.xpose.msra.mxu0 0.0
        %3722 = vmatprep.subr.mxu0 0.0
        %3723 = vmatpush2.xpose.msra.mxu0 0.0
        %3724 = vmatprep.subr.mxu0 0.0
        %3725 = vmatpush2.xpose.msra.mxu0 0.0
        %3726 = vmatprep.subr.mxu0 0.0
        %3727 = vmatpush2.xpose.msra.mxu0 0.0
        %3728 = vmatprep.subr.mxu0 0.0
        %3729 = vmatpush2.xpose.msra.mxu0 0.0
        %3730 = vmatprep.subr.mxu0 0.0
        %3731 = vmatpush2.xpose.msra.mxu0 0.0
        %3732 = vmatprep.subr.mxu0 0.0
        %3733 = vmatpush2.xpose.msra.mxu0 0.0
        %3734 = vmatprep.subr.mxu0 0.0
        %3735 = vmatpush2.xpose.msra.mxu0 0.0
        %3736 = vmatprep.subr.mxu0 0.0
        %3737 = vmatpush2.xpose.msra.mxu0 0.0
        %3738 = vmatprep.subr.mxu0 0.0
        %3739 = vmatpush2.xpose.msra.mxu0 0.0
        %3740 = vmatprep.subr.mxu0 0.0
        %3741 = vmatpush2.xpose.msra.mxu0 0.0
        %3742 = vmatprep.mubr.f32.mxu0 0.0
        %3743 = vmatmul.mubr.f32.gmra.mxu0 %v1682
        %v3744 = vpop.f32.mrf.mxu0
        %v3745 = vadd.f32 0.0, %v3744
        %v3746 = vpop.f32.mrf.mxu0
        %3747 = vdwg.mxu0
        %vm3748 = vcmask 64512
        %v3749 = vsel %vm3748, %v3745, -inf
        %3750 = vmax.xlane.f32.xlu0 %v3749
        %v3751 = vpop.xlane.xlu0 %3750
        %v3752 = vsub.f32 %v3745, %v3751
        %v3753 = vmul.f32 %v3752, 1.442695
        %v3754 = vpow.pop %v3753
        %v3755 = vsel %vm3748, %v3754, 0.0
        %3756 = vadd.xlane.f32.xlu0 %v3755
        %v3757 = vpop.xlane.xlu0 %3756
        %v3758 = vrcp.pop %v3757
        %v3759 = vmul.f32 %v3754, %v3758
        %v3761 = vsel %vm3748, %v3759, 0
        %3763 = vmatprep.subr.mxu0 0.0
        %3764 = vmatpush1.msra.mxu0 0.0
        %3765 = vmatprep.subr.mxu0 0.0
        %3766 = vmatpush1.msra.mxu0 0.0
        %3767 = vmatprep.subr.mxu0 0.0
        %3768 = vmatpush1.msra.mxu0 0.0
        %3769 = vmatprep.subr.mxu0 0.0
        %3770 = vmatpush1.msra.mxu0 0.0
        %3771 = vmatprep.subr.mxu0 0.0
        %3772 = vmatpush1.msra.mxu0 0.0
        %3773 = vmatprep.subr.mxu0 0.0
        %3774 = vmatpush1.msra.mxu0 0.0
        %3775 = vmatprep.subr.mxu0 0.0
        %3776 = vmatpush1.msra.mxu0 0.0
        %3777 = vmatprep.subr.mxu0 0.0
        %3778 = vmatpush1.msra.mxu0 0.0
        %3779 = vmatprep.subr.mxu0 0.0
        %3780 = vmatpush1.msra.mxu0 0.0
        %3781 = vmatprep.subr.mxu0 0.0
        %3782 = vmatpush1.msra.mxu0 0.0
        %3783 = vmatprep.subr.mxu0 0.0
        %3784 = vmatpush1.msra.mxu0 0.0
        %3785 = vmatprep.subr.mxu0 0.0
        %3786 = vmatpush1.msra.mxu0 0.0
        %3787 = vmatprep.subr.mxu0 0.0
        %3788 = vmatpush1.msra.mxu0 0.0
        %3789 = vmatprep.subr.mxu0 0.0
        %3790 = vmatpush1.msra.mxu0 0.0
        %3791 = vmatprep.subr.mxu0 0.0
        %3792 = vmatpush1.msra.mxu0 0.0
        %3793 = vmatprep.subr.mxu0 0.0
        %3794 = vmatpush1.msra.mxu0 %v3590
        %3795 = vmatprep.subr.mxu0 0.0
        %3796 = vmatpush2.msra.mxu0 0.0
        %3797 = vmatprep.subr.mxu0 0.0
        %3798 = vmatpush2.msra.mxu0 0.0
        %3799 = vmatprep.subr.mxu0 0.0
        %3800 = vmatpush2.msra.mxu0 0.0
        %3801 = vmatprep.subr.mxu0 0.0
        %3802 = vmatpush2.msra.mxu0 0.0
        %3803 = vmatprep.subr.mxu0 0.0
        %3804 = vmatpush2.msra.mxu0 0.0
        %3805 = vmatprep.subr.mxu0 0.0
        %3806 = vmatpush2.msra.mxu0 0.0
        %3807 = vmatprep.subr.mxu0 0.0
        %3808 = vmatpush2.msra.mxu0 0.0
        %3809 = vmatprep.subr.mxu0 0.0
        %3810 = vmatpush2.msra.mxu0 0.0
        %3811 = vmatprep.subr.mxu0 0.0
        %3812 = vmatpush2.msra.mxu0 0.0
        %3813 = vmatprep.subr.mxu0 0.0
        %3814 = vmatpush2.msra.mxu0 0.0
        %3815 = vmatprep.subr.mxu0 0.0
        %3816 = vmatpush2.msra.mxu0 0.0
        %3817 = vmatprep.subr.mxu0 0.0
        %3818 = vmatpush2.msra.mxu0 0.0
        %3819 = vmatprep.subr.mxu0 0.0
        %3820 = vmatpush2.msra.mxu0 0.0
        %3821 = vmatprep.subr.mxu0 0.0
        %3822 = vmatpush2.msra.mxu0 0.0
        %3823 = vmatprep.subr.mxu0 0.0
        %3824 = vmatpush2.msra.mxu0 0.0
        %3825 = vmatprep.subr.mxu0 0.0
        %3826 = vmatpush2.msra.mxu0 0.0
        %3827 = vmatprep.mubr.f32.mxu0 0.0
        %3828 = vmatmul.mubr.f32.gmra.mxu0 %v3761
        %v3829 = vpop.f32.mrf.mxu0
        %v3830 = vadd.f32 0.0, %v3829
        %v3831 = vpop.f32.mrf.mxu0
        %3832 = vdwg.mxu0
        %v3833 = vpack.c.bf16 %v3830, %v3830
        %3834 = vmatprep.subr.mxu0 0.0
        %3835 = vmatpush1.xpose.msra.mxu0 0.0
        %3836 = vmatprep.subr.mxu0 0.0
        %3837 = vmatpush1.xpose.msra.mxu0 0.0
        %3838 = vmatprep.subr.mxu0 0.0
        %3839 = vmatpush1.xpose.msra.mxu0 0.0
        %3840 = vmatprep.subr.mxu0 0.0
        %3841 = vmatpush1.xpose.msra.mxu0 0.0
        %3842 = vmatprep.subr.mxu0 0.0
        %3843 = vmatpush1.xpose.msra.mxu0 0.0
        %3844 = vmatprep.subr.mxu0 0.0
        %3845 = vmatpush1.xpose.msra.mxu0 0.0
        %3846 = vmatprep.subr.mxu0 0.0
        %3847 = vmatpush1.xpose.msra.mxu0 0.0
        %3848 = vmatprep.subr.mxu0 0.0
        %3849 = vmatpush1.xpose.msra.mxu0 0.0
        %3850 = vmatprep.subr.mxu0 0.0
        %3851 = vmatpush1.xpose.msra.mxu0 0.0
        %3852 = vmatprep.subr.mxu0 0.0
        %3853 = vmatpush1.xpose.msra.mxu0 0.0
        %3854 = vmatprep.subr.mxu0 0.0
        %3855 = vmatpush1.xpose.msra.mxu0 0.0
        %3856 = vmatprep.subr.mxu0 0.0
        %3857 = vmatpush1.xpose.msra.mxu0 0.0
        %3858 = vmatprep.subr.mxu0 0.0
        %3859 = vmatpush1.xpose.msra.mxu0 0.0
        %3860 = vmatprep.subr.mxu0 0.0
        %3861 = vmatpush1.xpose.msra.mxu0 0.0
        %3862 = vmatprep.subr.mxu0 0.0
        %3863 = vmatpush1.xpose.msra.mxu0 0.0
        %3864 = vmatprep.subr.mxu0 0.0
        %3865 = vmatpush1.xpose.msra.mxu0 %v2638
        %3866 = vmatprep.subr.mxu0 0.0
        %3867 = vmatpush2.xpose.msra.mxu0 0.0
        %3868 = vmatprep.subr.mxu0 0.0
        %3869 = vmatpush2.xpose.msra.mxu0 0.0
        %3870 = vmatprep.subr.mxu0 0.0
        %3871 = vmatpush2.xpose.msra.mxu0 0.0
        %3872 = vmatprep.subr.mxu0 0.0
        %3873 = vmatpush2.xpose.msra.mxu0 0.0
        %3874 = vmatprep.subr.mxu0 0.0
        %3875 = vmatpush2.xpose.msra.mxu0 0.0
        %3876 = vmatprep.subr.mxu0 0.0
        %3877 = vmatpush2.xpose.msra.mxu0 0.0
        %3878 = vmatprep.subr.mxu0 0.0
        %3879 = vmatpush2.xpose.msra.mxu0 0.0
        %3880 = vmatprep.subr.mxu0 0.0
        %3881 = vmatpush2.xpose.msra.mxu0 0.0
        %3882 = vmatprep.subr.mxu0 0.0
        %3883 = vmatpush2.xpose.msra.mxu0 0.0
        %3884 = vmatprep.subr.mxu0 0.0
        %3885 = vmatpush2.xpose.msra.mxu0 0.0
        %3886 = vmatprep.subr.mxu0 0.0
        %3887 = vmatpush2.xpose.msra.mxu0 0.0
        %3888 = vmatprep.subr.mxu0 0.0
        %3889 = vmatpush2.xpose.msra.mxu0 0.0
        %3890 = vmatprep.subr.mxu0 0.0
        %3891 = vmatpush2.xpose.msra.mxu0 0.0
        %3892 = vmatprep.subr.mxu0 0.0
        %3893 = vmatpush2.xpose.msra.mxu0 0.0
        %3894 = vmatprep.subr.mxu0 0.0
        %3895 = vmatpush2.xpose.msra.mxu0 0.0
        %3896 = vmatprep.subr.mxu0 0.0
        %3897 = vmatpush2.xpose.msra.mxu0 0.0
        %3898 = vmatprep.mubr.f32.mxu0 0.0
        %3899 = vmatmul.mubr.f32.gmra.mxu0 %v1684
        %v3900 = vpop.f32.mrf.mxu0
        %v3901 = vadd.f32 0.0, %v3900
        %v3902 = vpop.f32.mrf.mxu0
        %3903 = vdwg.mxu0
        %v3904 = vsel %vm3748, %v3901, -inf
        %3905 = vmax.xlane.f32.xlu0 %v3904
        %v3906 = vpop.xlane.xlu0 %3905
        %v3907 = vsub.f32 %v3901, %v3906
        %v3908 = vmul.f32 %v3907, 1.442695
        %v3909 = vpow.pop %v3908
        %v3910 = vsel %vm3748, %v3909, 0.0
        %3911 = vadd.xlane.f32.xlu0 %v3910
        %v3912 = vpop.xlane.xlu0 %3911
        %v3913 = vrcp.pop %v3912
        %v3914 = vmul.f32 %v3909, %v3913
        %v3916 = vsel %vm3748, %v3914, 0
        %3918 = vmatprep.subr.mxu0 0.0
        %3919 = vmatpush1.msra.mxu0 0.0
        %3920 = vmatprep.subr.mxu0 0.0
        %3921 = vmatpush1.msra.mxu0 0.0
        %3922 = vmatprep.subr.mxu0 0.0
        %3923 = vmatpush1.msra.mxu0 0.0
        %3924 = vmatprep.subr.mxu0 0.0
        %3925 = vmatpush1.msra.mxu0 0.0
        %3926 = vmatprep.subr.mxu0 0.0
        %3927 = vmatpush1.msra.mxu0 0.0
        %3928 = vmatprep.subr.mxu0 0.0
        %3929 = vmatpush1.msra.mxu0 0.0
        %3930 = vmatprep.subr.mxu0 0.0
        %3931 = vmatpush1.msra.mxu0 0.0
        %3932 = vmatprep.subr.mxu0 0.0
        %3933 = vmatpush1.msra.mxu0 0.0
        %3934 = vmatprep.subr.mxu0 0.0
        %3935 = vmatpush1.msra.mxu0 0.0
        %3936 = vmatprep.subr.mxu0 0.0
        %3937 = vmatpush1.msra.mxu0 0.0
        %3938 = vmatprep.subr.mxu0 0.0
        %3939 = vmatpush1.msra.mxu0 0.0
        %3940 = vmatprep.subr.mxu0 0.0
        %3941 = vmatpush1.msra.mxu0 0.0
        %3942 = vmatprep.subr.mxu0 0.0
        %3943 = vmatpush1.msra.mxu0 0.0
        %3944 = vmatprep.subr.mxu0 0.0
        %3945 = vmatpush1.msra.mxu0 0.0
        %3946 = vmatprep.subr.mxu0 0.0
        %3947 = vmatpush1.msra.mxu0 0.0
        %3948 = vmatprep.subr.mxu0 0.0
        %3949 = vmatpush1.msra.mxu0 %v3592
        %3950 = vmatprep.subr.mxu0 0.0
        %3951 = vmatpush2.msra.mxu0 0.0
        %3952 = vmatprep.subr.mxu0 0.0
        %3953 = vmatpush2.msra.mxu0 0.0
        %3954 = vmatprep.subr.mxu0 0.0
        %3955 = vmatpush2.msra.mxu0 0.0
        %3956 = vmatprep.subr.mxu0 0.0
        %3957 = vmatpush2.msra.mxu0 0.0
        %3958 = vmatprep.subr.mxu0 0.0
        %3959 = vmatpush2.msra.mxu0 0.0
        %3960 = vmatprep.subr.mxu0 0.0
        %3961 = vmatpush2.msra.mxu0 0.0
        %3962 = vmatprep.subr.mxu0 0.0
        %3963 = vmatpush2.msra.mxu0 0.0
        %3964 = vmatprep.subr.mxu0 0.0
        %3965 = vmatpush2.msra.mxu0 0.0
        %3966 = vmatprep.subr.mxu0 0.0
        %3967 = vmatpush2.msra.mxu0 0.0
        %3968 = vmatprep.subr.mxu0 0.0
        %3969 = vmatpush2.msra.mxu0 0.0
        %3970 = vmatprep.subr.mxu0 0.0
        %3971 = vmatpush2.msra.mxu0 0.0
        %3972 = vmatprep.subr.mxu0 0.0
        %3973 = vmatpush2.msra.mxu0 0.0
        %3974 = vmatprep.subr.mxu0 0.0
        %3975 = vmatpush2.msra.mxu0 0.0
        %3976 = vmatprep.subr.mxu0 0.0
        %3977 = vmatpush2.msra.mxu0 0.0
        %3978 = vmatprep.subr.mxu0 0.0
        %3979 = vmatpush2.msra.mxu0 0.0
        %3980 = vmatprep.subr.mxu0 0.0
        %3981 = vmatpush2.msra.mxu0 0.0
        %3982 = vmatprep.mubr.f32.mxu0 0.0
        %3983 = vmatmul.mubr.f32.gmra.mxu0 %v3916
        %v3984 = vpop.f32.mrf.mxu0
        %v3985 = vadd.f32 0.0, %v3984
        %v3986 = vpop.f32.mrf.mxu0
        %3987 = vdwg.mxu0
        %v3988 = vpack.c.bf16 %v3985, %v3985
        %3989 = vmatprep.subr.mxu0 0.0
        %3990 = vmatpush1.xpose.msra.mxu0 0.0
        %3991 = vmatprep.subr.mxu0 0.0
        %3992 = vmatpush1.xpose.msra.mxu0 0.0
        %3993 = vmatprep.subr.mxu0 0.0
        %3994 = vmatpush1.xpose.msra.mxu0 0.0
        %3995 = vmatprep.subr.mxu0 0.0
        %3996 = vmatpush1.xpose.msra.mxu0 0.0
        %3997 = vmatprep.subr.mxu0 0.0
        %3998 = vmatpush1.xpose.msra.mxu0 0.0
        %3999 = vmatprep.subr.mxu0 0.0
        %4000 = vmatpush1.xpose.msra.mxu0 0.0
        %4001 = vmatprep.subr.mxu0 0.0
        %4002 = vmatpush1.xpose.msra.mxu0 0.0
        %4003 = vmatprep.subr.mxu0 0.0
        %4004 = vmatpush1.xpose.msra.mxu0 0.0
        %4005 = vmatprep.subr.mxu0 0.0
        %4006 = vmatpush1.xpose.msra.mxu0 0.0
        %4007 = vmatprep.subr.mxu0 0.0
        %4008 = vmatpush1.xpose.msra.mxu0 0.0
        %4009 = vmatprep.subr.mxu0 0.0
        %4010 = vmatpush1.xpose.msra.mxu0 0.0
        %4011 = vmatprep.subr.mxu0 0.0
        %4012 = vmatpush1.xpose.msra.mxu0 0.0
        %4013 = vmatprep.subr.mxu0 0.0
        %4014 = vmatpush1.xpose.msra.mxu0 0.0
        %4015 = vmatprep.subr.mxu0 0.0
        %4016 = vmatpush1.xpose.msra.mxu0 0.0
        %4017 = vmatprep.subr.mxu0 0.0
        %4018 = vmatpush1.xpose.msra.mxu0 0.0
        %4019 = vmatprep.subr.mxu0 0.0
        %4020 = vmatpush1.xpose.msra.mxu0 %v2718
        %4021 = vmatprep.subr.mxu0 0.0
        %4022 = vmatpush2.xpose.msra.mxu0 0.0
        %4023 = vmatprep.subr.mxu0 0.0
        %4024 = vmatpush2.xpose.msra.mxu0 0.0
        %4025 = vmatprep.subr.mxu0 0.0
        %4026 = vmatpush2.xpose.msra.mxu0 0.0
        %4027 = vmatprep.subr.mxu0 0.0
        %4028 = vmatpush2.xpose.msra.mxu0 0.0
        %4029 = vmatprep.subr.mxu0 0.0
        %4030 = vmatpush2.xpose.msra.mxu0 0.0
        %4031 = vmatprep.subr.mxu0 0.0
        %4032 = vmatpush2.xpose.msra.mxu0 0.0
        %4033 = vmatprep.subr.mxu0 0.0
        %4034 = vmatpush2.xpose.msra.mxu0 0.0
        %4035 = vmatprep.subr.mxu0 0.0
        %4036 = vmatpush2.xpose.msra.mxu0 0.0
        %4037 = vmatprep.subr.mxu0 0.0
        %4038 = vmatpush2.xpose.msra.mxu0 0.0
        %4039 = vmatprep.subr.mxu0 0.0
        %4040 = vmatpush2.xpose.msra.mxu0 0.0
        %4041 = vmatprep.subr.mxu0 0.0
        %4042 = vmatpush2.xpose.msra.mxu0 0.0
        %4043 = vmatprep.subr.mxu0 0.0
        %4044 = vmatpush2.xpose.msra.mxu0 0.0
        %4045 = vmatprep.subr.mxu0 0.0
        %4046 = vmatpush2.xpose.msra.mxu0 0.0
        %4047 = vmatprep.subr.mxu0 0.0
        %4048 = vmatpush2.xpose.msra.mxu0 0.0
        %4049 = vmatprep.subr.mxu0 0.0
        %4050 = vmatpush2.xpose.msra.mxu0 0.0
        %4051 = vmatprep.subr.mxu0 0.0
        %4052 = vmatpush2.xpose.msra.mxu0 0.0
        %4053 = vmatprep.mubr.f32.mxu0 0.0
        %4054 = vmatmul.mubr.f32.gmra.mxu0 %v1764
        %v4055 = vpop.f32.mrf.mxu0
        %v4056 = vadd.f32 0.0, %v4055
        %v4057 = vpop.f32.mrf.mxu0
        %4058 = vdwg.mxu0
        %v4059 = vsel %vm3748, %v4056, -inf
        %4060 = vmax.xlane.f32.xlu0 %v4059
        %v4061 = vpop.xlane.xlu0 %4060
        %v4062 = vsub.f32 %v4056, %v4061
        %v4063 = vmul.f32 %v4062, 1.442695
        %v4064 = vpow.pop %v4063
        %v4065 = vsel %vm3748, %v4064, 0.0
        %4066 = vadd.xlane.f32.xlu0 %v4065
        %v4067 = vpop.xlane.xlu0 %4066
        %v4068 = vrcp.pop %v4067
        %v4069 = vmul.f32 %v4064, %v4068
        %v4071 = vsel %vm3748, %v4069, 0
        %4073 = vmatprep.subr.mxu0 0.0
        %4074 = vmatpush1.msra.mxu0 0.0
        %4075 = vmatprep.subr.mxu0 0.0
        %4076 = vmatpush1.msra.mxu0 0.0
        %4077 = vmatprep.subr.mxu0 0.0
        %4078 = vmatpush1.msra.mxu0 0.0
        %4079 = vmatprep.subr.mxu0 0.0
        %4080 = vmatpush1.msra.mxu0 0.0
        %4081 = vmatprep.subr.mxu0 0.0
        %4082 = vmatpush1.msra.mxu0 0.0
        %4083 = vmatprep.subr.mxu0 0.0
        %4084 = vmatpush1.msra.mxu0 0.0
        %4085 = vmatprep.subr.mxu0 0.0
        %4086 = vmatpush1.msra.mxu0 0.0
        %4087 = vmatprep.subr.mxu0 0.0
        %4088 = vmatpush1.msra.mxu0 0.0
        %4089 = vmatprep.subr.mxu0 0.0
        %4090 = vmatpush1.msra.mxu0 0.0
        %4091 = vmatprep.subr.mxu0 0.0
        %4092 = vmatpush1.msra.mxu0 0.0
        %4093 = vmatprep.subr.mxu0 0.0
        %4094 = vmatpush1.msra.mxu0 0.0
        %4095 = vmatprep.subr.mxu0 0.0
        %4096 = vmatpush1.msra.mxu0 0.0
        %4097 = vmatprep.subr.mxu0 0.0
        %4098 = vmatpush1.msra.mxu0 0.0
        %4099 = vmatprep.subr.mxu0 0.0
        %4100 = vmatpush1.msra.mxu0 0.0
        %4101 = vmatprep.subr.mxu0 0.0
        %4102 = vmatpush1.msra.mxu0 0.0
        %4103 = vmatprep.subr.mxu0 0.0
        %4104 = vmatpush1.msra.mxu0 %v3672
        %4105 = vmatprep.subr.mxu0 0.0
        %4106 = vmatpush2.msra.mxu0 0.0
        %4107 = vmatprep.subr.mxu0 0.0
        %4108 = vmatpush2.msra.mxu0 0.0
        %4109 = vmatprep.subr.mxu0 0.0
        %4110 = vmatpush2.msra.mxu0 0.0
        %4111 = vmatprep.subr.mxu0 0.0
        %4112 = vmatpush2.msra.mxu0 0.0
        %4113 = vmatprep.subr.mxu0 0.0
        %4114 = vmatpush2.msra.mxu0 0.0
        %4115 = vmatprep.subr.mxu0 0.0
        %4116 = vmatpush2.msra.mxu0 0.0
        %4117 = vmatprep.subr.mxu0 0.0
        %4118 = vmatpush2.msra.mxu0 0.0
        %4119 = vmatprep.subr.mxu0 0.0
        %4120 = vmatpush2.msra.mxu0 0.0
        %4121 = vmatprep.subr.mxu0 0.0
        %4122 = vmatpush2.msra.mxu0 0.0
        %4123 = vmatprep.subr.mxu0 0.0
        %4124 = vmatpush2.msra.mxu0 0.0
        %4125 = vmatprep.subr.mxu0 0.0
        %4126 = vmatpush2.msra.mxu0 0.0
        %4127 = vmatprep.subr.mxu0 0.0
        %4128 = vmatpush2.msra.mxu0 0.0
        %4129 = vmatprep.subr.mxu0 0.0
        %4130 = vmatpush2.msra.mxu0 0.0
        %4131 = vmatprep.subr.mxu0 0.0
        %4132 = vmatpush2.msra.mxu0 0.0
        %4133 = vmatprep.subr.mxu0 0.0
        %4134 = vmatpush2.msra.mxu0 0.0
        %4135 = vmatprep.subr.mxu0 0.0
        %4136 = vmatpush2.msra.mxu0 0.0
        %4137 = vmatprep.mubr.f32.mxu0 0.0
        %4138 = vmatmul.mubr.f32.gmra.mxu0 %v4071
        %v4139 = vpop.f32.mrf.mxu0
        %v4140 = vadd.f32 0.0, %v4139
        %v4141 = vpop.f32.mrf.mxu0
        %4142 = vdwg.mxu0
        %v4143 = vpack.c.bf16 %v4140, %v4140
        %4144 = vmatprep.subr.mxu0 0.0
        %4145 = vmatpush1.xpose.msra.mxu0 0.0
        %4146 = vmatprep.subr.mxu0 0.0
        %4147 = vmatpush1.xpose.msra.mxu0 0.0
        %4148 = vmatprep.subr.mxu0 0.0
        %4149 = vmatpush1.xpose.msra.mxu0 0.0
        %4150 = vmatprep.subr.mxu0 0.0
        %4151 = vmatpush1.xpose.msra.mxu0 0.0
        %4152 = vmatprep.subr.mxu0 0.0
        %4153 = vmatpush1.xpose.msra.mxu0 0.0
        %4154 = vmatprep.subr.mxu0 0.0
        %4155 = vmatpush1.xpose.msra.mxu0 0.0
        %4156 = vmatprep.subr.mxu0 0.0
        %4157 = vmatpush1.xpose.msra.mxu0 0.0
        %4158 = vmatprep.subr.mxu0 0.0
        %4159 = vmatpush1.xpose.msra.mxu0 0.0
        %4160 = vmatprep.subr.mxu0 0.0
        %4161 = vmatpush1.xpose.msra.mxu0 0.0
        %4162 = vmatprep.subr.mxu0 0.0
        %4163 = vmatpush1.xpose.msra.mxu0 0.0
        %4164 = vmatprep.subr.mxu0 0.0
        %4165 = vmatpush1.xpose.msra.mxu0 0.0
        %4166 = vmatprep.subr.mxu0 0.0
        %4167 = vmatpush1.xpose.msra.mxu0 0.0
        %4168 = vmatprep.subr.mxu0 0.0
        %4169 = vmatpush1.xpose.msra.mxu0 0.0
        %4170 = vmatprep.subr.mxu0 0.0
        %4171 = vmatpush1.xpose.msra.mxu0 0.0
        %4172 = vmatprep.subr.mxu0 0.0
        %4173 = vmatpush1.xpose.msra.mxu0 0.0
        %4174 = vmatprep.subr.mxu0 0.0
        %4175 = vmatpush1.xpose.msra.mxu0 %v2720
        %4176 = vmatprep.subr.mxu0 0.0
        %4177 = vmatpush2.xpose.msra.mxu0 0.0
        %4178 = vmatprep.subr.mxu0 0.0
        %4179 = vmatpush2.xpose.msra.mxu0 0.0
        %4180 = vmatprep.subr.mxu0 0.0
        %4181 = vmatpush2.xpose.msra.mxu0 0.0
        %4182 = vmatprep.subr.mxu0 0.0
        %4183 = vmatpush2.xpose.msra.mxu0 0.0
        %4184 = vmatprep.subr.mxu0 0.0
        %4185 = vmatpush2.xpose.msra.mxu0 0.0
        %4186 = vmatprep.subr.mxu0 0.0
        %4187 = vmatpush2.xpose.msra.mxu0 0.0
        %4188 = vmatprep.subr.mxu0 0.0
        %4189 = vmatpush2.xpose.msra.mxu0 0.0
        %4190 = vmatprep.subr.mxu0 0.0
        %4191 = vmatpush2.xpose.msra.mxu0 0.0
        %4192 = vmatprep.subr.mxu0 0.0
        %4193 = vmatpush2.xpose.msra.mxu0 0.0
        %4194 = vmatprep.subr.mxu0 0.0
        %4195 = vmatpush2.xpose.msra.mxu0 0.0
        %4196 = vmatprep.subr.mxu0 0.0
        %4197 = vmatpush2.xpose.msra.mxu0 0.0
        %4198 = vmatprep.subr.mxu0 0.0
        %4199 = vmatpush2.xpose.msra.mxu0 0.0
        %4200 = vmatprep.subr.mxu0 0.0
        %4201 = vmatpush2.xpose.msra.mxu0 0.0
        %4202 = vmatprep.subr.mxu0 0.0
        %4203 = vmatpush2.xpose.msra.mxu0 0.0
        %4204 = vmatprep.subr.mxu0 0.0
        %4205 = vmatpush2.xpose.msra.mxu0 0.0
        %4206 = vmatprep.subr.mxu0 0.0
        %4207 = vmatpush2.xpose.msra.mxu0 0.0
        %4208 = vmatprep.mubr.f32.mxu0 0.0
        %4209 = vmatmul.mubr.f32.gmra.mxu0 %v1766
        %v4210 = vpop.f32.mrf.mxu0
        %v4211 = vadd.f32 0.0, %v4210
        %v4212 = vpop.f32.mrf.mxu0
        %4213 = vdwg.mxu0
        %v4214 = vsel %vm3748, %v4211, -inf
        %4215 = vmax.xlane.f32.xlu0 %v4214
        %v4216 = vpop.xlane.xlu0 %4215
        %v4217 = vsub.f32 %v4211, %v4216
        %v4218 = vmul.f32 %v4217, 1.442695
        %v4219 = vpow.pop %v4218
        %v4220 = vsel %vm3748, %v4219, 0.0
        %4221 = vadd.xlane.f32.xlu0 %v4220
        %v4222 = vpop.xlane.xlu0 %4221
        %v4223 = vrcp.pop %v4222
        %v4224 = vmul.f32 %v4219, %v4223
        %v4226 = vsel %vm3748, %v4224, 0
        %4228 = vmatprep.subr.mxu0 0.0
        %4229 = vmatpush1.msra.mxu0 0.0
        %4230 = vmatprep.subr.mxu0 0.0
        %4231 = vmatpush1.msra.mxu0 0.0
        %4232 = vmatprep.subr.mxu0 0.0
        %4233 = vmatpush1.msra.mxu0 0.0
        %4234 = vmatprep.subr.mxu0 0.0
        %4235 = vmatpush1.msra.mxu0 0.0
        %4236 = vmatprep.subr.mxu0 0.0
        %4237 = vmatpush1.msra.mxu0 0.0
        %4238 = vmatprep.subr.mxu0 0.0
        %4239 = vmatpush1.msra.mxu0 0.0
        %4240 = vmatprep.subr.mxu0 0.0
        %4241 = vmatpush1.msra.mxu0 0.0
        %4242 = vmatprep.subr.mxu0 0.0
        %4243 = vmatpush1.msra.mxu0 0.0
        %4244 = vmatprep.subr.mxu0 0.0
        %4245 = vmatpush1.msra.mxu0 0.0
        %4246 = vmatprep.subr.mxu0 0.0
        %4247 = vmatpush1.msra.mxu0 0.0
        %4248 = vmatprep.subr.mxu0 0.0
        %4249 = vmatpush1.msra.mxu0 0.0
        %4250 = vmatprep.subr.mxu0 0.0
        %4251 = vmatpush1.msra.mxu0 0.0
        %4252 = vmatprep.subr.mxu0 0.0
        %4253 = vmatpush1.msra.mxu0 0.0
        %4254 = vmatprep.subr.mxu0 0.0
        %4255 = vmatpush1.msra.mxu0 0.0
        %4256 = vmatprep.subr.mxu0 0.0
        %4257 = vmatpush1.msra.mxu0 0.0
        %4258 = vmatprep.subr.mxu0 0.0
        %4259 = vmatpush1.msra.mxu0 %v3674
        %4260 = vmatprep.subr.mxu0 0.0
        %4261 = vmatpush2.msra.mxu0 0.0
        %4262 = vmatprep.subr.mxu0 0.0
        %4263 = vmatpush2.msra.mxu0 0.0
        %4264 = vmatprep.subr.mxu0 0.0
        %4265 = vmatpush2.msra.mxu0 0.0
        %4266 = vmatprep.subr.mxu0 0.0
        %4267 = vmatpush2.msra.mxu0 0.0
        %4268 = vmatprep.subr.mxu0 0.0
        %4269 = vmatpush2.msra.mxu0 0.0
        %4270 = vmatprep.subr.mxu0 0.0
        %4271 = vmatpush2.msra.mxu0 0.0
        %4272 = vmatprep.subr.mxu0 0.0
        %4273 = vmatpush2.msra.mxu0 0.0
        %4274 = vmatprep.subr.mxu0 0.0
        %4275 = vmatpush2.msra.mxu0 0.0
        %4276 = vmatprep.subr.mxu0 0.0
        %4277 = vmatpush2.msra.mxu0 0.0
        %4278 = vmatprep.subr.mxu0 0.0
        %4279 = vmatpush2.msra.mxu0 0.0
        %4280 = vmatprep.subr.mxu0 0.0
        %4281 = vmatpush2.msra.mxu0 0.0
        %4282 = vmatprep.subr.mxu0 0.0
        %4283 = vmatpush2.msra.mxu0 0.0
        %4284 = vmatprep.subr.mxu0 0.0
        %4285 = vmatpush2.msra.mxu0 0.0
        %4286 = vmatprep.subr.mxu0 0.0
        %4287 = vmatpush2.msra.mxu0 0.0
        %4288 = vmatprep.subr.mxu0 0.0
        %4289 = vmatpush2.msra.mxu0 0.0
        %4290 = vmatprep.subr.mxu0 0.0
        %4291 = vmatpush2.msra.mxu0 0.0
        %4292 = vmatprep.mubr.f32.mxu0 0.0
        %4293 = vmatmul.mubr.f32.gmra.mxu0 %v4226
        %v4294 = vpop.f32.mrf.mxu0
        %v4295 = vadd.f32 0.0, %v4294
        %v4296 = vpop.f32.mrf.mxu0
        %4297 = vdwg.mxu0
        %v4298 = vpack.c.bf16 %v4295, %v4295
        %v4299 = vld [vmem:[#allocation11] sm:$0xff]
        %v4300 = vld [vmem:[#allocation11 + $0x8] sm:$0xff]
        %v4301 = vld [vmem:[#allocation11 + $0x10] sm:$0xff]
        %v4302 = vld [vmem:[#allocation11 + $0x18] sm:$0xff]
        %v4303 = vld [vmem:[#allocation11 + $0x20] sm:$0xff]
        %v4304 = vld [vmem:[#allocation11 + $0x28] sm:$0xff]
        %v4305 = vld [vmem:[#allocation11 + $0x30] sm:$0xff]
        %v4306 = vld [vmem:[#allocation11 + $0x38] sm:$0xff]
        %v4307 = vld [vmem:[#allocation11 + $0x40] sm:$0xff]
        %v4308 = vld [vmem:[#allocation11 + $0x48] sm:$0xff]
        %v4309 = vld [vmem:[#allocation11 + $0x50] sm:$0xff]
        %v4310 = vld [vmem:[#allocation11 + $0x58] sm:$0xff]
        %v4311 = vld [vmem:[#allocation11 + $0x60] sm:$0xff]
        %v4312 = vld [vmem:[#allocation11 + $0x68] sm:$0xff]
        %v4313 = vld [vmem:[#allocation11 + $0x70] sm:$0xff]
        %v4314 = vld [vmem:[#allocation11 + $0x78] sm:$0xff]
        %v4315 = vld [vmem:[#allocation11 + $0x80] sm:$0xff]
        %v4316 = vld [vmem:[#allocation11 + $0x88] sm:$0xff]
        %v4317 = vld [vmem:[#allocation11 + $0x90] sm:$0xff]
        %v4318 = vld [vmem:[#allocation11 + $0x98] sm:$0xff]
        %v4319 = vld [vmem:[#allocation11 + $0xa0] sm:$0xff]
        %v4320 = vld [vmem:[#allocation11 + $0xa8] sm:$0xff]
        %v4321 = vld [vmem:[#allocation11 + $0xb0] sm:$0xff]
        %v4322 = vld [vmem:[#allocation11 + $0xb8] sm:$0xff]
        %v4323 = vld [vmem:[#allocation11 + $0xc0] sm:$0xff]
        %v4324 = vld [vmem:[#allocation11 + $0xc8] sm:$0xff]
        %v4325 = vld [vmem:[#allocation11 + $0xd0] sm:$0xff]
        %v4326 = vld [vmem:[#allocation11 + $0xd8] sm:$0xff]
        %v4327 = vld [vmem:[#allocation11 + $0xe0] sm:$0xff]
        %v4328 = vld [vmem:[#allocation11 + $0xe8] sm:$0xff]
        %v4329 = vld [vmem:[#allocation11 + $0xf0] sm:$0xff]
        %v4330 = vld [vmem:[#allocation11 + $0xf8] sm:$0xff]
        %v4331 = vld [vmem:[#allocation11 + $0x100] sm:$0xff]
        %v4332 = vld [vmem:[#allocation11 + $0x108] sm:$0xff]
        %v4333 = vld [vmem:[#allocation11 + $0x110] sm:$0xff]
        %v4334 = vld [vmem:[#allocation11 + $0x118] sm:$0xff]
        %v4335 = vld [vmem:[#allocation11 + $0x120] sm:$0xff]
        %v4336 = vld [vmem:[#allocation11 + $0x128] sm:$0xff]
        %v4337 = vld [vmem:[#allocation11 + $0x130] sm:$0xff]
        %v4338 = vld [vmem:[#allocation11 + $0x138] sm:$0xff]
        %v4339 = vld [vmem:[#allocation11 + $0x140] sm:$0xff]
        %v4340 = vld [vmem:[#allocation11 + $0x148] sm:$0xff]
        %v4341 = vld [vmem:[#allocation11 + $0x150] sm:$0xff]
        %v4342 = vld [vmem:[#allocation11 + $0x158] sm:$0xff]
        %v4343 = vld [vmem:[#allocation11 + $0x160] sm:$0xff]
        %v4344 = vld [vmem:[#allocation11 + $0x168] sm:$0xff]
        %v4345 = vld [vmem:[#allocation11 + $0x170] sm:$0xff]
        %v4346 = vld [vmem:[#allocation11 + $0x178] sm:$0xff]
        %v4347 = vld [vmem:[#allocation11 + $0x180] sm:$0xff]
        %v4348 = vld [vmem:[#allocation11 + $0x188] sm:$0xff]
        %v4349 = vld [vmem:[#allocation11 + $0x190] sm:$0xff]
        %v4350 = vld [vmem:[#allocation11 + $0x198] sm:$0xff]
        %v4351 = vld [vmem:[#allocation11 + $0x1a0] sm:$0xff]
        %v4352 = vld [vmem:[#allocation11 + $0x1a8] sm:$0xff]
        %v4353 = vld [vmem:[#allocation11 + $0x1b0] sm:$0xff]
        %v4354 = vld [vmem:[#allocation11 + $0x1b8] sm:$0xff]
        %v4355 = vld [vmem:[#allocation11 + $0x1c0] sm:$0xff]
        %v4356 = vld [vmem:[#allocation11 + $0x1c8] sm:$0xff]
        %v4357 = vld [vmem:[#allocation11 + $0x1d0] sm:$0xff]
        %v4358 = vld [vmem:[#allocation11 + $0x1d8] sm:$0xff]
        %v4359 = vld [vmem:[#allocation11 + $0x1e0] sm:$0xff]
        %v4360 = vld [vmem:[#allocation11 + $0x1e8] sm:$0xff]
        %v4361 = vld [vmem:[#allocation11 + $0x1f0] sm:$0xff]
        %v4362 = vld [vmem:[#allocation11 + $0x1f8] sm:$0xff]
        %v4363 = vld [vmem:[#allocation11 + $0x200] sm:$0xff]
        %v4364 = vld [vmem:[#allocation11 + $0x208] sm:$0xff]
        %v4365 = vld [vmem:[#allocation11 + $0x210] sm:$0xff]
        %v4366 = vld [vmem:[#allocation11 + $0x218] sm:$0xff]
        %v4367 = vld [vmem:[#allocation11 + $0x220] sm:$0xff]
        %v4368 = vld [vmem:[#allocation11 + $0x228] sm:$0xff]
        %v4369 = vld [vmem:[#allocation11 + $0x230] sm:$0xff]
        %v4370 = vld [vmem:[#allocation11 + $0x238] sm:$0xff]
        %v4371 = vld [vmem:[#allocation11 + $0x240] sm:$0xff]
        %v4372 = vld [vmem:[#allocation11 + $0x248] sm:$0xff]
        %v4373 = vld [vmem:[#allocation11 + $0x250] sm:$0xff]
        %v4374 = vld [vmem:[#allocation11 + $0x258] sm:$0xff]
        %v4375 = vld [vmem:[#allocation11 + $0x260] sm:$0xff]
        %v4376 = vld [vmem:[#allocation11 + $0x268] sm:$0xff]
        %v4377 = vld [vmem:[#allocation11 + $0x270] sm:$0xff]
        %v4378 = vld [vmem:[#allocation11 + $0x278] sm:$0xff]
        %v4379 = vld [vmem:[#allocation11 + $0x280] sm:$0xff]
        %v4380 = vld [vmem:[#allocation11 + $0x288] sm:$0xff]
        %v4381 = vld [vmem:[#allocation11 + $0x290] sm:$0xff]
        %v4382 = vld [vmem:[#allocation11 + $0x298] sm:$0xff]
        %v4383 = vld [vmem:[#allocation11 + $0x2a0] sm:$0xff]
        %v4384 = vld [vmem:[#allocation11 + $0x2a8] sm:$0xff]
        %v4385 = vld [vmem:[#allocation11 + $0x2b0] sm:$0xff]
        %v4386 = vld [vmem:[#allocation11 + $0x2b8] sm:$0xff]
        %v4387 = vld [vmem:[#allocation11 + $0x2c0] sm:$0xff]
        %v4388 = vld [vmem:[#allocation11 + $0x2c8] sm:$0xff]
        %v4389 = vld [vmem:[#allocation11 + $0x2d0] sm:$0xff]
        %v4390 = vld [vmem:[#allocation11 + $0x2d8] sm:$0xff]
        %v4391 = vld [vmem:[#allocation11 + $0x2e0] sm:$0xff]
        %v4392 = vld [vmem:[#allocation11 + $0x2e8] sm:$0xff]
        %v4393 = vld [vmem:[#allocation11 + $0x2f0] sm:$0xff]
        %v4394 = vld [vmem:[#allocation11 + $0x2f8] sm:$0xff]
        %v4395 = vld [vmem:[#allocation11 + $0x300] sm:$0xff]
        %v4396 = vld [vmem:[#allocation11 + $0x308] sm:$0xff]
        %v4397 = vld [vmem:[#allocation11 + $0x310] sm:$0xff]
        %v4398 = vld [vmem:[#allocation11 + $0x318] sm:$0xff]
        %v4399 = vld [vmem:[#allocation11 + $0x320] sm:$0xff]
        %v4400 = vld [vmem:[#allocation11 + $0x328] sm:$0xff]
        %v4401 = vld [vmem:[#allocation11 + $0x330] sm:$0xff]
        %v4402 = vld [vmem:[#allocation11 + $0x338] sm:$0xff]
        %v4403 = vld [vmem:[#allocation11 + $0x340] sm:$0xff]
        %v4404 = vld [vmem:[#allocation11 + $0x348] sm:$0xff]
        %v4405 = vld [vmem:[#allocation11 + $0x350] sm:$0xff]
        %v4406 = vld [vmem:[#allocation11 + $0x358] sm:$0xff]
        %v4407 = vld [vmem:[#allocation11 + $0x360] sm:$0xff]
        %v4408 = vld [vmem:[#allocation11 + $0x368] sm:$0xff]
        %v4409 = vld [vmem:[#allocation11 + $0x370] sm:$0xff]
        %v4410 = vld [vmem:[#allocation11 + $0x378] sm:$0xff]
        %v4411 = vld [vmem:[#allocation11 + $0x380] sm:$0xff]
        %v4412 = vld [vmem:[#allocation11 + $0x388] sm:$0xff]
        %v4413 = vld [vmem:[#allocation11 + $0x390] sm:$0xff]
        %v4414 = vld [vmem:[#allocation11 + $0x398] sm:$0xff]
        %v4415 = vld [vmem:[#allocation11 + $0x3a0] sm:$0xff]
        %v4416 = vld [vmem:[#allocation11 + $0x3a8] sm:$0xff]
        %v4417 = vld [vmem:[#allocation11 + $0x3b0] sm:$0xff]
        %v4418 = vld [vmem:[#allocation11 + $0x3b8] sm:$0xff]
        %v4419 = vld [vmem:[#allocation11 + $0x3c0] sm:$0xff]
        %v4420 = vld [vmem:[#allocation11 + $0x3c8] sm:$0xff]
        %v4421 = vld [vmem:[#allocation11 + $0x3d0] sm:$0xff]
        %v4422 = vld [vmem:[#allocation11 + $0x3d8] sm:$0xff]
        %v4423 = vld [vmem:[#allocation11 + $0x3e0] sm:$0xff]
        %v4424 = vld [vmem:[#allocation11 + $0x3e8] sm:$0xff]
        %v4425 = vld [vmem:[#allocation11 + $0x3f0] sm:$0xff]
        %v4426 = vld [vmem:[#allocation11 + $0x3f8] sm:$0xff]
        %v4555 = vunpack.c.l.b16 %v4299
        %v4556 = vunpack.c.h.b16 %v4299
        %v4557 = vunpack.c.l.b16 %v4300
        %v4558 = vunpack.c.h.b16 %v4300
        %v4559 = vunpack.c.l.b16 %v4301
        %v4560 = vunpack.c.h.b16 %v4301
        %v4561 = vunpack.c.l.b16 %v4302
        %v4562 = vunpack.c.h.b16 %v4302
        %v4563 = vunpack.c.l.b16 %v4303
        %v4564 = vunpack.c.h.b16 %v4303
        %v4565 = vunpack.c.l.b16 %v4304
        %v4566 = vunpack.c.h.b16 %v4304
        %v4567 = vunpack.c.l.b16 %v4305
        %v4568 = vunpack.c.h.b16 %v4305
        %v4569 = vunpack.c.l.b16 %v4306
        %v4570 = vunpack.c.h.b16 %v4306
        %v4571 = vunpack.c.l.b16 %v4307
        %v4572 = vunpack.c.h.b16 %v4307
        %v4573 = vunpack.c.l.b16 %v4308
        %v4574 = vunpack.c.h.b16 %v4308
        %v4575 = vunpack.c.l.b16 %v4309
        %v4576 = vunpack.c.h.b16 %v4309
        %v4577 = vunpack.c.l.b16 %v4310
        %v4578 = vunpack.c.h.b16 %v4310
        %v4579 = vunpack.c.l.b16 %v4311
        %v4580 = vunpack.c.h.b16 %v4311
        %v4581 = vunpack.c.l.b16 %v4312
        %v4582 = vunpack.c.h.b16 %v4312
        %v4583 = vunpack.c.l.b16 %v4313
        %v4584 = vunpack.c.h.b16 %v4313
        %v4585 = vunpack.c.l.b16 %v4314
        %v4586 = vunpack.c.h.b16 %v4314
        %v4587 = vunpack.c.l.b16 %v4315
        %v4588 = vunpack.c.h.b16 %v4315
        %v4589 = vunpack.c.l.b16 %v4316
        %v4590 = vunpack.c.h.b16 %v4316
        %v4591 = vunpack.c.l.b16 %v4317
        %v4592 = vunpack.c.h.b16 %v4317
        %v4593 = vunpack.c.l.b16 %v4318
        %v4594 = vunpack.c.h.b16 %v4318
        %v4595 = vunpack.c.l.b16 %v4319
        %v4596 = vunpack.c.h.b16 %v4319
        %v4597 = vunpack.c.l.b16 %v4320
        %v4598 = vunpack.c.h.b16 %v4320
        %v4599 = vunpack.c.l.b16 %v4321
        %v4600 = vunpack.c.h.b16 %v4321
        %v4601 = vunpack.c.l.b16 %v4322
        %v4602 = vunpack.c.h.b16 %v4322
        %v4603 = vunpack.c.l.b16 %v4323
        %v4604 = vunpack.c.h.b16 %v4323
        %v4605 = vunpack.c.l.b16 %v4324
        %v4606 = vunpack.c.h.b16 %v4324
        %v4607 = vunpack.c.l.b16 %v4325
        %v4608 = vunpack.c.h.b16 %v4325
        %v4609 = vunpack.c.l.b16 %v4326
        %v4610 = vunpack.c.h.b16 %v4326
        %v4611 = vunpack.c.l.b16 %v4327
        %v4612 = vunpack.c.h.b16 %v4327
        %v4613 = vunpack.c.l.b16 %v4328
        %v4614 = vunpack.c.h.b16 %v4328
        %v4615 = vunpack.c.l.b16 %v4329
        %v4616 = vunpack.c.h.b16 %v4329
        %v4617 = vunpack.c.l.b16 %v4330
        %v4618 = vunpack.c.h.b16 %v4330
        %v4619 = vunpack.c.l.b16 %v4331
        %v4620 = vunpack.c.h.b16 %v4331
        %v4621 = vunpack.c.l.b16 %v4332
        %v4622 = vunpack.c.h.b16 %v4332
        %v4623 = vunpack.c.l.b16 %v4333
        %v4624 = vunpack.c.h.b16 %v4333
        %v4625 = vunpack.c.l.b16 %v4334
        %v4626 = vunpack.c.h.b16 %v4334
        %v4627 = vunpack.c.l.b16 %v4335
        %v4628 = vunpack.c.h.b16 %v4335
        %v4629 = vunpack.c.l.b16 %v4336
        %v4630 = vunpack.c.h.b16 %v4336
        %v4631 = vunpack.c.l.b16 %v4337
        %v4632 = vunpack.c.h.b16 %v4337
        %v4633 = vunpack.c.l.b16 %v4338
        %v4634 = vunpack.c.h.b16 %v4338
        %v4635 = vunpack.c.l.b16 %v4339
        %v4636 = vunpack.c.h.b16 %v4339
        %v4637 = vunpack.c.l.b16 %v4340
        %v4638 = vunpack.c.h.b16 %v4340
        %v4639 = vunpack.c.l.b16 %v4341
        %v4640 = vunpack.c.h.b16 %v4341
        %v4641 = vunpack.c.l.b16 %v4342
        %v4642 = vunpack.c.h.b16 %v4342
        %v4643 = vunpack.c.l.b16 %v4343
        %v4644 = vunpack.c.h.b16 %v4343
        %v4645 = vunpack.c.l.b16 %v4344
        %v4646 = vunpack.c.h.b16 %v4344
        %v4647 = vunpack.c.l.b16 %v4345
        %v4648 = vunpack.c.h.b16 %v4345
        %v4649 = vunpack.c.l.b16 %v4346
        %v4650 = vunpack.c.h.b16 %v4346
        %v4651 = vunpack.c.l.b16 %v4347
        %v4652 = vunpack.c.h.b16 %v4347
        %v4653 = vunpack.c.l.b16 %v4348
        %v4654 = vunpack.c.h.b16 %v4348
        %v4655 = vunpack.c.l.b16 %v4349
        %v4656 = vunpack.c.h.b16 %v4349
        %v4657 = vunpack.c.l.b16 %v4350
        %v4658 = vunpack.c.h.b16 %v4350
        %v4659 = vunpack.c.l.b16 %v4351
        %v4660 = vunpack.c.h.b16 %v4351
        %v4661 = vunpack.c.l.b16 %v4352
        %v4662 = vunpack.c.h.b16 %v4352
        %v4663 = vunpack.c.l.b16 %v4353
        %v4664 = vunpack.c.h.b16 %v4353
        %v4665 = vunpack.c.l.b16 %v4354
        %v4666 = vunpack.c.h.b16 %v4354
        %v4667 = vunpack.c.l.b16 %v4355
        %v4668 = vunpack.c.h.b16 %v4355
        %v4669 = vunpack.c.l.b16 %v4356
        %v4670 = vunpack.c.h.b16 %v4356
        %v4671 = vunpack.c.l.b16 %v4357
        %v4672 = vunpack.c.h.b16 %v4357
        %v4673 = vunpack.c.l.b16 %v4358
        %v4674 = vunpack.c.h.b16 %v4358
        %v4675 = vunpack.c.l.b16 %v4359
        %v4676 = vunpack.c.h.b16 %v4359
        %v4677 = vunpack.c.l.b16 %v4360
        %v4678 = vunpack.c.h.b16 %v4360
        %v4679 = vunpack.c.l.b16 %v4361
        %v4680 = vunpack.c.h.b16 %v4361
        %v4681 = vunpack.c.l.b16 %v4362
        %v4682 = vunpack.c.h.b16 %v4362
        %v4683 = vunpack.c.l.b16 %v4363
        %v4684 = vunpack.c.h.b16 %v4363
        %v4685 = vunpack.c.l.b16 %v4364
        %v4686 = vunpack.c.h.b16 %v4364
        %v4687 = vunpack.c.l.b16 %v4365
        %v4688 = vunpack.c.h.b16 %v4365
        %v4689 = vunpack.c.l.b16 %v4366
        %v4690 = vunpack.c.h.b16 %v4366
        %v4691 = vunpack.c.l.b16 %v4367
        %v4692 = vunpack.c.h.b16 %v4367
        %v4693 = vunpack.c.l.b16 %v4368
        %v4694 = vunpack.c.h.b16 %v4368
        %v4695 = vunpack.c.l.b16 %v4369
        %v4696 = vunpack.c.h.b16 %v4369
        %v4697 = vunpack.c.l.b16 %v4370
        %v4698 = vunpack.c.h.b16 %v4370
        %v4699 = vunpack.c.l.b16 %v4371
        %v4700 = vunpack.c.h.b16 %v4371
        %v4701 = vunpack.c.l.b16 %v4372
        %v4702 = vunpack.c.h.b16 %v4372
        %v4703 = vunpack.c.l.b16 %v4373
        %v4704 = vunpack.c.h.b16 %v4373
        %v4705 = vunpack.c.l.b16 %v4374
        %v4706 = vunpack.c.h.b16 %v4374
        %v4707 = vunpack.c.l.b16 %v4375
        %v4708 = vunpack.c.h.b16 %v4375
        %v4709 = vunpack.c.l.b16 %v4376
        %v4710 = vunpack.c.h.b16 %v4376
        %v4711 = vunpack.c.l.b16 %v4377
        %v4712 = vunpack.c.h.b16 %v4377
        %v4713 = vunpack.c.l.b16 %v4378
        %v4714 = vunpack.c.h.b16 %v4378
        %v4715 = vunpack.c.l.b16 %v4379
        %v4716 = vunpack.c.h.b16 %v4379
        %v4717 = vunpack.c.l.b16 %v4380
        %v4718 = vunpack.c.h.b16 %v4380
        %v4719 = vunpack.c.l.b16 %v4381
        %v4720 = vunpack.c.h.b16 %v4381
        %v4721 = vunpack.c.l.b16 %v4382
        %v4722 = vunpack.c.h.b16 %v4382
        %v4723 = vunpack.c.l.b16 %v4383
        %v4724 = vunpack.c.h.b16 %v4383
        %v4725 = vunpack.c.l.b16 %v4384
        %v4726 = vunpack.c.h.b16 %v4384
        %v4727 = vunpack.c.l.b16 %v4385
        %v4728 = vunpack.c.h.b16 %v4385
        %v4729 = vunpack.c.l.b16 %v4386
        %v4730 = vunpack.c.h.b16 %v4386
        %v4731 = vunpack.c.l.b16 %v4387
        %v4732 = vunpack.c.h.b16 %v4387
        %v4733 = vunpack.c.l.b16 %v4388
        %v4734 = vunpack.c.h.b16 %v4388
        %v4735 = vunpack.c.l.b16 %v4389
        %v4736 = vunpack.c.h.b16 %v4389
        %v4737 = vunpack.c.l.b16 %v4390
        %v4738 = vunpack.c.h.b16 %v4390
        %v4739 = vunpack.c.l.b16 %v4391
        %v4740 = vunpack.c.h.b16 %v4391
        %v4741 = vunpack.c.l.b16 %v4392
        %v4742 = vunpack.c.h.b16 %v4392
        %v4743 = vunpack.c.l.b16 %v4393
        %v4744 = vunpack.c.h.b16 %v4393
        %v4745 = vunpack.c.l.b16 %v4394
        %v4746 = vunpack.c.h.b16 %v4394
        %v4747 = vunpack.c.l.b16 %v4395
        %v4748 = vunpack.c.h.b16 %v4395
        %v4749 = vunpack.c.l.b16 %v4396
        %v4750 = vunpack.c.h.b16 %v4396
        %v4751 = vunpack.c.l.b16 %v4397
        %v4752 = vunpack.c.h.b16 %v4397
        %v4753 = vunpack.c.l.b16 %v4398
        %v4754 = vunpack.c.h.b16 %v4398
        %v4755 = vunpack.c.l.b16 %v4399
        %v4756 = vunpack.c.h.b16 %v4399
        %v4757 = vunpack.c.l.b16 %v4400
        %v4758 = vunpack.c.h.b16 %v4400
        %v4759 = vunpack.c.l.b16 %v4401
        %v4760 = vunpack.c.h.b16 %v4401
        %v4761 = vunpack.c.l.b16 %v4402
        %v4762 = vunpack.c.h.b16 %v4402
        %v4763 = vunpack.c.l.b16 %v4403
        %v4764 = vunpack.c.h.b16 %v4403
        %v4765 = vunpack.c.l.b16 %v4404
        %v4766 = vunpack.c.h.b16 %v4404
        %v4767 = vunpack.c.l.b16 %v4405
        %v4768 = vunpack.c.h.b16 %v4405
        %v4769 = vunpack.c.l.b16 %v4406
        %v4770 = vunpack.c.h.b16 %v4406
        %v4771 = vunpack.c.l.b16 %v4407
        %v4772 = vunpack.c.h.b16 %v4407
        %v4773 = vunpack.c.l.b16 %v4408
        %v4774 = vunpack.c.h.b16 %v4408
        %v4775 = vunpack.c.l.b16 %v4409
        %v4776 = vunpack.c.h.b16 %v4409
        %v4777 = vunpack.c.l.b16 %v4410
        %v4778 = vunpack.c.h.b16 %v4410
        %v4779 = vunpack.c.l.b16 %v4411
        %v4780 = vunpack.c.h.b16 %v4411
        %v4781 = vunpack.c.l.b16 %v4412
        %v4782 = vunpack.c.h.b16 %v4412
        %v4783 = vunpack.c.l.b16 %v4413
        %v4784 = vunpack.c.h.b16 %v4413
        %v4785 = vunpack.c.l.b16 %v4414
        %v4786 = vunpack.c.h.b16 %v4414
        %v4787 = vunpack.c.l.b16 %v4415
        %v4788 = vunpack.c.h.b16 %v4415
        %v4789 = vunpack.c.l.b16 %v4416
        %v4790 = vunpack.c.h.b16 %v4416
        %v4791 = vunpack.c.l.b16 %v4417
        %v4792 = vunpack.c.h.b16 %v4417
        %v4793 = vunpack.c.l.b16 %v4418
        %v4794 = vunpack.c.h.b16 %v4418
        %v4795 = vunpack.c.l.b16 %v4419
        %v4796 = vunpack.c.h.b16 %v4419
        %v4797 = vunpack.c.l.b16 %v4420
        %v4798 = vunpack.c.h.b16 %v4420
        %v4799 = vunpack.c.l.b16 %v4421
        %v4800 = vunpack.c.h.b16 %v4421
        %v4801 = vunpack.c.l.b16 %v4422
        %v4802 = vunpack.c.h.b16 %v4422
        %v4803 = vunpack.c.l.b16 %v4423
        %v4804 = vunpack.c.h.b16 %v4423
        %v4805 = vunpack.c.l.b16 %v4424
        %v4806 = vunpack.c.h.b16 %v4424
        %v4807 = vunpack.c.l.b16 %v4425
        %v4808 = vunpack.c.h.b16 %v4425
        %v4809 = vunpack.c.l.b16 %v4426
        %v4810 = vunpack.c.h.b16 %v4426
        %v4811 = vpack.c.b16 %v4559, %v4555
        %v4812 = vpack.c.b16 %v4560, %v4556
        %v4813 = vpack.c.b16 %v4561, %v4557
        %v4814 = vpack.c.b16 %v4562, %v4558
        %v4815 = vpack.c.b16 %v4567, %v4563
        %v4816 = vpack.c.b16 %v4568, %v4564
        %v4817 = vpack.c.b16 %v4569, %v4565
        %v4818 = vpack.c.b16 %v4570, %v4566
        %v4819 = vpack.c.b16 %v4575, %v4571
        %v4820 = vpack.c.b16 %v4576, %v4572
        %v4821 = vpack.c.b16 %v4577, %v4573
        %v4822 = vpack.c.b16 %v4578, %v4574
        %v4823 = vpack.c.b16 %v4583, %v4579
        %v4824 = vpack.c.b16 %v4584, %v4580
        %v4825 = vpack.c.b16 %v4585, %v4581
        %v4826 = vpack.c.b16 %v4586, %v4582
        %v4827 = vpack.c.b16 %v4591, %v4587
        %v4828 = vpack.c.b16 %v4592, %v4588
        %v4829 = vpack.c.b16 %v4593, %v4589
        %v4830 = vpack.c.b16 %v4594, %v4590
        %v4831 = vpack.c.b16 %v4599, %v4595
        %v4832 = vpack.c.b16 %v4600, %v4596
        %v4833 = vpack.c.b16 %v4601, %v4597
        %v4834 = vpack.c.b16 %v4602, %v4598
        %v4835 = vpack.c.b16 %v4607, %v4603
        %v4836 = vpack.c.b16 %v4608, %v4604
        %v4837 = vpack.c.b16 %v4609, %v4605
        %v4838 = vpack.c.b16 %v4610, %v4606
        %v4839 = vpack.c.b16 %v4615, %v4611
        %v4840 = vpack.c.b16 %v4616, %v4612
        %v4841 = vpack.c.b16 %v4617, %v4613
        %v4842 = vpack.c.b16 %v4618, %v4614
        %v4843 = vpack.c.b16 %v4623, %v4619
        %v4844 = vpack.c.b16 %v4624, %v4620
        %v4845 = vpack.c.b16 %v4625, %v4621
        %v4846 = vpack.c.b16 %v4626, %v4622
        %v4847 = vpack.c.b16 %v4631, %v4627
        %v4848 = vpack.c.b16 %v4632, %v4628
        %v4849 = vpack.c.b16 %v4633, %v4629
        %v4850 = vpack.c.b16 %v4634, %v4630
        %v4851 = vpack.c.b16 %v4639, %v4635
        %v4852 = vpack.c.b16 %v4640, %v4636
        %v4853 = vpack.c.b16 %v4641, %v4637
        %v4854 = vpack.c.b16 %v4642, %v4638
        %v4855 = vpack.c.b16 %v4647, %v4643
        %v4856 = vpack.c.b16 %v4648, %v4644
        %v4857 = vpack.c.b16 %v4649, %v4645
        %v4858 = vpack.c.b16 %v4650, %v4646
        %v4859 = vpack.c.b16 %v4655, %v4651
        %v4860 = vpack.c.b16 %v4656, %v4652
        %v4861 = vpack.c.b16 %v4657, %v4653
        %v4862 = vpack.c.b16 %v4658, %v4654
        %v4863 = vpack.c.b16 %v4663, %v4659
        %v4864 = vpack.c.b16 %v4664, %v4660
        %v4865 = vpack.c.b16 %v4665, %v4661
        %v4866 = vpack.c.b16 %v4666, %v4662
        %v4867 = vpack.c.b16 %v4671, %v4667
        %v4868 = vpack.c.b16 %v4672, %v4668
        %v4869 = vpack.c.b16 %v4673, %v4669
        %v4870 = vpack.c.b16 %v4674, %v4670
        %v4871 = vpack.c.b16 %v4679, %v4675
        %v4872 = vpack.c.b16 %v4680, %v4676
        %v4873 = vpack.c.b16 %v4681, %v4677
        %v4874 = vpack.c.b16 %v4682, %v4678
        %v4875 = vpack.c.b16 %v4687, %v4683
        %v4876 = vpack.c.b16 %v4688, %v4684
        %v4877 = vpack.c.b16 %v4689, %v4685
        %v4878 = vpack.c.b16 %v4690, %v4686
        %v4879 = vpack.c.b16 %v4695, %v4691
        %v4880 = vpack.c.b16 %v4696, %v4692
        %v4881 = vpack.c.b16 %v4697, %v4693
        %v4882 = vpack.c.b16 %v4698, %v4694
        %v4883 = vpack.c.b16 %v4703, %v4699
        %v4884 = vpack.c.b16 %v4704, %v4700
        %v4885 = vpack.c.b16 %v4705, %v4701
        %v4886 = vpack.c.b16 %v4706, %v4702
        %v4887 = vpack.c.b16 %v4711, %v4707
        %v4888 = vpack.c.b16 %v4712, %v4708
        %v4889 = vpack.c.b16 %v4713, %v4709
        %v4890 = vpack.c.b16 %v4714, %v4710
        %v4891 = vpack.c.b16 %v4719, %v4715
        %v4892 = vpack.c.b16 %v4720, %v4716
        %v4893 = vpack.c.b16 %v4721, %v4717
        %v4894 = vpack.c.b16 %v4722, %v4718
        %v4895 = vpack.c.b16 %v4727, %v4723
        %v4896 = vpack.c.b16 %v4728, %v4724
        %v4897 = vpack.c.b16 %v4729, %v4725
        %v4898 = vpack.c.b16 %v4730, %v4726
        %v4899 = vpack.c.b16 %v4735, %v4731
        %v4900 = vpack.c.b16 %v4736, %v4732
        %v4901 = vpack.c.b16 %v4737, %v4733
        %v4902 = vpack.c.b16 %v4738, %v4734
        %v4903 = vpack.c.b16 %v4743, %v4739
        %v4904 = vpack.c.b16 %v4744, %v4740
        %v4905 = vpack.c.b16 %v4745, %v4741
        %v4906 = vpack.c.b16 %v4746, %v4742
        %v4907 = vpack.c.b16 %v4751, %v4747
        %v4908 = vpack.c.b16 %v4752, %v4748
        %v4909 = vpack.c.b16 %v4753, %v4749
        %v4910 = vpack.c.b16 %v4754, %v4750
        %v4911 = vpack.c.b16 %v4759, %v4755
        %v4912 = vpack.c.b16 %v4760, %v4756
        %v4913 = vpack.c.b16 %v4761, %v4757
        %v4914 = vpack.c.b16 %v4762, %v4758
        %v4915 = vpack.c.b16 %v4767, %v4763
        %v4916 = vpack.c.b16 %v4768, %v4764
        %v4917 = vpack.c.b16 %v4769, %v4765
        %v4918 = vpack.c.b16 %v4770, %v4766
        %v4919 = vpack.c.b16 %v4775, %v4771
        %v4920 = vpack.c.b16 %v4776, %v4772
        %v4921 = vpack.c.b16 %v4777, %v4773
        %v4922 = vpack.c.b16 %v4778, %v4774
        %v4923 = vpack.c.b16 %v4783, %v4779
        %v4924 = vpack.c.b16 %v4784, %v4780
        %v4925 = vpack.c.b16 %v4785, %v4781
        %v4926 = vpack.c.b16 %v4786, %v4782
        %v4927 = vpack.c.b16 %v4791, %v4787
        %v4928 = vpack.c.b16 %v4792, %v4788
        %v4929 = vpack.c.b16 %v4793, %v4789
        %v4930 = vpack.c.b16 %v4794, %v4790
        %v4931 = vpack.c.b16 %v4799, %v4795
        %v4932 = vpack.c.b16 %v4800, %v4796
        %v4933 = vpack.c.b16 %v4801, %v4797
        %v4934 = vpack.c.b16 %v4802, %v4798
        %v4935 = vpack.c.b16 %v4807, %v4803
        %v4936 = vpack.c.b16 %v4808, %v4804
        %v4937 = vpack.c.b16 %v4809, %v4805
        %v4938 = vpack.c.b16 %v4810, %v4806
        %5067 = vmatprep.subr.bf16.mxu0 %v4840
        %5068 = vmatpush1.bf16.msra.mxu0 %v4839
        %5069 = vmatprep.subr.bf16.mxu0 %v4836
        %5070 = vmatpush1.bf16.msra.mxu0 %v4835
        %5071 = vmatprep.subr.bf16.mxu0 %v4832
        %5072 = vmatpush1.bf16.msra.mxu0 %v4831
        %5073 = vmatprep.subr.bf16.mxu0 %v4828
        %5074 = vmatpush1.bf16.msra.mxu0 %v4827
        %5075 = vmatprep.subr.bf16.mxu0 %v4824
        %5076 = vmatpush1.bf16.msra.mxu0 %v4823
        %5077 = vmatprep.subr.bf16.mxu0 %v4820
        %5078 = vmatpush1.bf16.msra.mxu0 %v4819
        %5079 = vmatprep.subr.bf16.mxu0 %v4816
        %5080 = vmatpush1.bf16.msra.mxu0 %v4815
        %5081 = vmatprep.subr.bf16.mxu0 %v4812
        %5082 = vmatpush1.bf16.msra.mxu0 %v4811
        %5083 = vmatprep.subr.bf16.mxu0 %v4872
        %5084 = vmatpush2.bf16.msra.mxu0 %v4871
        %5085 = vmatprep.subr.bf16.mxu0 %v4868
        %5086 = vmatpush2.bf16.msra.mxu0 %v4867
        %5087 = vmatprep.subr.bf16.mxu0 %v4864
        %5088 = vmatpush2.bf16.msra.mxu0 %v4863
        %5089 = vmatprep.subr.bf16.mxu0 %v4860
        %5090 = vmatpush2.bf16.msra.mxu0 %v4859
        %5091 = vmatprep.subr.bf16.mxu0 %v4856
        %5092 = vmatpush2.bf16.msra.mxu0 %v4855
        %5093 = vmatprep.subr.bf16.mxu0 %v4852
        %5094 = vmatpush2.bf16.msra.mxu0 %v4851
        %5095 = vmatprep.subr.bf16.mxu0 %v4848
        %5096 = vmatpush2.bf16.msra.mxu0 %v4847
        %5097 = vmatprep.subr.bf16.mxu0 %v4844
        %5098 = vmatpush2.bf16.msra.mxu0 %v4843
        %5099 = vmatprep.mubr.bf16.mxu0 %v3988
        %5100 = vmatmul.mubr.bf16.gmra.mxu0 %v3833
        %v5101 = vpop.f32.mrf.mxu0
        %v5102 = vadd.f32 0.0, %v5101
        %v5103 = vpop.f32.mrf.mxu0
        %v5104 = vadd.f32 0.0, %v5103
        %v5105 = vpop.f32.mrf.mxu0
        %v5106 = vpop.f32.mrf.mxu0
        %5107 = vdwg.mxu0
        %5108 = vmatprep.subr.bf16.mxu0 %v4904
        %5109 = vmatpush1.bf16.msra.mxu0 %v4903
        %5110 = vmatprep.subr.bf16.mxu0 %v4900
        %5111 = vmatpush1.bf16.msra.mxu0 %v4899
        %5112 = vmatprep.subr.bf16.mxu0 %v4896
        %5113 = vmatpush1.bf16.msra.mxu0 %v4895
        %5114 = vmatprep.subr.bf16.mxu0 %v4892
        %5115 = vmatpush1.bf16.msra.mxu0 %v4891
        %5116 = vmatprep.subr.bf16.mxu0 %v4888
        %5117 = vmatpush1.bf16.msra.mxu0 %v4887
        %5118 = vmatprep.subr.bf16.mxu0 %v4884
        %5119 = vmatpush1.bf16.msra.mxu0 %v4883
        %5120 = vmatprep.subr.bf16.mxu0 %v4880
        %5121 = vmatpush1.bf16.msra.mxu0 %v4879
        %5122 = vmatprep.subr.bf16.mxu0 %v4876
        %5123 = vmatpush1.bf16.msra.mxu0 %v4875
        %5124 = vmatprep.subr.bf16.mxu0 %v4936
        %5125 = vmatpush2.bf16.msra.mxu0 %v4935
        %5126 = vmatprep.subr.bf16.mxu0 %v4932
        %5127 = vmatpush2.bf16.msra.mxu0 %v4931
        %5128 = vmatprep.subr.bf16.mxu0 %v4928
        %5129 = vmatpush2.bf16.msra.mxu0 %v4927
        %5130 = vmatprep.subr.bf16.mxu0 %v4924
        %5131 = vmatpush2.bf16.msra.mxu0 %v4923
        %5132 = vmatprep.subr.bf16.mxu0 %v4920
        %5133 = vmatpush2.bf16.msra.mxu0 %v4919
        %5134 = vmatprep.subr.bf16.mxu0 %v4916
        %5135 = vmatpush2.bf16.msra.mxu0 %v4915
        %5136 = vmatprep.subr.bf16.mxu0 %v4912
        %5137 = vmatpush2.bf16.msra.mxu0 %v4911
        %5138 = vmatprep.subr.bf16.mxu0 %v4908
        %5139 = vmatpush2.bf16.msra.mxu0 %v4907
        %5140 = vmatprep.mubr.bf16.mxu0 %v4298
        %5141 = vmatmul.mubr.bf16.gmra.mxu0 %v4143
        %v5142 = vpop.f32.mrf.mxu0
        %v5143 = vadd.f32 %v5102, %v5142
        %v5144 = vpop.f32.mrf.mxu0
        %v5145 = vadd.f32 %v5104, %v5144
        %v5146 = vpop.f32.mrf.mxu0
        %v5147 = vpop.f32.mrf.mxu0
        %5148 = vdwg.mxu0
        %5149 = vmatprep.subr.bf16.mxu0 %v4842
        %5150 = vmatpush1.bf16.msra.mxu0 %v4841
        %5151 = vmatprep.subr.bf16.mxu0 %v4838
        %5152 = vmatpush1.bf16.msra.mxu0 %v4837
        %5153 = vmatprep.subr.bf16.mxu0 %v4834
        %5154 = vmatpush1.bf16.msra.mxu0 %v4833
        %5155 = vmatprep.subr.bf16.mxu0 %v4830
        %5156 = vmatpush1.bf16.msra.mxu0 %v4829
        %5157 = vmatprep.subr.bf16.mxu0 %v4826
        %5158 = vmatpush1.bf16.msra.mxu0 %v4825
        %5159 = vmatprep.subr.bf16.mxu0 %v4822
        %5160 = vmatpush1.bf16.msra.mxu0 %v4821
        %5161 = vmatprep.subr.bf16.mxu0 %v4818
        %5162 = vmatpush1.bf16.msra.mxu0 %v4817
        %5163 = vmatprep.subr.bf16.mxu0 %v4814
        %5164 = vmatpush1.bf16.msra.mxu0 %v4813
        %5165 = vmatprep.subr.bf16.mxu0 %v4874
        %5166 = vmatpush2.bf16.msra.mxu0 %v4873
        %5167 = vmatprep.subr.bf16.mxu0 %v4870
        %5168 = vmatpush2.bf16.msra.mxu0 %v4869
        %5169 = vmatprep.subr.bf16.mxu0 %v4866
        %5170 = vmatpush2.bf16.msra.mxu0 %v4865
        %5171 = vmatprep.subr.bf16.mxu0 %v4862
        %5172 = vmatpush2.bf16.msra.mxu0 %v4861
        %5173 = vmatprep.subr.bf16.mxu0 %v4858
        %5174 = vmatpush2.bf16.msra.mxu0 %v4857
        %5175 = vmatprep.subr.bf16.mxu0 %v4854
        %5176 = vmatpush2.bf16.msra.mxu0 %v4853
        %5177 = vmatprep.subr.bf16.mxu0 %v4850
        %5178 = vmatpush2.bf16.msra.mxu0 %v4849
        %5179 = vmatprep.subr.bf16.mxu0 %v4846
        %5180 = vmatpush2.bf16.msra.mxu0 %v4845
        %5181 = vmatprep.mubr.bf16.mxu0 %v3988
        %5182 = vmatmul.mubr.bf16.gmra.mxu0 %v3833
        %v5183 = vpop.f32.mrf.mxu0
        %v5184 = vadd.f32 0.0, %v5183
        %v5185 = vpop.f32.mrf.mxu0
        %v5186 = vadd.f32 0.0, %v5185
        %v5187 = vpop.f32.mrf.mxu0
        %v5188 = vpop.f32.mrf.mxu0
        %5189 = vdwg.mxu0
        %5190 = vmatprep.subr.bf16.mxu0 %v4906
        %5191 = vmatpush1.bf16.msra.mxu0 %v4905
        %5192 = vmatprep.subr.bf16.mxu0 %v4902
        %5193 = vmatpush1.bf16.msra.mxu0 %v4901
        %5194 = vmatprep.subr.bf16.mxu0 %v4898
        %5195 = vmatpush1.bf16.msra.mxu0 %v4897
        %5196 = vmatprep.subr.bf16.mxu0 %v4894
        %5197 = vmatpush1.bf16.msra.mxu0 %v4893
        %5198 = vmatprep.subr.bf16.mxu0 %v4890
        %5199 = vmatpush1.bf16.msra.mxu0 %v4889
        %5200 = vmatprep.subr.bf16.mxu0 %v4886
        %5201 = vmatpush1.bf16.msra.mxu0 %v4885
        %5202 = vmatprep.subr.bf16.mxu0 %v4882
        %5203 = vmatpush1.bf16.msra.mxu0 %v4881
        %5204 = vmatprep.subr.bf16.mxu0 %v4878
        %5205 = vmatpush1.bf16.msra.mxu0 %v4877
        %5206 = vmatprep.subr.bf16.mxu0 %v4938
        %5207 = vmatpush2.bf16.msra.mxu0 %v4937
        %5208 = vmatprep.subr.bf16.mxu0 %v4934
        %5209 = vmatpush2.bf16.msra.mxu0 %v4933
        %5210 = vmatprep.subr.bf16.mxu0 %v4930
        %5211 = vmatpush2.bf16.msra.mxu0 %v4929
        %5212 = vmatprep.subr.bf16.mxu0 %v4926
        %5213 = vmatpush2.bf16.msra.mxu0 %v4925
        %5214 = vmatprep.subr.bf16.mxu0 %v4922
        %5215 = vmatpush2.bf16.msra.mxu0 %v4921
        %5216 = vmatprep.subr.bf16.mxu0 %v4918
        %5217 = vmatpush2.bf16.msra.mxu0 %v4917
        %5218 = vmatprep.subr.bf16.mxu0 %v4914
        %5219 = vmatpush2.bf16.msra.mxu0 %v4913
        %5220 = vmatprep.subr.bf16.mxu0 %v4910
        %5221 = vmatpush2.bf16.msra.mxu0 %v4909
        %5222 = vmatprep.mubr.bf16.mxu0 %v4298
        %5223 = vmatmul.mubr.bf16.gmra.mxu0 %v4143
        %v5224 = vpop.f32.mrf.mxu0
        %v5225 = vadd.f32 %v5184, %v5224
        %v5226 = vpop.f32.mrf.mxu0
        %v5227 = vadd.f32 %v5186, %v5226
        %v5228 = vpop.f32.mrf.mxu0
        %v5229 = vpop.f32.mrf.mxu0
        %5230 = vdwg.mxu0
        %v5231 = vadd.f32 %v729, %v5143
        %v5232 = vadd.f32 %v730, %v5145
        %v5233 = vadd.f32 %v731, %v5225
        %v5234 = vadd.f32 %v732, %v5227
        %v5235 = vld [vmem:[#allocation13] sm:$0xf]
        %v5237 = vlaneseq
        %v5238 = vshrl.u32 %v5237, 7
        %v5239 = vsub.s32 0, %v5238
        %v5240 = vrot.slane %v5235, %v5239
        %v5241 = vlaneseq
        %v5242 = vshrl.u32 %v5241, 7
        %v5243 = vsub.s32 1, %v5242
        %v5244 = vrot.slane %v5235, %v5243
        %v5245 = vlaneseq
        %v5246 = vshrl.u32 %v5245, 7
        %v5247 = vsub.s32 2, %v5246
        %v5248 = vrot.slane %v5235, %v5247
        %v5249 = vlaneseq
        %v5250 = vshrl.u32 %v5249, 7
        %v5251 = vsub.s32 3, %v5250
        %v5252 = vrot.slane %v5235, %v5251
        %v5257 = vadd.f32 %v5231, %v5240
        %v5258 = vadd.f32 %v5232, %v5244
        %v5259 = vadd.f32 %v5233, %v5248
        %v5260 = vadd.f32 %v5234, %v5252
        %v5261 = vpack.c.bf16 %v5257, %v5257
        %v5262 = vpack.c.bf16 %v5258, %v5258
        %v5263 = vpack.c.bf16 %v5259, %v5259
        %v5264 = vpack.c.bf16 %v5260, %v5260
        %v5265 = vld [vmem:[#allocation14] sm:$0xff]
        %v5266 = vld [vmem:[#allocation14 + $0x8] sm:$0xff]
        %v5267 = vld [vmem:[#allocation14 + $0x10] sm:$0xff]
        %v5268 = vld [vmem:[#allocation14 + $0x18] sm:$0xff]
        %v5269 = vld [vmem:[#allocation14 + $0x20] sm:$0xff]
        %v5270 = vld [vmem:[#allocation14 + $0x28] sm:$0xff]
        %v5271 = vld [vmem:[#allocation14 + $0x30] sm:$0xff]
        %v5272 = vld [vmem:[#allocation14 + $0x38] sm:$0xff]
        %v5273 = vld [vmem:[#allocation14 + $0x40] sm:$0xff]
        %v5274 = vld [vmem:[#allocation14 + $0x48] sm:$0xff]
        %v5275 = vld [vmem:[#allocation14 + $0x50] sm:$0xff]
        %v5276 = vld [vmem:[#allocation14 + $0x58] sm:$0xff]
        %v5277 = vld [vmem:[#allocation14 + $0x60] sm:$0xff]
        %v5278 = vld [vmem:[#allocation14 + $0x68] sm:$0xff]
        %v5279 = vld [vmem:[#allocation14 + $0x70] sm:$0xff]
        %v5280 = vld [vmem:[#allocation14 + $0x78] sm:$0xff]
        %v5281 = vld [vmem:[#allocation14 + $0x80] sm:$0xff]
        %v5282 = vld [vmem:[#allocation14 + $0x88] sm:$0xff]
        %v5283 = vld [vmem:[#allocation14 + $0x90] sm:$0xff]
        %v5284 = vld [vmem:[#allocation14 + $0x98] sm:$0xff]
        %v5285 = vld [vmem:[#allocation14 + $0xa0] sm:$0xff]
        %v5286 = vld [vmem:[#allocation14 + $0xa8] sm:$0xff]
        %v5287 = vld [vmem:[#allocation14 + $0xb0] sm:$0xff]
        %v5288 = vld [vmem:[#allocation14 + $0xb8] sm:$0xff]
        %v5289 = vld [vmem:[#allocation14 + $0xc0] sm:$0xff]
        %v5290 = vld [vmem:[#allocation14 + $0xc8] sm:$0xff]
        %v5291 = vld [vmem:[#allocation14 + $0xd0] sm:$0xff]
        %v5292 = vld [vmem:[#allocation14 + $0xd8] sm:$0xff]
        %v5293 = vld [vmem:[#allocation14 + $0xe0] sm:$0xff]
        %v5294 = vld [vmem:[#allocation14 + $0xe8] sm:$0xff]
        %v5295 = vld [vmem:[#allocation14 + $0xf0] sm:$0xff]
        %v5296 = vld [vmem:[#allocation14 + $0xf8] sm:$0xff]
        %v5297 = vld [vmem:[#allocation14 + $0x100] sm:$0xff]
        %v5298 = vld [vmem:[#allocation14 + $0x108] sm:$0xff]
        %v5299 = vld [vmem:[#allocation14 + $0x110] sm:$0xff]
        %v5300 = vld [vmem:[#allocation14 + $0x118] sm:$0xff]
        %v5301 = vld [vmem:[#allocation14 + $0x120] sm:$0xff]
        %v5302 = vld [vmem:[#allocation14 + $0x128] sm:$0xff]
        %v5303 = vld [vmem:[#allocation14 + $0x130] sm:$0xff]
        %v5304 = vld [vmem:[#allocation14 + $0x138] sm:$0xff]
        %v5305 = vld [vmem:[#allocation14 + $0x140] sm:$0xff]
        %v5306 = vld [vmem:[#allocation14 + $0x148] sm:$0xff]
        %v5307 = vld [vmem:[#allocation14 + $0x150] sm:$0xff]
        %v5308 = vld [vmem:[#allocation14 + $0x158] sm:$0xff]
        %v5309 = vld [vmem:[#allocation14 + $0x160] sm:$0xff]
        %v5310 = vld [vmem:[#allocation14 + $0x168] sm:$0xff]
        %v5311 = vld [vmem:[#allocation14 + $0x170] sm:$0xff]
        %v5312 = vld [vmem:[#allocation14 + $0x178] sm:$0xff]
        %v5313 = vld [vmem:[#allocation14 + $0x180] sm:$0xff]
        %v5314 = vld [vmem:[#allocation14 + $0x188] sm:$0xff]
        %v5315 = vld [vmem:[#allocation14 + $0x190] sm:$0xff]
        %v5316 = vld [vmem:[#allocation14 + $0x198] sm:$0xff]
        %v5317 = vld [vmem:[#allocation14 + $0x1a0] sm:$0xff]
        %v5318 = vld [vmem:[#allocation14 + $0x1a8] sm:$0xff]
        %v5319 = vld [vmem:[#allocation14 + $0x1b0] sm:$0xff]
        %v5320 = vld [vmem:[#allocation14 + $0x1b8] sm:$0xff]
        %v5321 = vld [vmem:[#allocation14 + $0x1c0] sm:$0xff]
        %v5322 = vld [vmem:[#allocation14 + $0x1c8] sm:$0xff]
        %v5323 = vld [vmem:[#allocation14 + $0x1d0] sm:$0xff]
        %v5324 = vld [vmem:[#allocation14 + $0x1d8] sm:$0xff]
        %v5325 = vld [vmem:[#allocation14 + $0x1e0] sm:$0xff]
        %v5326 = vld [vmem:[#allocation14 + $0x1e8] sm:$0xff]
        %v5327 = vld [vmem:[#allocation14 + $0x1f0] sm:$0xff]
        %v5328 = vld [vmem:[#allocation14 + $0x1f8] sm:$0xff]
        %v5329 = vld [vmem:[#allocation16] sm:$0x3]
        %v5331 = vlaneseq
        %v5332 = vshrl.u32 %v5331, 7
        %v5333 = vsub.s32 0, %v5332
        %v5334 = vrot.slane %v5329, %v5333
        %v5335 = vlaneseq
        %v5336 = vshrl.u32 %v5335, 7
        %v5337 = vsub.s32 1, %v5336
        %v5338 = vrot.slane %v5329, %v5337
        %v5405 = vunpack.c.l.b16 %v5265
        %v5406 = vunpack.c.h.b16 %v5265
        %v5407 = vunpack.c.l.b16 %v5266
        %v5408 = vunpack.c.h.b16 %v5266
        %v5409 = vunpack.c.l.b16 %v5267
        %v5410 = vunpack.c.h.b16 %v5267
        %v5411 = vunpack.c.l.b16 %v5268
        %v5412 = vunpack.c.h.b16 %v5268
        %v5413 = vunpack.c.l.b16 %v5269
        %v5414 = vunpack.c.h.b16 %v5269
        %v5415 = vunpack.c.l.b16 %v5270
        %v5416 = vunpack.c.h.b16 %v5270
        %v5417 = vunpack.c.l.b16 %v5271
        %v5418 = vunpack.c.h.b16 %v5271
        %v5419 = vunpack.c.l.b16 %v5272
        %v5420 = vunpack.c.h.b16 %v5272
        %v5421 = vunpack.c.l.b16 %v5273
        %v5422 = vunpack.c.h.b16 %v5273
        %v5423 = vunpack.c.l.b16 %v5274
        %v5424 = vunpack.c.h.b16 %v5274
        %v5425 = vunpack.c.l.b16 %v5275
        %v5426 = vunpack.c.h.b16 %v5275
        %v5427 = vunpack.c.l.b16 %v5276
        %v5428 = vunpack.c.h.b16 %v5276
        %v5429 = vunpack.c.l.b16 %v5277
        %v5430 = vunpack.c.h.b16 %v5277
        %v5431 = vunpack.c.l.b16 %v5278
        %v5432 = vunpack.c.h.b16 %v5278
        %v5433 = vunpack.c.l.b16 %v5279
        %v5434 = vunpack.c.h.b16 %v5279
        %v5435 = vunpack.c.l.b16 %v5280
        %v5436 = vunpack.c.h.b16 %v5280
        %v5437 = vunpack.c.l.b16 %v5281
        %v5438 = vunpack.c.h.b16 %v5281
        %v5439 = vunpack.c.l.b16 %v5282
        %v5440 = vunpack.c.h.b16 %v5282
        %v5441 = vunpack.c.l.b16 %v5283
        %v5442 = vunpack.c.h.b16 %v5283
        %v5443 = vunpack.c.l.b16 %v5284
        %v5444 = vunpack.c.h.b16 %v5284
        %v5445 = vunpack.c.l.b16 %v5285
        %v5446 = vunpack.c.h.b16 %v5285
        %v5447 = vunpack.c.l.b16 %v5286
        %v5448 = vunpack.c.h.b16 %v5286
        %v5449 = vunpack.c.l.b16 %v5287
        %v5450 = vunpack.c.h.b16 %v5287
        %v5451 = vunpack.c.l.b16 %v5288
        %v5452 = vunpack.c.h.b16 %v5288
        %v5453 = vunpack.c.l.b16 %v5289
        %v5454 = vunpack.c.h.b16 %v5289
        %v5455 = vunpack.c.l.b16 %v5290
        %v5456 = vunpack.c.h.b16 %v5290
        %v5457 = vunpack.c.l.b16 %v5291
        %v5458 = vunpack.c.h.b16 %v5291
        %v5459 = vunpack.c.l.b16 %v5292
        %v5460 = vunpack.c.h.b16 %v5292
        %v5461 = vunpack.c.l.b16 %v5293
        %v5462 = vunpack.c.h.b16 %v5293
        %v5463 = vunpack.c.l.b16 %v5294
        %v5464 = vunpack.c.h.b16 %v5294
        %v5465 = vunpack.c.l.b16 %v5295
        %v5466 = vunpack.c.h.b16 %v5295
        %v5467 = vunpack.c.l.b16 %v5296
        %v5468 = vunpack.c.h.b16 %v5296
        %v5469 = vunpack.c.l.b16 %v5297
        %v5470 = vunpack.c.h.b16 %v5297
        %v5471 = vunpack.c.l.b16 %v5298
        %v5472 = vunpack.c.h.b16 %v5298
        %v5473 = vunpack.c.l.b16 %v5299
        %v5474 = vunpack.c.h.b16 %v5299
        %v5475 = vunpack.c.l.b16 %v5300
        %v5476 = vunpack.c.h.b16 %v5300
        %v5477 = vunpack.c.l.b16 %v5301
        %v5478 = vunpack.c.h.b16 %v5301
        %v5479 = vunpack.c.l.b16 %v5302
        %v5480 = vunpack.c.h.b16 %v5302
        %v5481 = vunpack.c.l.b16 %v5303
        %v5482 = vunpack.c.h.b16 %v5303
        %v5483 = vunpack.c.l.b16 %v5304
        %v5484 = vunpack.c.h.b16 %v5304
        %v5485 = vunpack.c.l.b16 %v5305
        %v5486 = vunpack.c.h.b16 %v5305
        %v5487 = vunpack.c.l.b16 %v5306
        %v5488 = vunpack.c.h.b16 %v5306
        %v5489 = vunpack.c.l.b16 %v5307
        %v5490 = vunpack.c.h.b16 %v5307
        %v5491 = vunpack.c.l.b16 %v5308
        %v5492 = vunpack.c.h.b16 %v5308
        %v5493 = vunpack.c.l.b16 %v5309
        %v5494 = vunpack.c.h.b16 %v5309
        %v5495 = vunpack.c.l.b16 %v5310
        %v5496 = vunpack.c.h.b16 %v5310
        %v5497 = vunpack.c.l.b16 %v5311
        %v5498 = vunpack.c.h.b16 %v5311
        %v5499 = vunpack.c.l.b16 %v5312
        %v5500 = vunpack.c.h.b16 %v5312
        %v5501 = vunpack.c.l.b16 %v5313
        %v5502 = vunpack.c.h.b16 %v5313
        %v5503 = vunpack.c.l.b16 %v5314
        %v5504 = vunpack.c.h.b16 %v5314
        %v5505 = vunpack.c.l.b16 %v5315
        %v5506 = vunpack.c.h.b16 %v5315
        %v5507 = vunpack.c.l.b16 %v5316
        %v5508 = vunpack.c.h.b16 %v5316
        %v5509 = vunpack.c.l.b16 %v5317
        %v5510 = vunpack.c.h.b16 %v5317
        %v5511 = vunpack.c.l.b16 %v5318
        %v5512 = vunpack.c.h.b16 %v5318
        %v5513 = vunpack.c.l.b16 %v5319
        %v5514 = vunpack.c.h.b16 %v5319
        %v5515 = vunpack.c.l.b16 %v5320
        %v5516 = vunpack.c.h.b16 %v5320
        %v5517 = vunpack.c.l.b16 %v5321
        %v5518 = vunpack.c.h.b16 %v5321
        %v5519 = vunpack.c.l.b16 %v5322
        %v5520 = vunpack.c.h.b16 %v5322
        %v5521 = vunpack.c.l.b16 %v5323
        %v5522 = vunpack.c.h.b16 %v5323
        %v5523 = vunpack.c.l.b16 %v5324
        %v5524 = vunpack.c.h.b16 %v5324
        %v5525 = vunpack.c.l.b16 %v5325
        %v5526 = vunpack.c.h.b16 %v5325
        %v5527 = vunpack.c.l.b16 %v5326
        %v5528 = vunpack.c.h.b16 %v5326
        %v5529 = vunpack.c.l.b16 %v5327
        %v5530 = vunpack.c.h.b16 %v5327
        %v5531 = vunpack.c.l.b16 %v5328
        %v5532 = vunpack.c.h.b16 %v5328
        %v5533 = vpack.c.b16 %v5407, %v5405
        %v5534 = vpack.c.b16 %v5408, %v5406
        %v5535 = vpack.c.b16 %v5411, %v5409
        %v5536 = vpack.c.b16 %v5412, %v5410
        %v5537 = vpack.c.b16 %v5415, %v5413
        %v5538 = vpack.c.b16 %v5416, %v5414
        %v5539 = vpack.c.b16 %v5419, %v5417
        %v5540 = vpack.c.b16 %v5420, %v5418
        %v5541 = vpack.c.b16 %v5423, %v5421
        %v5542 = vpack.c.b16 %v5424, %v5422
        %v5543 = vpack.c.b16 %v5427, %v5425
        %v5544 = vpack.c.b16 %v5428, %v5426
        %v5545 = vpack.c.b16 %v5431, %v5429
        %v5546 = vpack.c.b16 %v5432, %v5430
        %v5547 = vpack.c.b16 %v5435, %v5433
        %v5548 = vpack.c.b16 %v5436, %v5434
        %v5549 = vpack.c.b16 %v5439, %v5437
        %v5550 = vpack.c.b16 %v5440, %v5438
        %v5551 = vpack.c.b16 %v5443, %v5441
        %v5552 = vpack.c.b16 %v5444, %v5442
        %v5553 = vpack.c.b16 %v5447, %v5445
        %v5554 = vpack.c.b16 %v5448, %v5446
        %v5555 = vpack.c.b16 %v5451, %v5449
        %v5556 = vpack.c.b16 %v5452, %v5450
        %v5557 = vpack.c.b16 %v5455, %v5453
        %v5558 = vpack.c.b16 %v5456, %v5454
        %v5559 = vpack.c.b16 %v5459, %v5457
        %v5560 = vpack.c.b16 %v5460, %v5458
        %v5561 = vpack.c.b16 %v5463, %v5461
        %v5562 = vpack.c.b16 %v5464, %v5462
        %v5563 = vpack.c.b16 %v5467, %v5465
        %v5564 = vpack.c.b16 %v5468, %v5466
        %v5565 = vpack.c.b16 %v5471, %v5469
        %v5566 = vpack.c.b16 %v5472, %v5470
        %v5567 = vpack.c.b16 %v5475, %v5473
        %v5568 = vpack.c.b16 %v5476, %v5474
        %v5569 = vpack.c.b16 %v5479, %v5477
        %v5570 = vpack.c.b16 %v5480, %v5478
        %v5571 = vpack.c.b16 %v5483, %v5481
        %v5572 = vpack.c.b16 %v5484, %v5482
        %v5573 = vpack.c.b16 %v5487, %v5485
        %v5574 = vpack.c.b16 %v5488, %v5486
        %v5575 = vpack.c.b16 %v5491, %v5489
        %v5576 = vpack.c.b16 %v5492, %v5490
        %v5577 = vpack.c.b16 %v5495, %v5493
        %v5578 = vpack.c.b16 %v5496, %v5494
        %v5579 = vpack.c.b16 %v5499, %v5497
        %v5580 = vpack.c.b16 %v5500, %v5498
        %v5581 = vpack.c.b16 %v5503, %v5501
        %v5582 = vpack.c.b16 %v5504, %v5502
        %v5583 = vpack.c.b16 %v5507, %v5505
        %v5584 = vpack.c.b16 %v5508, %v5506
        %v5585 = vpack.c.b16 %v5511, %v5509
        %v5586 = vpack.c.b16 %v5512, %v5510
        %v5587 = vpack.c.b16 %v5515, %v5513
        %v5588 = vpack.c.b16 %v5516, %v5514
        %v5589 = vpack.c.b16 %v5519, %v5517
        %v5590 = vpack.c.b16 %v5520, %v5518
        %v5591 = vpack.c.b16 %v5523, %v5521
        %v5592 = vpack.c.b16 %v5524, %v5522
        %v5593 = vpack.c.b16 %v5527, %v5525
        %v5594 = vpack.c.b16 %v5528, %v5526
        %v5595 = vpack.c.b16 %v5531, %v5529
        %v5596 = vpack.c.b16 %v5532, %v5530
        %5661 = vmatprep.subr.bf16.mxu0 %v5548
        %5662 = vmatpush1.bf16.msra.mxu0 %v5547
        %5663 = vmatprep.subr.bf16.mxu0 %v5546
        %5664 = vmatpush1.bf16.msra.mxu0 %v5545
        %5665 = vmatprep.subr.bf16.mxu0 %v5544
        %5666 = vmatpush1.bf16.msra.mxu0 %v5543
        %5667 = vmatprep.subr.bf16.mxu0 %v5542
        %5668 = vmatpush1.bf16.msra.mxu0 %v5541
        %5669 = vmatprep.subr.bf16.mxu0 %v5540
        %5670 = vmatpush1.bf16.msra.mxu0 %v5539
        %5671 = vmatprep.subr.bf16.mxu0 %v5538
        %5672 = vmatpush1.bf16.msra.mxu0 %v5537
        %5673 = vmatprep.subr.bf16.mxu0 %v5536
        %5674 = vmatpush1.bf16.msra.mxu0 %v5535
        %5675 = vmatprep.subr.bf16.mxu0 %v5534
        %5676 = vmatpush1.bf16.msra.mxu0 %v5533
        %5677 = vmatprep.subr.bf16.mxu0 %v5564
        %5678 = vmatpush2.bf16.msra.mxu0 %v5563
        %5679 = vmatprep.subr.bf16.mxu0 %v5562
        %5680 = vmatpush2.bf16.msra.mxu0 %v5561
        %5681 = vmatprep.subr.bf16.mxu0 %v5560
        %5682 = vmatpush2.bf16.msra.mxu0 %v5559
        %5683 = vmatprep.subr.bf16.mxu0 %v5558
        %5684 = vmatpush2.bf16.msra.mxu0 %v5557
        %5685 = vmatprep.subr.bf16.mxu0 %v5556
        %5686 = vmatpush2.bf16.msra.mxu0 %v5555
        %5687 = vmatprep.subr.bf16.mxu0 %v5554
        %5688 = vmatpush2.bf16.msra.mxu0 %v5553
        %5689 = vmatprep.subr.bf16.mxu0 %v5552
        %5690 = vmatpush2.bf16.msra.mxu0 %v5551
        %5691 = vmatprep.subr.bf16.mxu0 %v5550
        %5692 = vmatpush2.bf16.msra.mxu0 %v5549
        %5693 = vmatprep.mubr.bf16.mxu0 %v5262
        %5694 = vmatmul.mubr.bf16.gmra.mxu0 %v5261
        %v5695 = vpop.f32.mrf.mxu0
        %v5696 = vadd.f32 %v5334, %v5695
        %v5697 = vpop.f32.mrf.mxu0
        %v5698 = vadd.f32 %v5338, %v5697
        %v5699 = vpop.f32.mrf.mxu0
        %v5700 = vpop.f32.mrf.mxu0
        %5701 = vdwg.mxu0
        %5702 = vmatprep.subr.bf16.mxu0 %v5580
        %5703 = vmatpush1.bf16.msra.mxu0 %v5579
        %5704 = vmatprep.subr.bf16.mxu0 %v5578
        %5705 = vmatpush1.bf16.msra.mxu0 %v5577
        %5706 = vmatprep.subr.bf16.mxu0 %v5576
        %5707 = vmatpush1.bf16.msra.mxu0 %v5575
        %5708 = vmatprep.subr.bf16.mxu0 %v5574
        %5709 = vmatpush1.bf16.msra.mxu0 %v5573
        %5710 = vmatprep.subr.bf16.mxu0 %v5572
        %5711 = vmatpush1.bf16.msra.mxu0 %v5571
        %5712 = vmatprep.subr.bf16.mxu0 %v5570
        %5713 = vmatpush1.bf16.msra.mxu0 %v5569
        %5714 = vmatprep.subr.bf16.mxu0 %v5568
        %5715 = vmatpush1.bf16.msra.mxu0 %v5567
        %5716 = vmatprep.subr.bf16.mxu0 %v5566
        %5717 = vmatpush1.bf16.msra.mxu0 %v5565
        %5718 = vmatprep.subr.bf16.mxu0 %v5596
        %5719 = vmatpush2.bf16.msra.mxu0 %v5595
        %5720 = vmatprep.subr.bf16.mxu0 %v5594
        %5721 = vmatpush2.bf16.msra.mxu0 %v5593
        %5722 = vmatprep.subr.bf16.mxu0 %v5592
        %5723 = vmatpush2.bf16.msra.mxu0 %v5591
        %5724 = vmatprep.subr.bf16.mxu0 %v5590
        %5725 = vmatpush2.bf16.msra.mxu0 %v5589
        %5726 = vmatprep.subr.bf16.mxu0 %v5588
        %5727 = vmatpush2.bf16.msra.mxu0 %v5587
        %5728 = vmatprep.subr.bf16.mxu0 %v5586
        %5729 = vmatpush2.bf16.msra.mxu0 %v5585
        %5730 = vmatprep.subr.bf16.mxu0 %v5584
        %5731 = vmatpush2.bf16.msra.mxu0 %v5583
        %5732 = vmatprep.subr.bf16.mxu0 %v5582
        %5733 = vmatpush2.bf16.msra.mxu0 %v5581
        %5734 = vmatprep.mubr.bf16.mxu0 %v5264
        %5735 = vmatmul.mubr.bf16.gmra.mxu0 %v5263
        %v5736 = vpop.f32.mrf.mxu0
        %v5737 = vadd.f32 %v5696, %v5736
        %v5738 = vpop.f32.mrf.mxu0
        %v5739 = vadd.f32 %v5698, %v5738
        %v5740 = vpop.f32.mrf.mxu0
        %v5741 = vpop.f32.mrf.mxu0
        %5742 = vdwg.mxu0
        %v5743 = vmul.f32 %v5737, 0.5
        %v5744 = vmul.f32 %v5739, 0.5
        %v5745 = vmul.f32 %v5737, 0.70710677
        %v5746 = vmul.f32 %v5739, 0.70710677
        %v5747 = verf.f32.pop %v5745
        %v5748 = verf.f32.pop %v5746
        %v5749 = vadd.f32 %v5747, 1.0
        %v5750 = vadd.f32 %v5748, 1.0
        %v5751 = vmul.f32 %v5743, %v5749
        %v5752 = vmul.f32 %v5744, %v5750
        %v5753 = vpack.c.bf16 %v5751, %v5751
        %v5754 = vpack.c.bf16 %v5752, %v5752
        %v5755 = vld [vmem:[#allocation17] sm:$0xff]
        %v5756 = vld [vmem:[#allocation17 + $0x8] sm:$0xff]
        %v5757 = vld [vmem:[#allocation17 + $0x10] sm:$0xff]
        %v5758 = vld [vmem:[#allocation17 + $0x18] sm:$0xff]
        %v5759 = vld [vmem:[#allocation17 + $0x20] sm:$0xff]
        %v5760 = vld [vmem:[#allocation17 + $0x28] sm:$0xff]
        %v5761 = vld [vmem:[#allocation17 + $0x30] sm:$0xff]
        %v5762 = vld [vmem:[#allocation17 + $0x38] sm:$0xff]
        %v5763 = vld [vmem:[#allocation17 + $0x40] sm:$0xff]
        %v5764 = vld [vmem:[#allocation17 + $0x48] sm:$0xff]
        %v5765 = vld [vmem:[#allocation17 + $0x50] sm:$0xff]
        %v5766 = vld [vmem:[#allocation17 + $0x58] sm:$0xff]
        %v5767 = vld [vmem:[#allocation17 + $0x60] sm:$0xff]
        %v5768 = vld [vmem:[#allocation17 + $0x68] sm:$0xff]
        %v5769 = vld [vmem:[#allocation17 + $0x70] sm:$0xff]
        %v5770 = vld [vmem:[#allocation17 + $0x78] sm:$0xff]
        %v5771 = vld [vmem:[#allocation17 + $0x80] sm:$0xff]
        %v5772 = vld [vmem:[#allocation17 + $0x88] sm:$0xff]
        %v5773 = vld [vmem:[#allocation17 + $0x90] sm:$0xff]
        %v5774 = vld [vmem:[#allocation17 + $0x98] sm:$0xff]
        %v5775 = vld [vmem:[#allocation17 + $0xa0] sm:$0xff]
        %v5776 = vld [vmem:[#allocation17 + $0xa8] sm:$0xff]
        %v5777 = vld [vmem:[#allocation17 + $0xb0] sm:$0xff]
        %v5778 = vld [vmem:[#allocation17 + $0xb8] sm:$0xff]
        %v5779 = vld [vmem:[#allocation17 + $0xc0] sm:$0xff]
        %v5780 = vld [vmem:[#allocation17 + $0xc8] sm:$0xff]
        %v5781 = vld [vmem:[#allocation17 + $0xd0] sm:$0xff]
        %v5782 = vld [vmem:[#allocation17 + $0xd8] sm:$0xff]
        %v5783 = vld [vmem:[#allocation17 + $0xe0] sm:$0xff]
        %v5784 = vld [vmem:[#allocation17 + $0xe8] sm:$0xff]
        %v5785 = vld [vmem:[#allocation17 + $0xf0] sm:$0xff]
        %v5786 = vld [vmem:[#allocation17 + $0xf8] sm:$0xff]
        %v5787 = vld [vmem:[#allocation19] sm:$0x3]
        %v5789 = vlaneseq
        %v5790 = vshrl.u32 %v5789, 7
        %v5791 = vsub.s32 0, %v5790
        %v5792 = vrot.slane %v5787, %v5791
        %v5793 = vlaneseq
        %v5794 = vshrl.u32 %v5793, 7
        %v5795 = vsub.s32 1, %v5794
        %v5796 = vrot.slane %v5787, %v5795
        %v5831 = vunpack.c.l.b16 %v5755
        %v5832 = vunpack.c.h.b16 %v5755
        %v5833 = vunpack.c.l.b16 %v5756
        %v5834 = vunpack.c.h.b16 %v5756
        %v5835 = vunpack.c.l.b16 %v5757
        %v5836 = vunpack.c.h.b16 %v5757
        %v5837 = vunpack.c.l.b16 %v5758
        %v5838 = vunpack.c.h.b16 %v5758
        %v5839 = vunpack.c.l.b16 %v5759
        %v5840 = vunpack.c.h.b16 %v5759
        %v5841 = vunpack.c.l.b16 %v5760
        %v5842 = vunpack.c.h.b16 %v5760
        %v5843 = vunpack.c.l.b16 %v5761
        %v5844 = vunpack.c.h.b16 %v5761
        %v5845 = vunpack.c.l.b16 %v5762
        %v5846 = vunpack.c.h.b16 %v5762
        %v5847 = vunpack.c.l.b16 %v5763
        %v5848 = vunpack.c.h.b16 %v5763
        %v5849 = vunpack.c.l.b16 %v5764
        %v5850 = vunpack.c.h.b16 %v5764
        %v5851 = vunpack.c.l.b16 %v5765
        %v5852 = vunpack.c.h.b16 %v5765
        %v5853 = vunpack.c.l.b16 %v5766
        %v5854 = vunpack.c.h.b16 %v5766
        %v5855 = vunpack.c.l.b16 %v5767
        %v5856 = vunpack.c.h.b16 %v5767
        %v5857 = vunpack.c.l.b16 %v5768
        %v5858 = vunpack.c.h.b16 %v5768
        %v5859 = vunpack.c.l.b16 %v5769
        %v5860 = vunpack.c.h.b16 %v5769
        %v5861 = vunpack.c.l.b16 %v5770
        %v5862 = vunpack.c.h.b16 %v5770
        %v5863 = vunpack.c.l.b16 %v5771
        %v5864 = vunpack.c.h.b16 %v5771
        %v5865 = vunpack.c.l.b16 %v5772
        %v5866 = vunpack.c.h.b16 %v5772
        %v5867 = vunpack.c.l.b16 %v5773
        %v5868 = vunpack.c.h.b16 %v5773
        %v5869 = vunpack.c.l.b16 %v5774
        %v5870 = vunpack.c.h.b16 %v5774
        %v5871 = vunpack.c.l.b16 %v5775
        %v5872 = vunpack.c.h.b16 %v5775
        %v5873 = vunpack.c.l.b16 %v5776
        %v5874 = vunpack.c.h.b16 %v5776
        %v5875 = vunpack.c.l.b16 %v5777
        %v5876 = vunpack.c.h.b16 %v5777
        %v5877 = vunpack.c.l.b16 %v5778
        %v5878 = vunpack.c.h.b16 %v5778
        %v5879 = vunpack.c.l.b16 %v5779
        %v5880 = vunpack.c.h.b16 %v5779
        %v5881 = vunpack.c.l.b16 %v5780
        %v5882 = vunpack.c.h.b16 %v5780
        %v5883 = vunpack.c.l.b16 %v5781
        %v5884 = vunpack.c.h.b16 %v5781
        %v5885 = vunpack.c.l.b16 %v5782
        %v5886 = vunpack.c.h.b16 %v5782
        %v5887 = vunpack.c.l.b16 %v5783
        %v5888 = vunpack.c.h.b16 %v5783
        %v5889 = vunpack.c.l.b16 %v5784
        %v5890 = vunpack.c.h.b16 %v5784
        %v5891 = vunpack.c.l.b16 %v5785
        %v5892 = vunpack.c.h.b16 %v5785
        %v5893 = vunpack.c.l.b16 %v5786
        %v5894 = vunpack.c.h.b16 %v5786
        %v5895 = vpack.c.b16 %v5833, %v5831
        %v5896 = vpack.c.b16 %v5834, %v5832
        %v5897 = vpack.c.b16 %v5837, %v5835
        %v5898 = vpack.c.b16 %v5838, %v5836
        %v5899 = vpack.c.b16 %v5841, %v5839
        %v5900 = vpack.c.b16 %v5842, %v5840
        %v5901 = vpack.c.b16 %v5845, %v5843
        %v5902 = vpack.c.b16 %v5846, %v5844
        %v5903 = vpack.c.b16 %v5849, %v5847
        %v5904 = vpack.c.b16 %v5850, %v5848
        %v5905 = vpack.c.b16 %v5853, %v5851
        %v5906 = vpack.c.b16 %v5854, %v5852
        %v5907 = vpack.c.b16 %v5857, %v5855
        %v5908 = vpack.c.b16 %v5858, %v5856
        %v5909 = vpack.c.b16 %v5861, %v5859
        %v5910 = vpack.c.b16 %v5862, %v5860
        %v5911 = vpack.c.b16 %v5865, %v5863
        %v5912 = vpack.c.b16 %v5866, %v5864
        %v5913 = vpack.c.b16 %v5869, %v5867
        %v5914 = vpack.c.b16 %v5870, %v5868
        %v5915 = vpack.c.b16 %v5873, %v5871
        %v5916 = vpack.c.b16 %v5874, %v5872
        %v5917 = vpack.c.b16 %v5877, %v5875
        %v5918 = vpack.c.b16 %v5878, %v5876
        %v5919 = vpack.c.b16 %v5881, %v5879
        %v5920 = vpack.c.b16 %v5882, %v5880
        %v5921 = vpack.c.b16 %v5885, %v5883
        %v5922 = vpack.c.b16 %v5886, %v5884
        %v5923 = vpack.c.b16 %v5889, %v5887
        %v5924 = vpack.c.b16 %v5890, %v5888
        %v5925 = vpack.c.b16 %v5893, %v5891
        %v5926 = vpack.c.b16 %v5894, %v5892
        %5959 = vmatprep.subr.bf16.mxu0 %v5910
        %5960 = vmatpush1.bf16.msra.mxu0 %v5909
        %5961 = vmatprep.subr.bf16.mxu0 %v5908
        %5962 = vmatpush1.bf16.msra.mxu0 %v5907
        %5963 = vmatprep.subr.bf16.mxu0 %v5906
        %5964 = vmatpush1.bf16.msra.mxu0 %v5905
        %5965 = vmatprep.subr.bf16.mxu0 %v5904
        %5966 = vmatpush1.bf16.msra.mxu0 %v5903
        %5967 = vmatprep.subr.bf16.mxu0 %v5902
        %5968 = vmatpush1.bf16.msra.mxu0 %v5901
        %5969 = vmatprep.subr.bf16.mxu0 %v5900
        %5970 = vmatpush1.bf16.msra.mxu0 %v5899
        %5971 = vmatprep.subr.bf16.mxu0 %v5898
        %5972 = vmatpush1.bf16.msra.mxu0 %v5897
        %5973 = vmatprep.subr.bf16.mxu0 %v5896
        %5974 = vmatpush1.bf16.msra.mxu0 %v5895
        %5975 = vmatprep.subr.bf16.mxu0 %v5926
        %5976 = vmatpush2.bf16.msra.mxu0 %v5925
        %5977 = vmatprep.subr.bf16.mxu0 %v5924
        %5978 = vmatpush2.bf16.msra.mxu0 %v5923
        %5979 = vmatprep.subr.bf16.mxu0 %v5922
        %5980 = vmatpush2.bf16.msra.mxu0 %v5921
        %5981 = vmatprep.subr.bf16.mxu0 %v5920
        %5982 = vmatpush2.bf16.msra.mxu0 %v5919
        %5983 = vmatprep.subr.bf16.mxu0 %v5918
        %5984 = vmatpush2.bf16.msra.mxu0 %v5917
        %5985 = vmatprep.subr.bf16.mxu0 %v5916
        %5986 = vmatpush2.bf16.msra.mxu0 %v5915
        %5987 = vmatprep.subr.bf16.mxu0 %v5914
        %5988 = vmatpush2.bf16.msra.mxu0 %v5913
        %5989 = vmatprep.subr.bf16.mxu0 %v5912
        %5990 = vmatpush2.bf16.msra.mxu0 %v5911
        %5991 = vmatprep.mubr.bf16.mxu0 %v5754
        %5992 = vmatmul.mubr.bf16.gmra.mxu0 %v5753
        %v5993 = vpop.f32.mrf.mxu0
        %v5994 = vadd.f32 %v5792, %v5993
        %v5995 = vpop.f32.mrf.mxu0
        %v5996 = vadd.f32 %v5796, %v5995
        %v5997 = vpop.f32.mrf.mxu0
        %v5998 = vpop.f32.mrf.mxu0
        %5999 = vdwg.mxu0
        %v6000 = vmul.f32 %v5994, 0.5
        %v6001 = vmul.f32 %v5996, 0.5
        %v6002 = vmul.f32 %v5994, 0.70710677
        %v6003 = vmul.f32 %v5996, 0.70710677
        %v6004 = verf.f32.pop %v6002
        %v6005 = verf.f32.pop %v6003
        %v6006 = vadd.f32 %v6004, 1.0
        %v6007 = vadd.f32 %v6005, 1.0
        %v6008 = vmul.f32 %v6000, %v6006
        %v6009 = vmul.f32 %v6001, %v6007
        %v6010 = vadd.f32 %v6008, %v5751
        %v6011 = vadd.f32 %v6009, %v5752
        %v6012 = vpack.c.bf16 %v6010, %v6010
        %v6013 = vpack.c.bf16 %v6011, %v6011
        %v6014 = vld [vmem:[#allocation20] sm:$0xff]
        %v6015 = vld [vmem:[#allocation20 + $0x8] sm:$0xff]
        %v6016 = vld [vmem:[#allocation20 + $0x10] sm:$0xff]
        %v6017 = vld [vmem:[#allocation20 + $0x18] sm:$0xff]
        %v6018 = vld [vmem:[#allocation20 + $0x20] sm:$0xff]
        %v6019 = vld [vmem:[#allocation20 + $0x28] sm:$0xff]
        %v6020 = vld [vmem:[#allocation20 + $0x30] sm:$0xff]
        %v6021 = vld [vmem:[#allocation20 + $0x38] sm:$0xff]
        %v6022 = vld [vmem:[#allocation20 + $0x40] sm:$0xff]
        %v6023 = vld [vmem:[#allocation20 + $0x48] sm:$0xff]
        %v6024 = vld [vmem:[#allocation20 + $0x50] sm:$0xff]
        %v6025 = vld [vmem:[#allocation20 + $0x58] sm:$0xff]
        %v6026 = vld [vmem:[#allocation20 + $0x60] sm:$0xff]
        %v6027 = vld [vmem:[#allocation20 + $0x68] sm:$0xff]
        %v6028 = vld [vmem:[#allocation20 + $0x70] sm:$0xff]
        %v6029 = vld [vmem:[#allocation20 + $0x78] sm:$0xff]
        %v6030 = vld [vmem:[#allocation20 + $0x80] sm:$0xff]
        %v6031 = vld [vmem:[#allocation20 + $0x88] sm:$0xff]
        %v6032 = vld [vmem:[#allocation20 + $0x90] sm:$0xff]
        %v6033 = vld [vmem:[#allocation20 + $0x98] sm:$0xff]
        %v6034 = vld [vmem:[#allocation20 + $0xa0] sm:$0xff]
        %v6035 = vld [vmem:[#allocation20 + $0xa8] sm:$0xff]
        %v6036 = vld [vmem:[#allocation20 + $0xb0] sm:$0xff]
        %v6037 = vld [vmem:[#allocation20 + $0xb8] sm:$0xff]
        %v6038 = vld [vmem:[#allocation20 + $0xc0] sm:$0xff]
        %v6039 = vld [vmem:[#allocation20 + $0xc8] sm:$0xff]
        %v6040 = vld [vmem:[#allocation20 + $0xd0] sm:$0xff]
        %v6041 = vld [vmem:[#allocation20 + $0xd8] sm:$0xff]
        %v6042 = vld [vmem:[#allocation20 + $0xe0] sm:$0xff]
        %v6043 = vld [vmem:[#allocation20 + $0xe8] sm:$0xff]
        %v6044 = vld [vmem:[#allocation20 + $0xf0] sm:$0xff]
        %v6045 = vld [vmem:[#allocation20 + $0xf8] sm:$0xff]
        %v6046 = vld [vmem:[#allocation20 + $0x100] sm:$0xff]
        %v6047 = vld [vmem:[#allocation20 + $0x108] sm:$0xff]
        %v6048 = vld [vmem:[#allocation20 + $0x110] sm:$0xff]
        %v6049 = vld [vmem:[#allocation20 + $0x118] sm:$0xff]
        %v6050 = vld [vmem:[#allocation20 + $0x120] sm:$0xff]
        %v6051 = vld [vmem:[#allocation20 + $0x128] sm:$0xff]
        %v6052 = vld [vmem:[#allocation20 + $0x130] sm:$0xff]
        %v6053 = vld [vmem:[#allocation20 + $0x138] sm:$0xff]
        %v6054 = vld [vmem:[#allocation20 + $0x140] sm:$0xff]
        %v6055 = vld [vmem:[#allocation20 + $0x148] sm:$0xff]
        %v6056 = vld [vmem:[#allocation20 + $0x150] sm:$0xff]
        %v6057 = vld [vmem:[#allocation20 + $0x158] sm:$0xff]
        %v6058 = vld [vmem:[#allocation20 + $0x160] sm:$0xff]
        %v6059 = vld [vmem:[#allocation20 + $0x168] sm:$0xff]
        %v6060 = vld [vmem:[#allocation20 + $0x170] sm:$0xff]
        %v6061 = vld [vmem:[#allocation20 + $0x178] sm:$0xff]
        %v6062 = vld [vmem:[#allocation20 + $0x180] sm:$0xff]
        %v6063 = vld [vmem:[#allocation20 + $0x188] sm:$0xff]
        %v6064 = vld [vmem:[#allocation20 + $0x190] sm:$0xff]
        %v6065 = vld [vmem:[#allocation20 + $0x198] sm:$0xff]
        %v6066 = vld [vmem:[#allocation20 + $0x1a0] sm:$0xff]
        %v6067 = vld [vmem:[#allocation20 + $0x1a8] sm:$0xff]
        %v6068 = vld [vmem:[#allocation20 + $0x1b0] sm:$0xff]
        %v6069 = vld [vmem:[#allocation20 + $0x1b8] sm:$0xff]
        %v6070 = vld [vmem:[#allocation20 + $0x1c0] sm:$0xff]
        %v6071 = vld [vmem:[#allocation20 + $0x1c8] sm:$0xff]
        %v6072 = vld [vmem:[#allocation20 + $0x1d0] sm:$0xff]
        %v6073 = vld [vmem:[#allocation20 + $0x1d8] sm:$0xff]
        %v6074 = vld [vmem:[#allocation20 + $0x1e0] sm:$0xff]
        %v6075 = vld [vmem:[#allocation20 + $0x1e8] sm:$0xff]
        %v6076 = vld [vmem:[#allocation20 + $0x1f0] sm:$0xff]
        %v6077 = vld [vmem:[#allocation20 + $0x1f8] sm:$0xff]
        %v6078 = vld [vmem:[#allocation22] sm:$0xf]
        %v6080 = vlaneseq
        %v6081 = vshrl.u32 %v6080, 7
        %v6082 = vsub.s32 0, %v6081
        %v6083 = vrot.slane %v6078, %v6082
        %v6084 = vlaneseq
        %v6085 = vshrl.u32 %v6084, 7
        %v6086 = vsub.s32 1, %v6085
        %v6087 = vrot.slane %v6078, %v6086
        %v6088 = vlaneseq
        %v6089 = vshrl.u32 %v6088, 7
        %v6090 = vsub.s32 2, %v6089
        %v6091 = vrot.slane %v6078, %v6090
        %v6092 = vlaneseq
        %v6093 = vshrl.u32 %v6092, 7
        %v6094 = vsub.s32 3, %v6093
        %v6095 = vrot.slane %v6078, %v6094
        %v6164 = vunpack.c.l.b16 %v6014
        %v6165 = vunpack.c.h.b16 %v6014
        %v6166 = vunpack.c.l.b16 %v6015
        %v6167 = vunpack.c.h.b16 %v6015
        %v6168 = vunpack.c.l.b16 %v6016
        %v6169 = vunpack.c.h.b16 %v6016
        %v6170 = vunpack.c.l.b16 %v6017
        %v6171 = vunpack.c.h.b16 %v6017
        %v6172 = vunpack.c.l.b16 %v6018
        %v6173 = vunpack.c.h.b16 %v6018
        %v6174 = vunpack.c.l.b16 %v6019
        %v6175 = vunpack.c.h.b16 %v6019
        %v6176 = vunpack.c.l.b16 %v6020
        %v6177 = vunpack.c.h.b16 %v6020
        %v6178 = vunpack.c.l.b16 %v6021
        %v6179 = vunpack.c.h.b16 %v6021
        %v6180 = vunpack.c.l.b16 %v6022
        %v6181 = vunpack.c.h.b16 %v6022
        %v6182 = vunpack.c.l.b16 %v6023
        %v6183 = vunpack.c.h.b16 %v6023
        %v6184 = vunpack.c.l.b16 %v6024
        %v6185 = vunpack.c.h.b16 %v6024
        %v6186 = vunpack.c.l.b16 %v6025
        %v6187 = vunpack.c.h.b16 %v6025
        %v6188 = vunpack.c.l.b16 %v6026
        %v6189 = vunpack.c.h.b16 %v6026
        %v6190 = vunpack.c.l.b16 %v6027
        %v6191 = vunpack.c.h.b16 %v6027
        %v6192 = vunpack.c.l.b16 %v6028
        %v6193 = vunpack.c.h.b16 %v6028
        %v6194 = vunpack.c.l.b16 %v6029
        %v6195 = vunpack.c.h.b16 %v6029
        %v6196 = vunpack.c.l.b16 %v6030
        %v6197 = vunpack.c.h.b16 %v6030
        %v6198 = vunpack.c.l.b16 %v6031
        %v6199 = vunpack.c.h.b16 %v6031
        %v6200 = vunpack.c.l.b16 %v6032
        %v6201 = vunpack.c.h.b16 %v6032
        %v6202 = vunpack.c.l.b16 %v6033
        %v6203 = vunpack.c.h.b16 %v6033
        %v6204 = vunpack.c.l.b16 %v6034
        %v6205 = vunpack.c.h.b16 %v6034
        %v6206 = vunpack.c.l.b16 %v6035
        %v6207 = vunpack.c.h.b16 %v6035
        %v6208 = vunpack.c.l.b16 %v6036
        %v6209 = vunpack.c.h.b16 %v6036
        %v6210 = vunpack.c.l.b16 %v6037
        %v6211 = vunpack.c.h.b16 %v6037
        %v6212 = vunpack.c.l.b16 %v6038
        %v6213 = vunpack.c.h.b16 %v6038
        %v6214 = vunpack.c.l.b16 %v6039
        %v6215 = vunpack.c.h.b16 %v6039
        %v6216 = vunpack.c.l.b16 %v6040
        %v6217 = vunpack.c.h.b16 %v6040
        %v6218 = vunpack.c.l.b16 %v6041
        %v6219 = vunpack.c.h.b16 %v6041
        %v6220 = vunpack.c.l.b16 %v6042
        %v6221 = vunpack.c.h.b16 %v6042
        %v6222 = vunpack.c.l.b16 %v6043
        %v6223 = vunpack.c.h.b16 %v6043
        %v6224 = vunpack.c.l.b16 %v6044
        %v6225 = vunpack.c.h.b16 %v6044
        %v6226 = vunpack.c.l.b16 %v6045
        %v6227 = vunpack.c.h.b16 %v6045
        %v6228 = vunpack.c.l.b16 %v6046
        %v6229 = vunpack.c.h.b16 %v6046
        %v6230 = vunpack.c.l.b16 %v6047
        %v6231 = vunpack.c.h.b16 %v6047
        %v6232 = vunpack.c.l.b16 %v6048
        %v6233 = vunpack.c.h.b16 %v6048
        %v6234 = vunpack.c.l.b16 %v6049
        %v6235 = vunpack.c.h.b16 %v6049
        %v6236 = vunpack.c.l.b16 %v6050
        %v6237 = vunpack.c.h.b16 %v6050
        %v6238 = vunpack.c.l.b16 %v6051
        %v6239 = vunpack.c.h.b16 %v6051
        %v6240 = vunpack.c.l.b16 %v6052
        %v6241 = vunpack.c.h.b16 %v6052
        %v6242 = vunpack.c.l.b16 %v6053
        %v6243 = vunpack.c.h.b16 %v6053
        %v6244 = vunpack.c.l.b16 %v6054
        %v6245 = vunpack.c.h.b16 %v6054
        %v6246 = vunpack.c.l.b16 %v6055
        %v6247 = vunpack.c.h.b16 %v6055
        %v6248 = vunpack.c.l.b16 %v6056
        %v6249 = vunpack.c.h.b16 %v6056
        %v6250 = vunpack.c.l.b16 %v6057
        %v6251 = vunpack.c.h.b16 %v6057
        %v6252 = vunpack.c.l.b16 %v6058
        %v6253 = vunpack.c.h.b16 %v6058
        %v6254 = vunpack.c.l.b16 %v6059
        %v6255 = vunpack.c.h.b16 %v6059
        %v6256 = vunpack.c.l.b16 %v6060
        %v6257 = vunpack.c.h.b16 %v6060
        %v6258 = vunpack.c.l.b16 %v6061
        %v6259 = vunpack.c.h.b16 %v6061
        %v6260 = vunpack.c.l.b16 %v6062
        %v6261 = vunpack.c.h.b16 %v6062
        %v6262 = vunpack.c.l.b16 %v6063
        %v6263 = vunpack.c.h.b16 %v6063
        %v6264 = vunpack.c.l.b16 %v6064
        %v6265 = vunpack.c.h.b16 %v6064
        %v6266 = vunpack.c.l.b16 %v6065
        %v6267 = vunpack.c.h.b16 %v6065
        %v6268 = vunpack.c.l.b16 %v6066
        %v6269 = vunpack.c.h.b16 %v6066
        %v6270 = vunpack.c.l.b16 %v6067
        %v6271 = vunpack.c.h.b16 %v6067
        %v6272 = vunpack.c.l.b16 %v6068
        %v6273 = vunpack.c.h.b16 %v6068
        %v6274 = vunpack.c.l.b16 %v6069
        %v6275 = vunpack.c.h.b16 %v6069
        %v6276 = vunpack.c.l.b16 %v6070
        %v6277 = vunpack.c.h.b16 %v6070
        %v6278 = vunpack.c.l.b16 %v6071
        %v6279 = vunpack.c.h.b16 %v6071
        %v6280 = vunpack.c.l.b16 %v6072
        %v6281 = vunpack.c.h.b16 %v6072
        %v6282 = vunpack.c.l.b16 %v6073
        %v6283 = vunpack.c.h.b16 %v6073
        %v6284 = vunpack.c.l.b16 %v6074
        %v6285 = vunpack.c.h.b16 %v6074
        %v6286 = vunpack.c.l.b16 %v6075
        %v6287 = vunpack.c.h.b16 %v6075
        %v6288 = vunpack.c.l.b16 %v6076
        %v6289 = vunpack.c.h.b16 %v6076
        %v6290 = vunpack.c.l.b16 %v6077
        %v6291 = vunpack.c.h.b16 %v6077
        %v6292 = vpack.c.b16 %v6168, %v6164
        %v6293 = vpack.c.b16 %v6169, %v6165
        %v6294 = vpack.c.b16 %v6170, %v6166
        %v6295 = vpack.c.b16 %v6171, %v6167
        %v6296 = vpack.c.b16 %v6176, %v6172
        %v6297 = vpack.c.b16 %v6177, %v6173
        %v6298 = vpack.c.b16 %v6178, %v6174
        %v6299 = vpack.c.b16 %v6179, %v6175
        %v6300 = vpack.c.b16 %v6184, %v6180
        %v6301 = vpack.c.b16 %v6185, %v6181
        %v6302 = vpack.c.b16 %v6186, %v6182
        %v6303 = vpack.c.b16 %v6187, %v6183
        %v6304 = vpack.c.b16 %v6192, %v6188
        %v6305 = vpack.c.b16 %v6193, %v6189
        %v6306 = vpack.c.b16 %v6194, %v6190
        %v6307 = vpack.c.b16 %v6195, %v6191
        %v6308 = vpack.c.b16 %v6200, %v6196
        %v6309 = vpack.c.b16 %v6201, %v6197
        %v6310 = vpack.c.b16 %v6202, %v6198
        %v6311 = vpack.c.b16 %v6203, %v6199
        %v6312 = vpack.c.b16 %v6208, %v6204
        %v6313 = vpack.c.b16 %v6209, %v6205
        %v6314 = vpack.c.b16 %v6210, %v6206
        %v6315 = vpack.c.b16 %v6211, %v6207
        %v6316 = vpack.c.b16 %v6216, %v6212
        %v6317 = vpack.c.b16 %v6217, %v6213
        %v6318 = vpack.c.b16 %v6218, %v6214
        %v6319 = vpack.c.b16 %v6219, %v6215
        %v6320 = vpack.c.b16 %v6224, %v6220
        %v6321 = vpack.c.b16 %v6225, %v6221
        %v6322 = vpack.c.b16 %v6226, %v6222
        %v6323 = vpack.c.b16 %v6227, %v6223
        %v6324 = vpack.c.b16 %v6232, %v6228
        %v6325 = vpack.c.b16 %v6233, %v6229
        %v6326 = vpack.c.b16 %v6234, %v6230
        %v6327 = vpack.c.b16 %v6235, %v6231
        %v6328 = vpack.c.b16 %v6240, %v6236
        %v6329 = vpack.c.b16 %v6241, %v6237
        %v6330 = vpack.c.b16 %v6242, %v6238
        %v6331 = vpack.c.b16 %v6243, %v6239
        %v6332 = vpack.c.b16 %v6248, %v6244
        %v6333 = vpack.c.b16 %v6249, %v6245
        %v6334 = vpack.c.b16 %v6250, %v6246
        %v6335 = vpack.c.b16 %v6251, %v6247
        %v6336 = vpack.c.b16 %v6256, %v6252
        %v6337 = vpack.c.b16 %v6257, %v6253
        %v6338 = vpack.c.b16 %v6258, %v6254
        %v6339 = vpack.c.b16 %v6259, %v6255
        %v6340 = vpack.c.b16 %v6264, %v6260
        %v6341 = vpack.c.b16 %v6265, %v6261
        %v6342 = vpack.c.b16 %v6266, %v6262
        %v6343 = vpack.c.b16 %v6267, %v6263
        %v6344 = vpack.c.b16 %v6272, %v6268
        %v6345 = vpack.c.b16 %v6273, %v6269
        %v6346 = vpack.c.b16 %v6274, %v6270
        %v6347 = vpack.c.b16 %v6275, %v6271
        %v6348 = vpack.c.b16 %v6280, %v6276
        %v6349 = vpack.c.b16 %v6281, %v6277
        %v6350 = vpack.c.b16 %v6282, %v6278
        %v6351 = vpack.c.b16 %v6283, %v6279
        %v6352 = vpack.c.b16 %v6288, %v6284
        %v6353 = vpack.c.b16 %v6289, %v6285
        %v6354 = vpack.c.b16 %v6290, %v6286
        %v6355 = vpack.c.b16 %v6291, %v6287
        %6420 = vmatprep.subr.bf16.mxu0 %v6321
        %6421 = vmatpush1.bf16.msra.mxu0 %v6320
        %6422 = vmatprep.subr.bf16.mxu0 %v6317
        %6423 = vmatpush1.bf16.msra.mxu0 %v6316
        %6424 = vmatprep.subr.bf16.mxu0 %v6313
        %6425 = vmatpush1.bf16.msra.mxu0 %v6312
        %6426 = vmatprep.subr.bf16.mxu0 %v6309
        %6427 = vmatpush1.bf16.msra.mxu0 %v6308
        %6428 = vmatprep.subr.bf16.mxu0 %v6305
        %6429 = vmatpush1.bf16.msra.mxu0 %v6304
        %6430 = vmatprep.subr.bf16.mxu0 %v6301
        %6431 = vmatpush1.bf16.msra.mxu0 %v6300
        %6432 = vmatprep.subr.bf16.mxu0 %v6297
        %6433 = vmatpush1.bf16.msra.mxu0 %v6296
        %6434 = vmatprep.subr.bf16.mxu0 %v6293
        %6435 = vmatpush1.bf16.msra.mxu0 %v6292
        %6436 = vmatprep.subr.bf16.mxu0 %v6353
        %6437 = vmatpush2.bf16.msra.mxu0 %v6352
        %6438 = vmatprep.subr.bf16.mxu0 %v6349
        %6439 = vmatpush2.bf16.msra.mxu0 %v6348
        %6440 = vmatprep.subr.bf16.mxu0 %v6345
        %6441 = vmatpush2.bf16.msra.mxu0 %v6344
        %6442 = vmatprep.subr.bf16.mxu0 %v6341
        %6443 = vmatpush2.bf16.msra.mxu0 %v6340
        %6444 = vmatprep.subr.bf16.mxu0 %v6337
        %6445 = vmatpush2.bf16.msra.mxu0 %v6336
        %6446 = vmatprep.subr.bf16.mxu0 %v6333
        %6447 = vmatpush2.bf16.msra.mxu0 %v6332
        %6448 = vmatprep.subr.bf16.mxu0 %v6329
        %6449 = vmatpush2.bf16.msra.mxu0 %v6328
        %6450 = vmatprep.subr.bf16.mxu0 %v6325
        %6451 = vmatpush2.bf16.msra.mxu0 %v6324
        %6452 = vmatprep.mubr.bf16.mxu0 %v6013
        %6453 = vmatmul.mubr.bf16.gmra.mxu0 %v6012
        %v6454 = vpop.f32.mrf.mxu0
        %v6455 = vadd.f32 %v6083, %v6454
        %v6456 = vpop.f32.mrf.mxu0
        %v6457 = vadd.f32 %v6087, %v6456
        %v6458 = vpop.f32.mrf.mxu0
        %v6459 = vpop.f32.mrf.mxu0
        %6460 = vdwg.mxu0
        %6461 = vmatprep.subr.bf16.mxu0 %v6323
        %6462 = vmatpush1.bf16.msra.mxu0 %v6322
        %6463 = vmatprep.subr.bf16.mxu0 %v6319
        %6464 = vmatpush1.bf16.msra.mxu0 %v6318
        %6465 = vmatprep.subr.bf16.mxu0 %v6315
        %6466 = vmatpush1.bf16.msra.mxu0 %v6314
        %6467 = vmatprep.subr.bf16.mxu0 %v6311
        %6468 = vmatpush1.bf16.msra.mxu0 %v6310
        %6469 = vmatprep.subr.bf16.mxu0 %v6307
        %6470 = vmatpush1.bf16.msra.mxu0 %v6306
        %6471 = vmatprep.subr.bf16.mxu0 %v6303
        %6472 = vmatpush1.bf16.msra.mxu0 %v6302
        %6473 = vmatprep.subr.bf16.mxu0 %v6299
        %6474 = vmatpush1.bf16.msra.mxu0 %v6298
        %6475 = vmatprep.subr.bf16.mxu0 %v6295
        %6476 = vmatpush1.bf16.msra.mxu0 %v6294
        %6477 = vmatprep.subr.bf16.mxu0 %v6355
        %6478 = vmatpush2.bf16.msra.mxu0 %v6354
        %6479 = vmatprep.subr.bf16.mxu0 %v6351
        %6480 = vmatpush2.bf16.msra.mxu0 %v6350
        %6481 = vmatprep.subr.bf16.mxu0 %v6347
        %6482 = vmatpush2.bf16.msra.mxu0 %v6346
        %6483 = vmatprep.subr.bf16.mxu0 %v6343
        %6484 = vmatpush2.bf16.msra.mxu0 %v6342
        %6485 = vmatprep.subr.bf16.mxu0 %v6339
        %6486 = vmatpush2.bf16.msra.mxu0 %v6338
        %6487 = vmatprep.subr.bf16.mxu0 %v6335
        %6488 = vmatpush2.bf16.msra.mxu0 %v6334
        %6489 = vmatprep.subr.bf16.mxu0 %v6331
        %6490 = vmatpush2.bf16.msra.mxu0 %v6330
        %6491 = vmatprep.subr.bf16.mxu0 %v6327
        %6492 = vmatpush2.bf16.msra.mxu0 %v6326
        %6493 = vmatprep.mubr.bf16.mxu0 %v6013
        %6494 = vmatmul.mubr.bf16.gmra.mxu0 %v6012
        %v6495 = vpop.f32.mrf.mxu0
        %v6496 = vadd.f32 %v6091, %v6495
        %v6497 = vpop.f32.mrf.mxu0
        %v6498 = vadd.f32 %v6095, %v6497
        %v6499 = vpop.f32.mrf.mxu0
        %v6500 = vpop.f32.mrf.mxu0
        %6501 = vdwg.mxu0
        %v6502 = vmul.f32 %v6455, 0.5
        %v6503 = vmul.f32 %v6457, 0.5
        %v6504 = vmul.f32 %v6496, 0.5
        %v6505 = vmul.f32 %v6498, 0.5
        %v6506 = vmul.f32 %v6455, 0.70710677
        %v6507 = vmul.f32 %v6457, 0.70710677
        %v6508 = vmul.f32 %v6496, 0.70710677
        %v6509 = vmul.f32 %v6498, 0.70710677
        %v6510 = verf.f32.pop %v6506
        %v6511 = verf.f32.pop %v6507
        %v6512 = verf.f32.pop %v6508
        %v6513 = verf.f32.pop %v6509
        %v6514 = vadd.f32 %v6510, 1.0
        %v6515 = vadd.f32 %v6511, 1.0
        %v6516 = vadd.f32 %v6512, 1.0
        %v6517 = vadd.f32 %v6513, 1.0
        %v6518 = vmul.f32 %v6502, %v6514
        %v6519 = vmul.f32 %v6503, %v6515
        %v6520 = vmul.f32 %v6504, %v6516
        %v6521 = vmul.f32 %v6505, %v6517
        %6522 = vst [vmem:[%s728] sm:$0xff] %v6518
        %6523 = vst [vmem:[%s728 + $0x8] sm:$0xff] %v6519
        %6524 = vst [vmem:[%s728 + $0x10] sm:$0xff] %v6520
        %6525 = vst [vmem:[%s728 + $0x18] sm:$0xff] %v6521
        %s6526 = sand.u32 %s410, 1
        %s6527 = scalar_lea.sflag [#allocation4], %s6526
        %s6528 = sand.u32 %s410, 1
        %s6529 = smul.addr %s6528, 32
        %s6530 = scalar_lea.vmem [#allocation23], %s6529
        // Predicated region
        $region141: #{self_attn_forward.1} parent=87 // pred_check
          %p6531 = pneg %p420
        $region142: #{self_attn_forward.1} parent=87 // pred_check_branch
          %6533 = sbr.rel (%p6531) target = $region144
        $region143: #{self_attn_forward.1} parent=87 // pred_region
          %s6535 = ssub.s32 512, 512
          %6536 = vsyncadd %s6527, %s6535
          %s6537 = smul.addr %s40, 4
          %s6538 = smul.addr %s6537, 128
          %s6539 = scalar_lea.hbm %s17, %s6538
          %s6541 = sshll.u32 %s6530, 4
          %s6542 = int_to_ptr.vmem [resolvable:$true] %s6541
          %6544 = dma.vmem_to_hbm [thread:$0]  %s6542, 512, %s6539, %s6527
        $region144: #{self_attn_forward.1} parent=87 // pred_fallthru
          _
      $region88: #{self_attn_forward.1} parent=5 // pred_fallthru
        _
      %p6545 = scmp.le.s32.totalorder 2, %s35
      // Predicated region
      $region145: #{self_attn_forward.1} parent=5 // pred_check
        %p6546 = pneg %p6545
      $region146: #{self_attn_forward.1} parent=5 // pred_check_branch
        %6548 = sbr.rel (%p6546) target = $region148
      $region147: #{self_attn_forward.1} parent=5 // pred_region
        %s6549 = ssub.s32 %s35, 2
        // Predicated region
        $region149: #{self_attn_forward.1} parent=147 // pred_check
          %p6550 = pneg %p426
        $region150: #{self_attn_forward.1} parent=147 // pred_check_branch
          %6552 = sbr.rel (%p6550) target = $region152
        $region151: #{self_attn_forward.1} parent=147 // pred_region
          %s6553 = sand.u32 %s411, 1
          %s6554 = scalar_lea.sflag [#allocation4], %s6553
          %s6555 = sand.u32 %s411, 1
          %s6556 = smul.addr %s6555, 32
          %s6557 = scalar_lea.vmem [#allocation23], %s6556
          %6558 = dma.done %s6554, 512
        $region152: #{self_attn_forward.1} parent=147 // pred_fallthru
          _
      $region148: #{self_attn_forward.1} parent=5 // pred_fallthru
        _
    $region6: #{self_attn_forward.1} parent=1 // loop_footer
      %s39 = sadd.s32 1, %s35
    $region7: #{self_attn_forward.1} parent=1 // loop_footer_branch
      %34 = sbr.rel target = $region3
    $region8: #{self_attn_forward.1} parent=1 // loop_exit
      _
    %6559 = vsyncpa [#allocation3], 1
    %s6560 = scalar_lea.sflag [#allocation3], 1
    %6561 = vsyncpa %s6560, 1
    %6562 = vsyncpa [#allocation6], 1
    %6563 = vsyncpa [#allocation9], 1
    %6564 = vsyncpa [#allocation12], 1
    %6565 = vsyncpa [#allocation15], 1
    %6566 = vsyncpa [#allocation18], 1
    %6567 = vsyncpa [#allocation21], 1
    %6568 = vsyncpa [#allocation4], 1
    %s6569 = scalar_lea.sflag [#allocation4], 1
    %6570 = vsyncpa %s6569, 1

</llo_original>
